<compile_context>
chip_gen: v5e
topology: v5e:2x2
jax: 0.10.0
libtpu: 0.0.40
codegen_flags: <defaults>
</compile_context>

<pallas_src>
import numpy as np
import jax
import jax.numpy as jnp
from jax.experimental import pallas as pl
from jax.experimental.pallas import tpu as pltpu

# ------------------------- problem configuration -------------------------
N, C1, H, W = 2, 8, 16, 16               # batch, in-channels, spatial
C2 = 16                                  # out-channels
CM = int(1.5 * (C2 - C1))                # intermediate channels = 12
CH = C1 // 2                             # SE bottleneck = 4
BN_EPS = 1e-5
OH = (H + 3) // 2 + 1                    # conv3 output spatial = 10
OW = (W + 3) // 2 + 1

PAD = 3                                  # master-grid halo (conv1/ch2 +1, conv2 +1, conv3 +1)
HG, WG = H + 2 * PAD, W + 2 * PAD        # 22 x 22
SG = HG * WG                             # positions per batch on the master grid = 484
RG = N * SG                              # total positions = 968
RP = ((RG + 127) // 128) * 128           # lane-dense width = 1024

_SQRT1_2 = 0.7071067811865476
_TAP_OFF = tuple((k // 3 - 1) * WG + (k % 3 - 1) for k in range(9))   # 3x3 tap offsets


# ----------------- Pallas-safe elementwise helpers -----------------
def _erf(x):
    # Abramowitz & Stegun 7.1.26, |abs err| <= 1.5e-7 -> fp32-accurate erf for GELU
    p = 0.3275911
    a1, a2, a3, a4, a5 = 0.254829592, -0.284496736, 1.421413741, -1.453152027, 1.061405429
    s = jnp.where(x >= 0.0, 1.0, -1.0)
    z = jnp.abs(x)
    t = 1.0 / (1.0 + p * z)
    poly = ((((a5 * t + a4) * t + a3) * t + a2) * t + a1) * t
    return s * (1.0 - poly * jnp.exp(-z * z))


def _gelu_bn(z, half_s, c):
    # s * gelu(z) + c  ==  (0.5*s) * z * (1 + erf(z/sqrt2)) + c   (BN multiply folded away)
    return half_s * z * (1.0 + _erf(z * _SQRT1_2)) + c


def _sigmoid(x):
    x = jnp.clip(x, -30.0, 30.0)          # stable: no inf intermediates for large |x|
    return 1.0 / (1.0 + jnp.exp(-x))


def _shift(v, off):
    # shifted[:, p] = v[:, p + off]; lane-axis roll on the XLU.  Wrap-around only
    # affects positions whose results are masked or never gathered.
    if off == 0:
        return v
    return pltpu.roll(v, (-off) % RP, 1)


def _full_spec(shape):
    nd = len(shape)
    return pl.BlockSpec(tuple(shape), lambda i, _nd=nd: (0,) * _nd)


# --------------------------------- fused forward kernel ---------------------------------
def _fused_kernel(xg_ref, bmask_ref, mt_ref, m2_ref, m3_ref,
                  w1_ref, b1_ref, w2_ref, b2_ref,              # SE (ch1)
                  wdw_ref, bdw_ref, hsdw_ref, cdw_ref,         # depthwise 3x3 + BN
                  wa_ref, ba_ref,                              # conv1 (BN folded into W,b)
                  wt_ref, bt_ref, hst_ref, ct_ref,             # ch2 tail: 1x1 + GELU + BN
                  w2c_ref, b2c_ref, hs2c_ref, c2c_ref,         # conv2: 1x1 + GELU + BN
                  w3_ref, b3_ref, hs3_ref, c3_ref,             # conv3: 3x3 s2 + GELU + BN
                  out_ref):
    x = xg_ref[...]                                            # (C1, RP) channels-first grid

    # ---- ch1 (SE): per-batch masked mean -> FC -> ReLU -> FC -> sigmoid ----
    gate_row = jnp.zeros((C1, RP), jnp.float32)
    for n in range(N):
        bm = bmask_ref[n]                                      # (1, RP) batch-n interior mask
        pooled = jnp.sum(x * bm, axis=1, keepdims=True) * (1.0 / (H * W))      # (C1, 1)
        h = jnp.maximum(jnp.dot(w1_ref[...], pooled,
                                preferred_element_type=jnp.float32) + b1_ref[...], 0.0)
        g = _sigmoid(jnp.dot(w2_ref[...], h,
                             preferred_element_type=jnp.float32) + b2_ref[...])  # (C1, 1)
        gate_row = gate_row + bm * g
    u = x * (1.0 + gate_row)                                   # x*a + x (zero halo stays 0)

    # ---- ch2 head: depthwise 3x3 (stride 1, pad 1) -> GELU -> BN ----
    acc = jnp.zeros((C1, RP), jnp.float32)
    for k, off in enumerate(_TAP_OFF):
        acc = acc + _shift(x, off) * wdw_ref[k]                # (C1,RP) * (C1,1)
    t = mt_ref[...] * _gelu_bn(acc + bdw_ref[...], hsdw_ref[...], cdw_ref[...])

    # ---- conv1 (BN pre-folded) on u, plus ch2 tail 1x1 -> GELU -> BN; both pad 1 ----
    x1 = jnp.dot(wa_ref[...], u, preferred_element_type=jnp.float32) + ba_ref[...]
    vt = _gelu_bn(jnp.dot(wt_ref[...], t, preferred_element_type=jnp.float32) + bt_ref[...],
                  hst_ref[...], ct_ref[...])
    x2 = m2_ref[...] * (x1 + vt)                               # (CM, RP), valid on 18x18 box

    # ---- conv2: 1x1 (pad 1) -> GELU -> BN ----
    x3 = m3_ref[...] * _gelu_bn(
        jnp.dot(w2c_ref[...], x2, preferred_element_type=jnp.float32) + b2c_ref[...],
        hs2c_ref[...], c2c_ref[...])                           # (C2, RP), valid on 20x20 box

    # ---- conv3: 3x3 stride 2 (pad 1) -> GELU -> BN, one im2col matmul (K = 9*C2) ----
    xcat = jnp.concatenate([_shift(x3, off) for off in _TAP_OFF], axis=0)    # (9*C2, RP)
    y = jnp.dot(w3_ref[...], xcat, preferred_element_type=jnp.float32) + b3_ref[...]
    out_ref[...] = _gelu_bn(y, hs3_ref[...], c3_ref[...])      # lane-dense (C2, RP) store


# ----------------------------- host-side static masks -----------------------------
def _build_masks():
    ph = np.arange(HG)[:, None]
    pw = np.arange(WG)[None, :]

    def box(lo, hi):
        return ((ph >= lo) & (ph <= hi) & (pw >= lo) & (pw <= hi)).astype(np.float32)

    def grid_mask(lo, hi):
        m = np.tile(box(lo, hi)[None], (N, 1, 1)).reshape(RG)
        return np.pad(m, (0, RP - RG)).reshape(1, RP)

    mt = grid_mask(PAD, PAD + H - 1)            # DW output box       (16x16)
    m2 = grid_mask(PAD - 1, PAD + H)            # conv1/ch2 output box (18x18)
    m3 = grid_mask(PAD - 2, PAD + H + 1)        # conv2 output box     (20x20)

    interior = box(PAD, PAD + H - 1).reshape(-1)
    bm = np.zeros((N, RP), np.float32)
    for n in range(N):
        bm[n, n * SG:(n + 1) * SG] = interior   # batch-n interior positions (for SE pool/scale)
    return (jnp.asarray(mt), jnp.asarray(m2), jnp.asarray(m3),
            jnp.asarray(bm.reshape(N, 1, RP)))


_MT, _M2, _M3, _BMASK = _build_masks()


# ----------------------------------- forward (thin wrapper) -----------------------------------
def downsample_layers_forward(x_nchw, p):
    # input prep: NCHW is already channels-first; halo pad + flatten + lane pad
    x = jnp.transpose(x_nchw.astype(jnp.float32), (1, 0, 2, 3))          # (C1, N, H, W)
    x = jnp.pad(x, ((0, 0), (0, 0), (PAD, PAD), (PAD, PAD)))             # (C1, N, 22, 22)
    xg = jnp.pad(x.reshape(C1, RG), ((0, 0), (0, RP - RG)))              # (C1, RP)

    args = (xg, _BMASK, _MT, _M2, _M3,
            p['se_w1'], p['se_b1'], p['se_w2'], p['se_b2'],
            p['dw_w'], p['dw_b'], p['dw_hs'], p['dw_c'],
            p['c1_w'], p['c1_b'],
            p['t_w'], p['t_b'], p['t_hs'], p['t_c'],
            p['c2_w'], p['c2_b'], p['c2_hs'], p['c2_c'],
            p['c3_w'], p['c3_b'], p['c3_hs'], p['c3_c'])

    yf = pl.pallas_call(
        _fused_kernel,
        out_shape=jax.ShapeDtypeStruct((C2, RP), jnp.float32),
        grid=(1,),
        in_specs=[_full_spec(a.shape) for a in args],
        out_specs=_full_spec((C2, RP)),
        compiler_params=pltpu.CompilerParams(
            dimension_semantics=("arbitrary",),        # single TC; tiny problem, no tiling
            vmem_limit_bytes=32 * 1024 * 1024),
    )(*args)

    # output glue: one fused XLA gather (stride-2 phase pick + NCHW transpose)
    y = yf[:, :RG].reshape(C2, N, HG, WG)
    y = y[:, :, 1:2 * OH:2, 1:2 * OW:2]                                  # (C2, N, OH, OW)
    return jnp.transpose(y, (1, 0, 2, 3))                                # (N, C2, OH, OW)


# ----------------------------------- deterministic parameter init -----------------------------------
def _bn_stats(key, c):
    k1, k2, k3, k4 = jax.random.split(key, 4)
    gamma = 0.5 + jax.random.uniform(k1, (c,), jnp.float32)
    beta = 0.1 * jax.random.normal(k2, (c,), jnp.float32)
    mean = 0.1 * jax.random.normal(k3, (c,), jnp.float32)
    var = 0.5 + jax.random.uniform(k4, (c,), jnp.float32)
    s = gamma / jnp.sqrt(var + BN_EPS)
    return s, beta - mean * s


def init_params(key):
    ks = jax.random.split(key, 24)

    def nrm(k, shape, scale=0.2):
        return scale * jax.random.normal(k, shape, jnp.float32)

    p = {}
    # ch1 (SE): Conv2d(C1, C1//2, 1) / Conv2d(C1//2, C1, 1)   [PyTorch (out, in, 1, 1)]
    p['se_w1'] = nrm(ks[0], (CH, C1, 1, 1))[:, :, 0, 0]                  # (CH, C1)
    p['se_b1'] = nrm(ks[1], (CH, 1))
    p['se_w2'] = nrm(ks[2], (C1, CH, 1, 1))[:, :, 0, 0]                  # (C1, CH)
    p['se_b2'] = nrm(ks[3], (C1, 1))
    # DWConv: Conv2d(C1, C1, 3, 1, 1, groups=C1)  weight (C1, 1, 3, 3) ; GELU ; BN(C1)
    w = nrm(ks[4], (C1, 1, 3, 3))
    p['dw_w'] = jnp.transpose(w[:, 0].reshape(C1, 9), (1, 0)).reshape(9, C1, 1)  # (tap, ch, 1)
    p['dw_b'] = nrm(ks[5], (C1, 1))
    s, c = _bn_stats(ks[6], C1)
    p['dw_hs'], p['dw_c'] = (0.5 * s).reshape(C1, 1), c.reshape(C1, 1)
    # ch2 tail: Conv2d(C1, CM, 1, 1, 1) -> GELU -> BN(CM)
    p['t_w'] = nrm(ks[7], (CM, C1, 1, 1))[:, :, 0, 0]
    p['t_b'] = nrm(ks[8], (CM, 1))
    s, c = _bn_stats(ks[9], CM)
    p['t_hs'], p['t_c'] = (0.5 * s).reshape(CM, 1), c.reshape(CM, 1)
    # conv1: Conv2d(C1, CM, 1, 1, 1) -> BN(CM)   (no activation: fold BN into W, b)
    w = nrm(ks[10], (CM, C1, 1, 1))[:, :, 0, 0]
    b = nrm(ks[11], (CM,))
    s, c = _bn_stats(ks[12], CM)
    p['c1_w'] = w * s[:, None]
    p['c1_b'] = (s * b + c).reshape(CM, 1)
    # conv2: Conv2d(CM, C2, 1, 1, 1) -> GELU -> BN(C2)
    p['c2_w'] = nrm(ks[13], (C2, CM, 1, 1))[:, :, 0, 0]
    p['c2_b'] = nrm(ks[14], (C2, 1))
    s, c = _bn_stats(ks[15], C2)
    p['c2_hs'], p['c2_c'] = (0.5 * s).reshape(C2, 1), c.reshape(C2, 1)
    # conv3: Conv2d(C2, C2, 3, 2, 1) -> GELU -> BN(C2);  im2col weight (C2, 9*C2)
    w = nrm(ks[16], (C2, C2, 3, 3))
    p['c3_w'] = jnp.transpose(w, (0, 2, 3, 1)).reshape(C2, 9 * C2)       # [cout, k*C2+cin]
    p['c3_b'] = nrm(ks[17], (C2, 1))
    s, c = _bn_stats(ks[18], C2)
    p['c3_hs'], p['c3_c'] = (0.5 * s).reshape(C2, 1), c.reshape(C2, 1)
    return p


if __name__ == "__main__":
    key = jax.random.PRNGKey(0)
    kx, kp = jax.random.split(key)
    x = jax.random.normal(kx, (N, C1, H, W), jnp.float32)     # NCHW, as the PyTorch module expects
    params = init_params(kp)

    out = jax.jit(downsample_layers_forward)(x, params)
    out = jax.block_until_ready(out)
    assert out.shape == (N, C2, OH, OW), out.shape
    assert bool(jnp.all(jnp.isfinite(out)))
    print("KERNEL_OK")
</pallas_src>

<mosaic_0001>
module attributes {stable_mosaic.version = 11 : i64} {
  func.func @_fused_kernel(%arg0: i32, %arg1: memref<8x1024xf32, #tpu.memory_space<vmem>>, %arg2: memref<2x1x1024xf32, #tpu.memory_space<vmem>>, %arg3: memref<1x1024xf32, #tpu.memory_space<vmem>>, %arg4: memref<1x1024xf32, #tpu.memory_space<vmem>>, %arg5: memref<1x1024xf32, #tpu.memory_space<vmem>>, %arg6: memref<4x8xf32, #tpu.memory_space<vmem>>, %arg7: memref<4x1xf32, #tpu.memory_space<vmem>>, %arg8: memref<8x4xf32, #tpu.memory_space<vmem>>, %arg9: memref<8x1xf32, #tpu.memory_space<vmem>>, %arg10: memref<9x8x1xf32, #tpu.memory_space<vmem>>, %arg11: memref<8x1xf32, #tpu.memory_space<vmem>>, %arg12: memref<8x1xf32, #tpu.memory_space<vmem>>, %arg13: memref<8x1xf32, #tpu.memory_space<vmem>>, %arg14: memref<12x8xf32, #tpu.memory_space<vmem>>, %arg15: memref<12x1xf32, #tpu.memory_space<vmem>>, %arg16: memref<12x8xf32, #tpu.memory_space<vmem>>, %arg17: memref<12x1xf32, #tpu.memory_space<vmem>>, %arg18: memref<12x1xf32, #tpu.memory_space<vmem>>, %arg19: memref<12x1xf32, #tpu.memory_space<vmem>>, %arg20: memref<16x12xf32, #tpu.memory_space<vmem>>, %arg21: memref<16x1xf32, #tpu.memory_space<vmem>>, %arg22: memref<16x1xf32, #tpu.memory_space<vmem>>, %arg23: memref<16x1xf32, #tpu.memory_space<vmem>>, %arg24: memref<16x144xf32, #tpu.memory_space<vmem>>, %arg25: memref<16x1xf32, #tpu.memory_space<vmem>>, %arg26: memref<16x1xf32, #tpu.memory_space<vmem>>, %arg27: memref<16x1xf32, #tpu.memory_space<vmem>>, %arg28: memref<16x1024xf32, #tpu.memory_space<vmem>>) attributes {dimension_semantics = [#tpu.dimension_semantics<arbitrary>], iteration_bounds = array<i64: 1>, scalar_prefetch = 0 : i64, scratch_operands = 0 : i64, tpu.core_type = #tpu.core_type<tc>, window_params = [{pipeline_mode = #tpu.pipeline_mode<synchronous>, transform_indices = @transform_0, window_bounds = array<i64: 8, 1024>}, {pipeline_mode = #tpu.pipeline_mode<synchronous>, transform_indices = @transform_1, window_bounds = array<i64: 2, 1, 1024>}, {pipeline_mode = #tpu.pipeline_mode<synchronous>, transform_indices = @transform_2, window_bounds = array<i64: 1, 1024>}, {pipeline_mode = #tpu.pipeline_mode<synchronous>, transform_indices = @transform_3, window_bounds = array<i64: 1, 1024>}, {pipeline_mode = #tpu.pipeline_mode<synchronous>, transform_indices = @transform_4, window_bounds = array<i64: 1, 1024>}, {pipeline_mode = #tpu.pipeline_mode<synchronous>, transform_indices = @transform_5, window_bounds = array<i64: 4, 8>}, {pipeline_mode = #tpu.pipeline_mode<synchronous>, transform_indices = @transform_6, window_bounds = array<i64: 4, 1>}, {pipeline_mode = #tpu.pipeline_mode<synchronous>, transform_indices = @transform_7, window_bounds = array<i64: 8, 4>}, {pipeline_mode = #tpu.pipeline_mode<synchronous>, transform_indices = @transform_8, window_bounds = array<i64: 8, 1>}, {pipeline_mode = #tpu.pipeline_mode<synchronous>, transform_indices = @transform_9, window_bounds = array<i64: 9, 8, 1>}, {pipeline_mode = #tpu.pipeline_mode<synchronous>, transform_indices = @transform_10, window_bounds = array<i64: 8, 1>}, {pipeline_mode = #tpu.pipeline_mode<synchronous>, transform_indices = @transform_11, window_bounds = array<i64: 8, 1>}, {pipeline_mode = #tpu.pipeline_mode<synchronous>, transform_indices = @transform_12, window_bounds = array<i64: 8, 1>}, {pipeline_mode = #tpu.pipeline_mode<synchronous>, transform_indices = @transform_13, window_bounds = array<i64: 12, 8>}, {pipeline_mode = #tpu.pipeline_mode<synchronous>, transform_indices = @transform_14, window_bounds = array<i64: 12, 1>}, {pipeline_mode = #tpu.pipeline_mode<synchronous>, transform_indices = @transform_15, window_bounds = array<i64: 12, 8>}, {pipeline_mode = #tpu.pipeline_mode<synchronous>, transform_indices = @transform_16, window_bounds = array<i64: 12, 1>}, {pipeline_mode = #tpu.pipeline_mode<synchronous>, transform_indices = @transform_17, window_bounds = array<i64: 12, 1>}, {pipeline_mode = #tpu.pipeline_mode<synchronous>, transform_indices = @transform_18, window_bounds = array<i64: 12, 1>}, {pipeline_mode = #tpu.pipeline_mode<synchronous>, transform_indices = @transform_19, window_bounds = array<i64: 16, 12>}, {pipeline_mode = #tpu.pipeline_mode<synchronous>, transform_indices = @transform_20, window_bounds = array<i64: 16, 1>}, {pipeline_mode = #tpu.pipeline_mode<synchronous>, transform_indices = @transform_21, window_bounds = array<i64: 16, 1>}, {pipeline_mode = #tpu.pipeline_mode<synchronous>, transform_indices = @transform_22, window_bounds = array<i64: 16, 1>}, {pipeline_mode = #tpu.pipeline_mode<synchronous>, transform_indices = @transform_23, window_bounds = array<i64: 16, 144>}, {pipeline_mode = #tpu.pipeline_mode<synchronous>, transform_indices = @transform_24, window_bounds = array<i64: 16, 1>}, {pipeline_mode = #tpu.pipeline_mode<synchronous>, transform_indices = @transform_25, window_bounds = array<i64: 16, 1>}, {pipeline_mode = #tpu.pipeline_mode<synchronous>, transform_indices = @transform_26, window_bounds = array<i64: 16, 1>}, {pipeline_mode = #tpu.pipeline_mode<synchronous>, transform_indices = @transform_27, window_bounds = array<i64: 16, 1024>}]} {
    %c0 = arith.constant 0 : index
    %c0_0 = arith.constant 0 : index
    %0 = vector.load %arg1[%c0, %c0_0] : memref<8x1024xf32, #tpu.memory_space<vmem>>, vector<8x1024xf32>
    %cst = arith.constant 0.000000e+00 : f32
    %1 = vector.broadcast %cst : f32 to vector<8x1024xf32>
    %c0_1 = arith.constant 0 : index
    %c0_2 = arith.constant 0 : index
    %c0_3 = arith.constant 0 : index
    %2 = vector.load %arg2[%c0_1, %c0_2, %c0_3] : memref<2x1x1024xf32, #tpu.memory_space<vmem>>, vector<1x1x1024xf32>
    %3 = vector.shape_cast %2 : vector<1x1x1024xf32> to vector<1x1024xf32>
    %4 = vector.broadcast %3 : vector<1x1024xf32> to vector<8x1024xf32>
    %5 = arith.mulf %0, %4 : vector<8x1024xf32>
    %cst_4 = arith.constant dense<0.000000e+00> : vector<8xf32>
    %6 = vector.multi_reduction <add>, %5, %cst_4 [1] : vector<8x1024xf32> to vector<8xf32>
    %7 = vector.shape_cast %6 : vector<8xf32> to vector<8x1xf32>
    %cst_5 = arith.constant 3.906250e-03 : f32
    %8 = vector.broadcast %cst_5 : f32 to vector<8x1xf32>
    %9 = arith.mulf %7, %8 : vector<8x1xf32>
    %c0_6 = arith.constant 0 : index
    %c0_7 = arith.constant 0 : index
    %10 = vector.load %arg6[%c0_6, %c0_7] : memref<4x8xf32, #tpu.memory_space<vmem>>, vector<4x8xf32>
    %cst_8 = arith.constant dense<0.000000e+00> : vector<4x1xf32>
    %11 = tpu.matmul %10, %9, %cst_8 {dimension_numbers = #tpu.dot_dimension_numbers<[1], [0], [0], [1], [0, 0, 1, 1], [], []>} : vector<4x8xf32>, vector<8x1xf32>, vector<4x1xf32> -> vector<4x1xf32>
    %c0_9 = arith.constant 0 : index
    %c0_10 = arith.constant 0 : index
    %12 = vector.load %arg7[%c0_9, %c0_10] : memref<4x1xf32, #tpu.memory_space<vmem>>, vector<4x1xf32>
    %13 = arith.addf %11, %12 : vector<4x1xf32>
    %cst_11 = arith.constant 0.000000e+00 : f32
    %14 = vector.broadcast %cst_11 : f32 to vector<4x1xf32>
    %15 = arith.maximumf %13, %14 : vector<4x1xf32>
    %c0_12 = arith.constant 0 : index
    %c0_13 = arith.constant 0 : index
    %16 = vector.load %arg8[%c0_12, %c0_13] : memref<8x4xf32, #tpu.memory_space<vmem>>, vector<8x4xf32>
    %cst_14 = arith.constant dense<0.000000e+00> : vector<8x1xf32>
    %17 = tpu.matmul %16, %15, %cst_14 {dimension_numbers = #tpu.dot_dimension_numbers<[1], [0], [0], [1], [0, 0, 1, 1], [], []>} : vector<8x4xf32>, vector<4x1xf32>, vector<8x1xf32> -> vector<8x1xf32>
    %c0_15 = arith.constant 0 : index
    %c0_16 = arith.constant 0 : index
    %18 = vector.load %arg9[%c0_15, %c0_16] : memref<8x1xf32, #tpu.memory_space<vmem>>, vector<8x1xf32>
    %19 = arith.addf %17, %18 : vector<8x1xf32>
    %cst_17 = arith.constant -3.000000e+01 : f32
    %cst_18 = arith.constant 3.000000e+01 : f32
    %20 = vector.broadcast %cst_17 : f32 to vector<8x1xf32>
    %21 = arith.maximumf %20, %19 : vector<8x1xf32>
    %22 = vector.broadcast %cst_18 : f32 to vector<8x1xf32>
    %23 = arith.minimumf %22, %21 : vector<8x1xf32>
    %cst_19 = arith.constant 0.000000e+00 : f32
    %24 = vector.broadcast %cst_19 : f32 to vector<8x1xf32>
    %25 = arith.subf %24, %23 : vector<8x1xf32>
    %26 = math.exp %25 : vector<8x1xf32>
    %cst_20 = arith.constant 1.000000e+00 : f32
    %27 = vector.broadcast %cst_20 : f32 to vector<8x1xf32>
    %28 = arith.addf %27, %26 : vector<8x1xf32>
    %cst_21 = arith.constant 1.000000e+00 : f32
    %29 = vector.broadcast %cst_21 : f32 to vector<8x1xf32>
    %30 = arith.divf %29, %28 : vector<8x1xf32>
    %31 = vector.broadcast %3 : vector<1x1024xf32> to vector<8x1024xf32>
    %32 = vector.broadcast %30 : vector<8x1xf32> to vector<8x1024xf32>
    %33 = arith.mulf %31, %32 : vector<8x1024xf32>
    %34 = arith.addf %1, %33 : vector<8x1024xf32>
    %c1 = arith.constant 1 : index
    %c0_22 = arith.constant 0 : index
    %c0_23 = arith.constant 0 : index
    %35 = vector.load %arg2[%c1, %c0_22, %c0_23] : memref<2x1x1024xf32, #tpu.memory_space<vmem>>, vector<1x1x1024xf32>
    %36 = vector.shape_cast %35 : vector<1x1x1024xf32> to vector<1x1024xf32>
    %37 = vector.broadcast %36 : vector<1x1024xf32> to vector<8x1024xf32>
    %38 = arith.mulf %0, %37 : vector<8x1024xf32>
    %cst_24 = arith.constant dense<0.000000e+00> : vector<8xf32>
    %39 = vector.multi_reduction <add>, %38, %cst_24 [1] : vector<8x1024xf32> to vector<8xf32>
    %40 = vector.shape_cast %39 : vector<8xf32> to vector<8x1xf32>
    %cst_25 = arith.constant 3.906250e-03 : f32
    %41 = vector.broadcast %cst_25 : f32 to vector<8x1xf32>
    %42 = arith.mulf %40, %41 : vector<8x1xf32>
    %c0_26 = arith.constant 0 : index
    %c0_27 = arith.constant 0 : index
    %43 = vector.load %arg6[%c0_26, %c0_27] : memref<4x8xf32, #tpu.memory_space<vmem>>, vector<4x8xf32>
    %cst_28 = arith.constant dense<0.000000e+00> : vector<4x1xf32>
    %44 = tpu.matmul %43, %42, %cst_28 {dimension_numbers = #tpu.dot_dimension_numbers<[1], [0], [0], [1], [0, 0, 1, 1], [], []>} : vector<4x8xf32>, vector<8x1xf32>, vector<4x1xf32> -> vector<4x1xf32>
    %c0_29 = arith.constant 0 : index
    %c0_30 = arith.constant 0 : index
    %45 = vector.load %arg7[%c0_29, %c0_30] : memref<4x1xf32, #tpu.memory_space<vmem>>, vector<4x1xf32>
    %46 = arith.addf %44, %45 : vector<4x1xf32>
    %cst_31 = arith.constant 0.000000e+00 : f32
    %47 = vector.broadcast %cst_31 : f32 to vector<4x1xf32>
    %48 = arith.maximumf %46, %47 : vector<4x1xf32>
    %c0_32 = arith.constant 0 : index
    %c0_33 = arith.constant 0 : index
    %49 = vector.load %arg8[%c0_32, %c0_33] : memref<8x4xf32, #tpu.memory_space<vmem>>, vector<8x4xf32>
    %cst_34 = arith.constant dense<0.000000e+00> : vector<8x1xf32>
    %50 = tpu.matmul %49, %48, %cst_34 {dimension_numbers = #tpu.dot_dimension_numbers<[1], [0], [0], [1], [0, 0, 1, 1], [], []>} : vector<8x4xf32>, vector<4x1xf32>, vector<8x1xf32> -> vector<8x1xf32>
    %c0_35 = arith.constant 0 : index
    %c0_36 = arith.constant 0 : index
    %51 = vector.load %arg9[%c0_35, %c0_36] : memref<8x1xf32, #tpu.memory_space<vmem>>, vector<8x1xf32>
    %52 = arith.addf %50, %51 : vector<8x1xf32>
    %cst_37 = arith.constant -3.000000e+01 : f32
    %cst_38 = arith.constant 3.000000e+01 : f32
    %53 = vector.broadcast %cst_37 : f32 to vector<8x1xf32>
    %54 = arith.maximumf %53, %52 : vector<8x1xf32>
    %55 = vector.broadcast %cst_38 : f32 to vector<8x1xf32>
    %56 = arith.minimumf %55, %54 : vector<8x1xf32>
    %cst_39 = arith.constant 0.000000e+00 : f32
    %57 = vector.broadcast %cst_39 : f32 to vector<8x1xf32>
    %58 = arith.subf %57, %56 : vector<8x1xf32>
    %59 = math.exp %58 : vector<8x1xf32>
    %cst_40 = arith.constant 1.000000e+00 : f32
    %60 = vector.broadcast %cst_40 : f32 to vector<8x1xf32>
    %61 = arith.addf %60, %59 : vector<8x1xf32>
    %cst_41 = arith.constant 1.000000e+00 : f32
    %62 = vector.broadcast %cst_41 : f32 to vector<8x1xf32>
    %63 = arith.divf %62, %61 : vector<8x1xf32>
    %64 = vector.broadcast %36 : vector<1x1024xf32> to vector<8x1024xf32>
    %65 = vector.broadcast %63 : vector<8x1xf32> to vector<8x1024xf32>
    %66 = arith.mulf %64, %65 : vector<8x1024xf32>
    %67 = arith.addf %34, %66 : vector<8x1024xf32>
    %cst_42 = arith.constant 1.000000e+00 : f32
    %68 = vector.broadcast %cst_42 : f32 to vector<8x1024xf32>
    %69 = arith.addf %68, %67 : vector<8x1024xf32>
    %70 = arith.mulf %0, %69 : vector<8x1024xf32>
    %cst_43 = arith.constant 0.000000e+00 : f32
    %71 = vector.broadcast %cst_43 : f32 to vector<8x1024xf32>
    %c23_i32 = arith.constant 23 : i32
    %72 = tpu.dynamic_rotate %0 by %c23_i32 dim 1 : vector<8x1024xf32>, i32 -> vector<8x1024xf32>
    %c0_44 = arith.constant 0 : index
    %c0_45 = arith.constant 0 : index
    %c0_46 = arith.constant 0 : index
    %73 = vector.load %arg10[%c0_44, %c0_45, %c0_46] : memref<9x8x1xf32, #tpu.memory_space<vmem>>, vector<1x8x1xf32>
    %74 = vector.shape_cast %73 : vector<1x8x1xf32> to vector<8x1xf32>
    %75 = vector.broadcast %74 : vector<8x1xf32> to vector<8x1024xf32>
    %76 = arith.mulf %72, %75 : vector<8x1024xf32>
    %77 = arith.addf %71, %76 : vector<8x1024xf32>
    %c22_i32 = arith.constant 22 : i32
    %78 = tpu.dynamic_rotate %0 by %c22_i32 dim 1 : vector<8x1024xf32>, i32 -> vector<8x1024xf32>
    %c1_47 = arith.constant 1 : index
    %c0_48 = arith.constant 0 : index
    %c0_49 = arith.constant 0 : index
    %79 = vector.load %arg10[%c1_47, %c0_48, %c0_49] : memref<9x8x1xf32, #tpu.memory_space<vmem>>, vector<1x8x1xf32>
    %80 = vector.shape_cast %79 : vector<1x8x1xf32> to vector<8x1xf32>
    %81 = vector.broadcast %80 : vector<8x1xf32> to vector<8x1024xf32>
    %82 = arith.mulf %78, %81 : vector<8x1024xf32>
    %83 = arith.addf %77, %82 : vector<8x1024xf32>
    %c21_i32 = arith.constant 21 : i32
    %84 = tpu.dynamic_rotate %0 by %c21_i32 dim 1 : vector<8x1024xf32>, i32 -> vector<8x1024xf32>
    %c2 = arith.constant 2 : index
    %c0_50 = arith.constant 0 : index
    %c0_51 = arith.constant 0 : index
    %85 = vector.load %arg10[%c2, %c0_50, %c0_51] : memref<9x8x1xf32, #tpu.memory_space<vmem>>, vector<1x8x1xf32>
    %86 = vector.shape_cast %85 : vector<1x8x1xf32> to vector<8x1xf32>
    %87 = vector.broadcast %86 : vector<8x1xf32> to vector<8x1024xf32>
    %88 = arith.mulf %84, %87 : vector<8x1024xf32>
    %89 = arith.addf %83, %88 : vector<8x1024xf32>
    %c1_i32 = arith.constant 1 : i32
    %90 = tpu.dynamic_rotate %0 by %c1_i32 dim 1 : vector<8x1024xf32>, i32 -> vector<8x1024xf32>
    %c3 = arith.constant 3 : index
    %c0_52 = arith.constant 0 : index
    %c0_53 = arith.constant 0 : index
    %91 = vector.load %arg10[%c3, %c0_52, %c0_53] : memref<9x8x1xf32, #tpu.memory_space<vmem>>, vector<1x8x1xf32>
    %92 = vector.shape_cast %91 : vector<1x8x1xf32> to vector<8x1xf32>
    %93 = vector.broadcast %92 : vector<8x1xf32> to vector<8x1024xf32>
    %94 = arith.mulf %90, %93 : vector<8x1024xf32>
    %95 = arith.addf %89, %94 : vector<8x1024xf32>
    %c4 = arith.constant 4 : index
    %c0_54 = arith.constant 0 : index
    %c0_55 = arith.constant 0 : index
    %96 = vector.load %arg10[%c4, %c0_54, %c0_55] : memref<9x8x1xf32, #tpu.memory_space<vmem>>, vector<1x8x1xf32>
    %97 = vector.shape_cast %96 : vector<1x8x1xf32> to vector<8x1xf32>
    %98 = vector.broadcast %97 : vector<8x1xf32> to vector<8x1024xf32>
    %99 = arith.mulf %0, %98 : vector<8x1024xf32>
    %100 = arith.addf %95, %99 : vector<8x1024xf32>
    %c1023_i32 = arith.constant 1023 : i32
    %101 = tpu.dynamic_rotate %0 by %c1023_i32 dim 1 : vector<8x1024xf32>, i32 -> vector<8x1024xf32>
    %c5 = arith.constant 5 : index
    %c0_56 = arith.constant 0 : index
    %c0_57 = arith.constant 0 : index
    %102 = vector.load %arg10[%c5, %c0_56, %c0_57] : memref<9x8x1xf32, #tpu.memory_space<vmem>>, vector<1x8x1xf32>
    %103 = vector.shape_cast %102 : vector<1x8x1xf32> to vector<8x1xf32>
    %104 = vector.broadcast %103 : vector<8x1xf32> to vector<8x1024xf32>
    %105 = arith.mulf %101, %104 : vector<8x1024xf32>
    %106 = arith.addf %100, %105 : vector<8x1024xf32>
    %c1003_i32 = arith.constant 1003 : i32
    %107 = tpu.dynamic_rotate %0 by %c1003_i32 dim 1 : vector<8x1024xf32>, i32 -> vector<8x1024xf32>
    %c6 = arith.constant 6 : index
    %c0_58 = arith.constant 0 : index
    %c0_59 = arith.constant 0 : index
    %108 = vector.load %arg10[%c6, %c0_58, %c0_59] : memref<9x8x1xf32, #tpu.memory_space<vmem>>, vector<1x8x1xf32>
    %109 = vector.shape_cast %108 : vector<1x8x1xf32> to vector<8x1xf32>
    %110 = vector.broadcast %109 : vector<8x1xf32> to vector<8x1024xf32>
    %111 = arith.mulf %107, %110 : vector<8x1024xf32>
    %112 = arith.addf %106, %111 : vector<8x1024xf32>
    %c1002_i32 = arith.constant 1002 : i32
    %113 = tpu.dynamic_rotate %0 by %c1002_i32 dim 1 : vector<8x1024xf32>, i32 -> vector<8x1024xf32>
    %c7 = arith.constant 7 : index
    %c0_60 = arith.constant 0 : index
    %c0_61 = arith.constant 0 : index
    %114 = vector.load %arg10[%c7, %c0_60, %c0_61] : memref<9x8x1xf32, #tpu.memory_space<vmem>>, vector<1x8x1xf32>
    %115 = vector.shape_cast %114 : vector<1x8x1xf32> to vector<8x1xf32>
    %116 = vector.broadcast %115 : vector<8x1xf32> to vector<8x1024xf32>
    %117 = arith.mulf %113, %116 : vector<8x1024xf32>
    %118 = arith.addf %112, %117 : vector<8x1024xf32>
    %c1001_i32 = arith.constant 1001 : i32
    %119 = tpu.dynamic_rotate %0 by %c1001_i32 dim 1 : vector<8x1024xf32>, i32 -> vector<8x1024xf32>
    %c8 = arith.constant 8 : index
    %c0_62 = arith.constant 0 : index
    %c0_63 = arith.constant 0 : index
    %120 = vector.load %arg10[%c8, %c0_62, %c0_63] : memref<9x8x1xf32, #tpu.memory_space<vmem>>, vector<1x8x1xf32>
    %121 = vector.shape_cast %120 : vector<1x8x1xf32> to vector<8x1xf32>
    %122 = vector.broadcast %121 : vector<8x1xf32> to vector<8x1024xf32>
    %123 = arith.mulf %119, %122 : vector<8x1024xf32>
    %124 = arith.addf %118, %123 : vector<8x1024xf32>
    %c0_64 = arith.constant 0 : index
    %c0_65 = arith.constant 0 : index
    %125 = vector.load %arg3[%c0_64, %c0_65] : memref<1x1024xf32, #tpu.memory_space<vmem>>, vector<1x1024xf32>
    %c0_66 = arith.constant 0 : index
    %c0_67 = arith.constant 0 : index
    %126 = vector.load %arg11[%c0_66, %c0_67] : memref<8x1xf32, #tpu.memory_space<vmem>>, vector<8x1xf32>
    %127 = vector.broadcast %126 : vector<8x1xf32> to vector<8x1024xf32>
    %128 = arith.addf %124, %127 : vector<8x1024xf32>
    %c0_68 = arith.constant 0 : index
    %c0_69 = arith.constant 0 : index
    %129 = vector.load %arg12[%c0_68, %c0_69] : memref<8x1xf32, #tpu.memory_space<vmem>>, vector<8x1xf32>
    %c0_70 = arith.constant 0 : index
    %c0_71 = arith.constant 0 : index
    %130 = vector.load %arg13[%c0_70, %c0_71] : memref<8x1xf32, #tpu.memory_space<vmem>>, vector<8x1xf32>
    %131 = vector.broadcast %129 : vector<8x1xf32> to vector<8x1024xf32>
    %132 = arith.mulf %131, %128 : vector<8x1024xf32>
    %cst_72 = arith.constant 0.707106769 : f32
    %133 = vector.broadcast %cst_72 : f32 to vector<8x1024xf32>
    %134 = arith.mulf %128, %133 : vector<8x1024xf32>
    %cst_73 = arith.constant 0.000000e+00 : f32
    %135 = vector.broadcast %cst_73 : f32 to vector<8x1024xf32>
    %136 = arith.cmpf oge, %134, %135 : vector<8x1024xf32>
    %cst_74 = arith.constant 1.000000e+00 : f32
    %cst_75 = arith.constant -1.000000e+00 : f32
    %137 = vector.broadcast %cst_74 : f32 to vector<8x1024xf32>
    %138 = vector.broadcast %cst_75 : f32 to vector<8x1024xf32>
    %139 = arith.select %136, %137, %138 : vector<8x1024xi1>, vector<8x1024xf32>
    %140 = math.absf %134 : vector<8x1024xf32>
    %cst_76 = arith.constant 0.327591091 : f32
    %141 = vector.broadcast %cst_76 : f32 to vector<8x1024xf32>
    %142 = arith.mulf %141, %140 : vector<8x1024xf32>
    %cst_77 = arith.constant 1.000000e+00 : f32
    %143 = vector.broadcast %cst_77 : f32 to vector<8x1024xf32>
    %144 = arith.addf %143, %142 : vector<8x1024xf32>
    %cst_78 = arith.constant 1.000000e+00 : f32
    %145 = vector.broadcast %cst_78 : f32 to vector<8x1024xf32>
    %146 = arith.divf %145, %144 : vector<8x1024xf32>
    %cst_79 = arith.constant 1.06140542 : f32
    %147 = vector.broadcast %cst_79 : f32 to vector<8x1024xf32>
    %148 = arith.mulf %147, %146 : vector<8x1024xf32>
    %cst_80 = arith.constant -1.45315206 : f32
    %149 = vector.broadcast %cst_80 : f32 to vector<8x1024xf32>
    %150 = arith.addf %148, %149 : vector<8x1024xf32>
    %151 = arith.mulf %150, %146 : vector<8x1024xf32>
    %cst_81 = arith.constant 1.42141378 : f32
    %152 = vector.broadcast %cst_81 : f32 to vector<8x1024xf32>
    %153 = arith.addf %151, %152 : vector<8x1024xf32>
    %154 = arith.mulf %153, %146 : vector<8x1024xf32>
    %cst_82 = arith.constant -0.284496725 : f32
    %155 = vector.broadcast %cst_82 : f32 to vector<8x1024xf32>
    %156 = arith.addf %154, %155 : vector<8x1024xf32>
    %157 = arith.mulf %156, %146 : vector<8x1024xf32>
    %cst_83 = arith.constant 0.254829586 : f32
    %158 = vector.broadcast %cst_83 : f32 to vector<8x1024xf32>
    %159 = arith.addf %157, %158 : vector<8x1024xf32>
    %160 = arith.mulf %159, %146 : vector<8x1024xf32>
    %cst_84 = arith.constant 0.000000e+00 : f32
    %161 = vector.broadcast %cst_84 : f32 to vector<8x1024xf32>
    %162 = arith.subf %161, %140 : vector<8x1024xf32>
    %163 = arith.mulf %162, %140 : vector<8x1024xf32>
    %164 = math.exp %163 : vector<8x1024xf32>
    %165 = arith.mulf %160, %164 : vector<8x1024xf32>
    %cst_85 = arith.constant 1.000000e+00 : f32
    %166 = vector.broadcast %cst_85 : f32 to vector<8x1024xf32>
    %167 = arith.subf %166, %165 : vector<8x1024xf32>
    %168 = arith.mulf %139, %167 : vector<8x1024xf32>
    %cst_86 = arith.constant 1.000000e+00 : f32
    %169 = vector.broadcast %cst_86 : f32 to vector<8x1024xf32>
    %170 = arith.addf %169, %168 : vector<8x1024xf32>
    %171 = arith.mulf %132, %170 : vector<8x1024xf32>
    %172 = vector.broadcast %130 : vector<8x1xf32> to vector<8x1024xf32>
    %173 = arith.addf %171, %172 : vector<8x1024xf32>
    %174 = vector.broadcast %125 : vector<1x1024xf32> to vector<8x1024xf32>
    %175 = arith.mulf %174, %173 : vector<8x1024xf32>
    %c0_87 = arith.constant 0 : index
    %c0_88 = arith.constant 0 : index
    %176 = vector.load %arg14[%c0_87, %c0_88] : memref<12x8xf32, #tpu.memory_space<vmem>>, vector<12x8xf32>
    %cst_89 = arith.constant dense<0.000000e+00> : vector<12x1024xf32>
    %177 = tpu.matmul %176, %70, %cst_89 {dimension_numbers = #tpu.dot_dimension_numbers<[1], [0], [0], [1], [0, 0, 1, 1], [], []>} : vector<12x8xf32>, vector<8x1024xf32>, vector<12x1024xf32> -> vector<12x1024xf32>
    %c0_90 = arith.constant 0 : index
    %c0_91 = arith.constant 0 : index
    %178 = vector.load %arg15[%c0_90, %c0_91] : memref<12x1xf32, #tpu.memory_space<vmem>>, vector<12x1xf32>
    %179 = vector.broadcast %178 : vector<12x1xf32> to vector<12x1024xf32>
    %180 = arith.addf %177, %179 : vector<12x1024xf32>
    %c0_92 = arith.constant 0 : index
    %c0_93 = arith.constant 0 : index
    %181 = vector.load %arg16[%c0_92, %c0_93] : memref<12x8xf32, #tpu.memory_space<vmem>>, vector<12x8xf32>
    %cst_94 = arith.constant dense<0.000000e+00> : vector<12x1024xf32>
    %182 = tpu.matmul %181, %175, %cst_94 {dimension_numbers = #tpu.dot_dimension_numbers<[1], [0], [0], [1], [0, 0, 1, 1], [], []>} : vector<12x8xf32>, vector<8x1024xf32>, vector<12x1024xf32> -> vector<12x1024xf32>
    %c0_95 = arith.constant 0 : index
    %c0_96 = arith.constant 0 : index
    %183 = vector.load %arg17[%c0_95, %c0_96] : memref<12x1xf32, #tpu.memory_space<vmem>>, vector<12x1xf32>
    %184 = vector.broadcast %183 : vector<12x1xf32> to vector<12x1024xf32>
    %185 = arith.addf %182, %184 : vector<12x1024xf32>
    %c0_97 = arith.constant 0 : index
    %c0_98 = arith.constant 0 : index
    %186 = vector.load %arg18[%c0_97, %c0_98] : memref<12x1xf32, #tpu.memory_space<vmem>>, vector<12x1xf32>
    %c0_99 = arith.constant 0 : index
    %c0_100 = arith.constant 0 : index
    %187 = vector.load %arg19[%c0_99, %c0_100] : memref<12x1xf32, #tpu.memory_space<vmem>>, vector<12x1xf32>
    %188 = vector.broadcast %186 : vector<12x1xf32> to vector<12x1024xf32>
    %189 = arith.mulf %188, %185 : vector<12x1024xf32>
    %cst_101 = arith.constant 0.707106769 : f32
    %190 = vector.broadcast %cst_101 : f32 to vector<12x1024xf32>
    %191 = arith.mulf %185, %190 : vector<12x1024xf32>
    %cst_102 = arith.constant 0.000000e+00 : f32
    %192 = vector.broadcast %cst_102 : f32 to vector<12x1024xf32>
    %193 = arith.cmpf oge, %191, %192 : vector<12x1024xf32>
    %cst_103 = arith.constant 1.000000e+00 : f32
    %cst_104 = arith.constant -1.000000e+00 : f32
    %194 = vector.broadcast %cst_103 : f32 to vector<12x1024xf32>
    %195 = vector.broadcast %cst_104 : f32 to vector<12x1024xf32>
    %196 = arith.select %193, %194, %195 : vector<12x1024xi1>, vector<12x1024xf32>
    %197 = math.absf %191 : vector<12x1024xf32>
    %cst_105 = arith.constant 0.327591091 : f32
    %198 = vector.broadcast %cst_105 : f32 to vector<12x1024xf32>
    %199 = arith.mulf %198, %197 : vector<12x1024xf32>
    %cst_106 = arith.constant 1.000000e+00 : f32
    %200 = vector.broadcast %cst_106 : f32 to vector<12x1024xf32>
    %201 = arith.addf %200, %199 : vector<12x1024xf32>
    %cst_107 = arith.constant 1.000000e+00 : f32
    %202 = vector.broadcast %cst_107 : f32 to vector<12x1024xf32>
    %203 = arith.divf %202, %201 : vector<12x1024xf32>
    %cst_108 = arith.constant 1.06140542 : f32
    %204 = vector.broadcast %cst_108 : f32 to vector<12x1024xf32>
    %205 = arith.mulf %204, %203 : vector<12x1024xf32>
    %cst_109 = arith.constant -1.45315206 : f32
    %206 = vector.broadcast %cst_109 : f32 to vector<12x1024xf32>
    %207 = arith.addf %205, %206 : vector<12x1024xf32>
    %208 = arith.mulf %207, %203 : vector<12x1024xf32>
    %cst_110 = arith.constant 1.42141378 : f32
    %209 = vector.broadcast %cst_110 : f32 to vector<12x1024xf32>
    %210 = arith.addf %208, %209 : vector<12x1024xf32>
    %211 = arith.mulf %210, %203 : vector<12x1024xf32>
    %cst_111 = arith.constant -0.284496725 : f32
    %212 = vector.broadcast %cst_111 : f32 to vector<12x1024xf32>
    %213 = arith.addf %211, %212 : vector<12x1024xf32>
    %214 = arith.mulf %213, %203 : vector<12x1024xf32>
    %cst_112 = arith.constant 0.254829586 : f32
    %215 = vector.broadcast %cst_112 : f32 to vector<12x1024xf32>
    %216 = arith.addf %214, %215 : vector<12x1024xf32>
    %217 = arith.mulf %216, %203 : vector<12x1024xf32>
    %cst_113 = arith.constant 0.000000e+00 : f32
    %218 = vector.broadcast %cst_113 : f32 to vector<12x1024xf32>
    %219 = arith.subf %218, %197 : vector<12x1024xf32>
    %220 = arith.mulf %219, %197 : vector<12x1024xf32>
    %221 = math.exp %220 : vector<12x1024xf32>
    %222 = arith.mulf %217, %221 : vector<12x1024xf32>
    %cst_114 = arith.constant 1.000000e+00 : f32
    %223 = vector.broadcast %cst_114 : f32 to vector<12x1024xf32>
    %224 = arith.subf %223, %222 : vector<12x1024xf32>
    %225 = arith.mulf %196, %224 : vector<12x1024xf32>
    %cst_115 = arith.constant 1.000000e+00 : f32
    %226 = vector.broadcast %cst_115 : f32 to vector<12x1024xf32>
    %227 = arith.addf %226, %225 : vector<12x1024xf32>
    %228 = arith.mulf %189, %227 : vector<12x1024xf32>
    %229 = vector.broadcast %187 : vector<12x1xf32> to vector<12x1024xf32>
    %230 = arith.addf %228, %229 : vector<12x1024xf32>
    %c0_116 = arith.constant 0 : index
    %c0_117 = arith.constant 0 : index
    %231 = vector.load %arg4[%c0_116, %c0_117] : memref<1x1024xf32, #tpu.memory_space<vmem>>, vector<1x1024xf32>
    %232 = arith.addf %180, %230 : vector<12x1024xf32>
    %233 = vector.broadcast %231 : vector<1x1024xf32> to vector<12x1024xf32>
    %234 = arith.mulf %233, %232 : vector<12x1024xf32>
    %c0_118 = arith.constant 0 : index
    %c0_119 = arith.constant 0 : index
    %235 = vector.load %arg5[%c0_118, %c0_119] : memref<1x1024xf32, #tpu.memory_space<vmem>>, vector<1x1024xf32>
    %c0_120 = arith.constant 0 : index
    %c0_121 = arith.constant 0 : index
    %236 = vector.load %arg20[%c0_120, %c0_121] : memref<16x12xf32, #tpu.memory_space<vmem>>, vector<16x12xf32>
    %cst_122 = arith.constant dense<0.000000e+00> : vector<16x1024xf32>
    %237 = tpu.matmul %236, %234, %cst_122 {dimension_numbers = #tpu.dot_dimension_numbers<[1], [0], [0], [1], [0, 0, 1, 1], [], []>} : vector<16x12xf32>, vector<12x1024xf32>, vector<16x1024xf32> -> vector<16x1024xf32>
    %c0_123 = arith.constant 0 : index
    %c0_124 = arith.constant 0 : index
    %238 = vector.load %arg21[%c0_123, %c0_124] : memref<16x1xf32, #tpu.memory_space<vmem>>, vector<16x1xf32>
    %239 = vector.broadcast %238 : vector<16x1xf32> to vector<16x1024xf32>
    %240 = arith.addf %237, %239 : vector<16x1024xf32>
    %c0_125 = arith.constant 0 : index
    %c0_126 = arith.constant 0 : index
    %241 = vector.load %arg22[%c0_125, %c0_126] : memref<16x1xf32, #tpu.memory_space<vmem>>, vector<16x1xf32>
    %c0_127 = arith.constant 0 : index
    %c0_128 = arith.constant 0 : index
    %242 = vector.load %arg23[%c0_127, %c0_128] : memref<16x1xf32, #tpu.memory_space<vmem>>, vector<16x1xf32>
    %243 = vector.broadcast %241 : vector<16x1xf32> to vector<16x1024xf32>
    %244 = arith.mulf %243, %240 : vector<16x1024xf32>
    %cst_129 = arith.constant 0.707106769 : f32
    %245 = vector.broadcast %cst_129 : f32 to vector<16x1024xf32>
    %246 = arith.mulf %240, %245 : vector<16x1024xf32>
    %cst_130 = arith.constant 0.000000e+00 : f32
    %247 = vector.broadcast %cst_130 : f32 to vector<16x1024xf32>
    %248 = arith.cmpf oge, %246, %247 : vector<16x1024xf32>
    %cst_131 = arith.constant 1.000000e+00 : f32
    %cst_132 = arith.constant -1.000000e+00 : f32
    %249 = vector.broadcast %cst_131 : f32 to vector<16x1024xf32>
    %250 = vector.broadcast %cst_132 : f32 to vector<16x1024xf32>
    %251 = arith.select %248, %249, %250 : vector<16x1024xi1>, vector<16x1024xf32>
    %252 = math.absf %246 : vector<16x1024xf32>
    %cst_133 = arith.constant 0.327591091 : f32
    %253 = vector.broadcast %cst_133 : f32 to vector<16x1024xf32>
    %254 = arith.mulf %253, %252 : vector<16x1024xf32>
    %cst_134 = arith.constant 1.000000e+00 : f32
    %255 = vector.broadcast %cst_134 : f32 to vector<16x1024xf32>
    %256 = arith.addf %255, %254 : vector<16x1024xf32>
    %cst_135 = arith.constant 1.000000e+00 : f32
    %257 = vector.broadcast %cst_135 : f32 to vector<16x1024xf32>
    %258 = arith.divf %257, %256 : vector<16x1024xf32>
    %cst_136 = arith.constant 1.06140542 : f32
    %259 = vector.broadcast %cst_136 : f32 to vector<16x1024xf32>
    %260 = arith.mulf %259, %258 : vector<16x1024xf32>
    %cst_137 = arith.constant -1.45315206 : f32
    %261 = vector.broadcast %cst_137 : f32 to vector<16x1024xf32>
    %262 = arith.addf %260, %261 : vector<16x1024xf32>
    %263 = arith.mulf %262, %258 : vector<16x1024xf32>
    %cst_138 = arith.constant 1.42141378 : f32
    %264 = vector.broadcast %cst_138 : f32 to vector<16x1024xf32>
    %265 = arith.addf %263, %264 : vector<16x1024xf32>
    %266 = arith.mulf %265, %258 : vector<16x1024xf32>
    %cst_139 = arith.constant -0.284496725 : f32
    %267 = vector.broadcast %cst_139 : f32 to vector<16x1024xf32>
    %268 = arith.addf %266, %267 : vector<16x1024xf32>
    %269 = arith.mulf %268, %258 : vector<16x1024xf32>
    %cst_140 = arith.constant 0.254829586 : f32
    %270 = vector.broadcast %cst_140 : f32 to vector<16x1024xf32>
    %271 = arith.addf %269, %270 : vector<16x1024xf32>
    %272 = arith.mulf %271, %258 : vector<16x1024xf32>
    %cst_141 = arith.constant 0.000000e+00 : f32
    %273 = vector.broadcast %cst_141 : f32 to vector<16x1024xf32>
    %274 = arith.subf %273, %252 : vector<16x1024xf32>
    %275 = arith.mulf %274, %252 : vector<16x1024xf32>
    %276 = math.exp %275 : vector<16x1024xf32>
    %277 = arith.mulf %272, %276 : vector<16x1024xf32>
    %cst_142 = arith.constant 1.000000e+00 : f32
    %278 = vector.broadcast %cst_142 : f32 to vector<16x1024xf32>
    %279 = arith.subf %278, %277 : vector<16x1024xf32>
    %280 = arith.mulf %251, %279 : vector<16x1024xf32>
    %cst_143 = arith.constant 1.000000e+00 : f32
    %281 = vector.broadcast %cst_143 : f32 to vector<16x1024xf32>
    %282 = arith.addf %281, %280 : vector<16x1024xf32>
    %283 = arith.mulf %244, %282 : vector<16x1024xf32>
    %284 = vector.broadcast %242 : vector<16x1xf32> to vector<16x1024xf32>
    %285 = arith.addf %283, %284 : vector<16x1024xf32>
    %286 = vector.broadcast %235 : vector<1x1024xf32> to vector<16x1024xf32>
    %287 = arith.mulf %286, %285 : vector<16x1024xf32>
    %c23_i32_144 = arith.constant 23 : i32
    %288 = tpu.dynamic_rotate %287 by %c23_i32_144 dim 1 : vector<16x1024xf32>, i32 -> vector<16x1024xf32>
    %c22_i32_145 = arith.constant 22 : i32
    %289 = tpu.dynamic_rotate %287 by %c22_i32_145 dim 1 : vector<16x1024xf32>, i32 -> vector<16x1024xf32>
    %c21_i32_146 = arith.constant 21 : i32
    %290 = tpu.dynamic_rotate %287 by %c21_i32_146 dim 1 : vector<16x1024xf32>, i32 -> vector<16x1024xf32>
    %c1_i32_147 = arith.constant 1 : i32
    %291 = tpu.dynamic_rotate %287 by %c1_i32_147 dim 1 : vector<16x1024xf32>, i32 -> vector<16x1024xf32>
    %c1023_i32_148 = arith.constant 1023 : i32
    %292 = tpu.dynamic_rotate %287 by %c1023_i32_148 dim 1 : vector<16x1024xf32>, i32 -> vector<16x1024xf32>
    %c1003_i32_149 = arith.constant 1003 : i32
    %293 = tpu.dynamic_rotate %287 by %c1003_i32_149 dim 1 : vector<16x1024xf32>, i32 -> vector<16x1024xf32>
    %c1002_i32_150 = arith.constant 1002 : i32
    %294 = tpu.dynamic_rotate %287 by %c1002_i32_150 dim 1 : vector<16x1024xf32>, i32 -> vector<16x1024xf32>
    %c1001_i32_151 = arith.constant 1001 : i32
    %295 = tpu.dynamic_rotate %287 by %c1001_i32_151 dim 1 : vector<16x1024xf32>, i32 -> vector<16x1024xf32>
    %296 = tpu.concatenate %288, %289, %290, %291, %287, %292, %293, %294, %295 in 0 : vector<16x1024xf32>, vector<16x1024xf32>, vector<16x1024xf32>, vector<16x1024xf32>, vector<16x1024xf32>, vector<16x1024xf32>, vector<16x1024xf32>, vector<16x1024xf32>, vector<16x1024xf32> -> vector<144x1024xf32>
    %c0_152 = arith.constant 0 : index
    %c0_153 = arith.constant 0 : index
    %297 = vector.load %arg24[%c0_152, %c0_153] : memref<16x144xf32, #tpu.memory_space<vmem>>, vector<16x144xf32>
    %cst_154 = arith.constant dense<0.000000e+00> : vector<16x1024xf32>
    %298 = tpu.matmul %297, %296, %cst_154 {dimension_numbers = #tpu.dot_dimension_numbers<[1], [0], [0], [1], [0, 0, 1, 1], [], []>} : vector<16x144xf32>, vector<144x1024xf32>, vector<16x1024xf32> -> vector<16x1024xf32>
    %c0_155 = arith.constant 0 : index
    %c0_156 = arith.constant 0 : index
    %299 = vector.load %arg25[%c0_155, %c0_156] : memref<16x1xf32, #tpu.memory_space<vmem>>, vector<16x1xf32>
    %300 = vector.broadcast %299 : vector<16x1xf32> to vector<16x1024xf32>
    %301 = arith.addf %298, %300 : vector<16x1024xf32>
    %c0_157 = arith.constant 0 : index
    %c0_158 = arith.constant 0 : index
    %302 = vector.load %arg26[%c0_157, %c0_158] : memref<16x1xf32, #tpu.memory_space<vmem>>, vector<16x1xf32>
    %c0_159 = arith.constant 0 : index
    %c0_160 = arith.constant 0 : index
    %303 = vector.load %arg27[%c0_159, %c0_160] : memref<16x1xf32, #tpu.memory_space<vmem>>, vector<16x1xf32>
    %304 = vector.broadcast %302 : vector<16x1xf32> to vector<16x1024xf32>
    %305 = arith.mulf %304, %301 : vector<16x1024xf32>
    %cst_161 = arith.constant 0.707106769 : f32
    %306 = vector.broadcast %cst_161 : f32 to vector<16x1024xf32>
    %307 = arith.mulf %301, %306 : vector<16x1024xf32>
    %cst_162 = arith.constant 0.000000e+00 : f32
    %308 = vector.broadcast %cst_162 : f32 to vector<16x1024xf32>
    %309 = arith.cmpf oge, %307, %308 : vector<16x1024xf32>
    %cst_163 = arith.constant 1.000000e+00 : f32
    %cst_164 = arith.constant -1.000000e+00 : f32
    %310 = vector.broadcast %cst_163 : f32 to vector<16x1024xf32>
    %311 = vector.broadcast %cst_164 : f32 to vector<16x1024xf32>
    %312 = arith.select %309, %310, %311 : vector<16x1024xi1>, vector<16x1024xf32>
    %313 = math.absf %307 : vector<16x1024xf32>
    %cst_165 = arith.constant 0.327591091 : f32
    %314 = vector.broadcast %cst_165 : f32 to vector<16x1024xf32>
    %315 = arith.mulf %314, %313 : vector<16x1024xf32>
    %cst_166 = arith.constant 1.000000e+00 : f32
    %316 = vector.broadcast %cst_166 : f32 to vector<16x1024xf32>
    %317 = arith.addf %316, %315 : vector<16x1024xf32>
    %cst_167 = arith.constant 1.000000e+00 : f32
    %318 = vector.broadcast %cst_167 : f32 to vector<16x1024xf32>
    %319 = arith.divf %318, %317 : vector<16x1024xf32>
    %cst_168 = arith.constant 1.06140542 : f32
    %320 = vector.broadcast %cst_168 : f32 to vector<16x1024xf32>
    %321 = arith.mulf %320, %319 : vector<16x1024xf32>
    %cst_169 = arith.constant -1.45315206 : f32
    %322 = vector.broadcast %cst_169 : f32 to vector<16x1024xf32>
    %323 = arith.addf %321, %322 : vector<16x1024xf32>
    %324 = arith.mulf %323, %319 : vector<16x1024xf32>
    %cst_170 = arith.constant 1.42141378 : f32
    %325 = vector.broadcast %cst_170 : f32 to vector<16x1024xf32>
    %326 = arith.addf %324, %325 : vector<16x1024xf32>
    %327 = arith.mulf %326, %319 : vector<16x1024xf32>
    %cst_171 = arith.constant -0.284496725 : f32
    %328 = vector.broadcast %cst_171 : f32 to vector<16x1024xf32>
    %329 = arith.addf %327, %328 : vector<16x1024xf32>
    %330 = arith.mulf %329, %319 : vector<16x1024xf32>
    %cst_172 = arith.constant 0.254829586 : f32
    %331 = vector.broadcast %cst_172 : f32 to vector<16x1024xf32>
    %332 = arith.addf %330, %331 : vector<16x1024xf32>
    %333 = arith.mulf %332, %319 : vector<16x1024xf32>
    %cst_173 = arith.constant 0.000000e+00 : f32
    %334 = vector.broadcast %cst_173 : f32 to vector<16x1024xf32>
    %335 = arith.subf %334, %313 : vector<16x1024xf32>
    %336 = arith.mulf %335, %313 : vector<16x1024xf32>
    %337 = math.exp %336 : vector<16x1024xf32>
    %338 = arith.mulf %333, %337 : vector<16x1024xf32>
    %cst_174 = arith.constant 1.000000e+00 : f32
    %339 = vector.broadcast %cst_174 : f32 to vector<16x1024xf32>
    %340 = arith.subf %339, %338 : vector<16x1024xf32>
    %341 = arith.mulf %312, %340 : vector<16x1024xf32>
    %cst_175 = arith.constant 1.000000e+00 : f32
    %342 = vector.broadcast %cst_175 : f32 to vector<16x1024xf32>
    %343 = arith.addf %342, %341 : vector<16x1024xf32>
    %344 = arith.mulf %305, %343 : vector<16x1024xf32>
    %345 = vector.broadcast %303 : vector<16x1xf32> to vector<16x1024xf32>
    %346 = arith.addf %344, %345 : vector<16x1024xf32>
    %c0_176 = arith.constant 0 : index
    %c0_177 = arith.constant 0 : index
    %347 = vector.load %arg28[%c0_176, %c0_177] : memref<16x1024xf32, #tpu.memory_space<vmem>>, vector<16x1024xf32>
    tpu.vector_store %arg28[%c0_176, %c0_177], %346 {strides = array<i32>} : memref<16x1024xf32, #tpu.memory_space<vmem>>, vector<16x1024xf32>,
    return
  }
  func.func @transform_0(%arg0: i32) -> (i32, i32) {
    %c0_i32 = arith.constant 0 : i32
    %c0_i32_0 = arith.constant 0 : i32
    %c0_i32_1 = arith.constant 0 : i32
    return %c0_i32, %c0_i32_0 : i32, i32
  }
  func.func @transform_1(%arg0: i32) -> (i32, i32, i32) {
    %c0_i32 = arith.constant 0 : i32
    %c0_i32_0 = arith.constant 0 : i32
    %c0_i32_1 = arith.constant 0 : i32
    %c0_i32_2 = arith.constant 0 : i32
    return %c0_i32, %c0_i32_0, %c0_i32_1 : i32, i32, i32
  }
  func.func @transform_2(%arg0: i32) -> (i32, i32) {
    %c0_i32 = arith.constant 0 : i32
    %c0_i32_0 = arith.constant 0 : i32
    %c0_i32_1 = arith.constant 0 : i32
    return %c0_i32, %c0_i32_0 : i32, i32
  }
  func.func @transform_3(%arg0: i32) -> (i32, i32) {
    %c0_i32 = arith.constant 0 : i32
    %c0_i32_0 = arith.constant 0 : i32
    %c0_i32_1 = arith.constant 0 : i32
    return %c0_i32, %c0_i32_0 : i32, i32
  }
  func.func @transform_4(%arg0: i32) -> (i32, i32) {
    %c0_i32 = arith.constant 0 : i32
    %c0_i32_0 = arith.constant 0 : i32
    %c0_i32_1 = arith.constant 0 : i32
    return %c0_i32, %c0_i32_0 : i32, i32
  }
  func.func @transform_5(%arg0: i32) -> (i32, i32) {
    %c0_i32 = arith.constant 0 : i32
    %c0_i32_0 = arith.constant 0 : i32
    %c0_i32_1 = arith.constant 0 : i32
    return %c0_i32, %c0_i32_0 : i32, i32
  }
  func.func @transform_6(%arg0: i32) -> (i32, i32) {
    %c0_i32 = arith.constant 0 : i32
    %c0_i32_0 = arith.constant 0 : i32
    %c0_i32_1 = arith.constant 0 : i32
    return %c0_i32, %c0_i32_0 : i32, i32
  }
  func.func @transform_7(%arg0: i32) -> (i32, i32) {
    %c0_i32 = arith.constant 0 : i32
    %c0_i32_0 = arith.constant 0 : i32
    %c0_i32_1 = arith.constant 0 : i32
    return %c0_i32, %c0_i32_0 : i32, i32
  }
  func.func @transform_8(%arg0: i32) -> (i32, i32) {
    %c0_i32 = arith.constant 0 : i32
    %c0_i32_0 = arith.constant 0 : i32
    %c0_i32_1 = arith.constant 0 : i32
    return %c0_i32, %c0_i32_0 : i32, i32
  }
  func.func @transform_9(%arg0: i32) -> (i32, i32, i32) {
    %c0_i32 = arith.constant 0 : i32
    %c0_i32_0 = arith.constant 0 : i32
    %c0_i32_1 = arith.constant 0 : i32
    %c0_i32_2 = arith.constant 0 : i32
    return %c0_i32, %c0_i32_0, %c0_i32_1 : i32, i32, i32
  }
  func.func @transform_10(%arg0: i32) -> (i32, i32) {
    %c0_i32 = arith.constant 0 : i32
    %c0_i32_0 = arith.constant 0 : i32
    %c0_i32_1 = arith.constant 0 : i32
    return %c0_i32, %c0_i32_0 : i32, i32
  }
  func.func @transform_11(%arg0: i32) -> (i32, i32) {
    %c0_i32 = arith.constant 0 : i32
    %c0_i32_0 = arith.constant 0 : i32
    %c0_i32_1 = arith.constant 0 : i32
    return %c0_i32, %c0_i32_0 : i32, i32
  }
  func.func @transform_12(%arg0: i32) -> (i32, i32) {
    %c0_i32 = arith.constant 0 : i32
    %c0_i32_0 = arith.constant 0 : i32
    %c0_i32_1 = arith.constant 0 : i32
    return %c0_i32, %c0_i32_0 : i32, i32
  }
  func.func @transform_13(%arg0: i32) -> (i32, i32) {
    %c0_i32 = arith.constant 0 : i32
    %c0_i32_0 = arith.constant 0 : i32
    %c0_i32_1 = arith.constant 0 : i32
    return %c0_i32, %c0_i32_0 : i32, i32
  }
  func.func @transform_14(%arg0: i32) -> (i32, i32) {
    %c0_i32 = arith.constant 0 : i32
    %c0_i32_0 = arith.constant 0 : i32
    %c0_i32_1 = arith.constant 0 : i32
    return %c0_i32, %c0_i32_0 : i32, i32
  }
  func.func @transform_15(%arg0: i32) -> (i32, i32) {
    %c0_i32 = arith.constant 0 : i32
    %c0_i32_0 = arith.constant 0 : i32
    %c0_i32_1 = arith.constant 0 : i32
    return %c0_i32, %c0_i32_0 : i32, i32
  }
  func.func @transform_16(%arg0: i32) -> (i32, i32) {
    %c0_i32 = arith.constant 0 : i32
    %c0_i32_0 = arith.constant 0 : i32
    %c0_i32_1 = arith.constant 0 : i32
    return %c0_i32, %c0_i32_0 : i32, i32
  }
  func.func @transform_17(%arg0: i32) -> (i32, i32) {
    %c0_i32 = arith.constant 0 : i32
    %c0_i32_0 = arith.constant 0 : i32
    %c0_i32_1 = arith.constant 0 : i32
    return %c0_i32, %c0_i32_0 : i32, i32
  }
  func.func @transform_18(%arg0: i32) -> (i32, i32) {
    %c0_i32 = arith.constant 0 : i32
    %c0_i32_0 = arith.constant 0 : i32
    %c0_i32_1 = arith.constant 0 : i32
    return %c0_i32, %c0_i32_0 : i32, i32
  }
  func.func @transform_19(%arg0: i32) -> (i32, i32) {
    %c0_i32 = arith.constant 0 : i32
    %c0_i32_0 = arith.constant 0 : i32
    %c0_i32_1 = arith.constant 0 : i32
    return %c0_i32, %c0_i32_0 : i32, i32
  }
  func.func @transform_20(%arg0: i32) -> (i32, i32) {
    %c0_i32 = arith.constant 0 : i32
    %c0_i32_0 = arith.constant 0 : i32
    %c0_i32_1 = arith.constant 0 : i32
    return %c0_i32, %c0_i32_0 : i32, i32
  }
  func.func @transform_21(%arg0: i32) -> (i32, i32) {
    %c0_i32 = arith.constant 0 : i32
    %c0_i32_0 = arith.constant 0 : i32
    %c0_i32_1 = arith.constant 0 : i32
    return %c0_i32, %c0_i32_0 : i32, i32
  }
  func.func @transform_22(%arg0: i32) -> (i32, i32) {
    %c0_i32 = arith.constant 0 : i32
    %c0_i32_0 = arith.constant 0 : i32
    %c0_i32_1 = arith.constant 0 : i32
    return %c0_i32, %c0_i32_0 : i32, i32
  }
  func.func @transform_23(%arg0: i32) -> (i32, i32) {
    %c0_i32 = arith.constant 0 : i32
    %c0_i32_0 = arith.constant 0 : i32
    %c0_i32_1 = arith.constant 0 : i32
    return %c0_i32, %c0_i32_0 : i32, i32
  }
  func.func @transform_24(%arg0: i32) -> (i32, i32) {
    %c0_i32 = arith.constant 0 : i32
    %c0_i32_0 = arith.constant 0 : i32
    %c0_i32_1 = arith.constant 0 : i32
    return %c0_i32, %c0_i32_0 : i32, i32
  }
  func.func @transform_25(%arg0: i32) -> (i32, i32) {
    %c0_i32 = arith.constant 0 : i32
    %c0_i32_0 = arith.constant 0 : i32
    %c0_i32_1 = arith.constant 0 : i32
    return %c0_i32, %c0_i32_0 : i32, i32
  }
  func.func @transform_26(%arg0: i32) -> (i32, i32) {
    %c0_i32 = arith.constant 0 : i32
    %c0_i32_0 = arith.constant 0 : i32
    %c0_i32_1 = arith.constant 0 : i32
    return %c0_i32, %c0_i32_0 : i32, i32
  }
  func.func @transform_27(%arg0: i32) -> (i32, i32) {
    %c0_i32 = arith.constant 0 : i32
    %c0_i32_0 = arith.constant 0 : i32
    %c0_i32_1 = arith.constant 0 : i32
    return %c0_i32, %c0_i32_0 : i32, i32
  }
}

</mosaic_0001>

<llo_original>
// kernel: downsample_layers_forward.1
$region0: #{downsample_layers_forward.1}
  #allocation0 [shape = 'u32[]', space=smem, size = 0x4, offset = 0x4, fixed_abs, tag = 'smem constant byte address 0x4 - core index']
  #allocation1 [shape = 'u32[72,128]{1,0:T(1,128)}', space=vmem, size = 0x9000, scoped, tag = 'internal scratch']
  %s0 = inlined_call_operand.vmem [shape: f32[8,1024], index: 0, kind: input, shape index: {}]
  %s1 = inlined_call_operand.vmem [shape: f32[2,1,1024], index: 1, kind: input, shape index: {}]
  %s2 = inlined_call_operand.vmem [shape: f32[1,1024], index: 2, kind: input, shape index: {}]
  %s3 = inlined_call_operand.vmem [shape: f32[1,1024], index: 3, kind: input, shape index: {}]
  %s4 = inlined_call_operand.vmem [shape: f32[1,1024], index: 4, kind: input, shape index: {}]
  %s5 = inlined_call_operand.vmem [shape: f32[4,8], index: 5, kind: input, shape index: {}]
  %s6 = inlined_call_operand.vmem [shape: f32[4,1], index: 6, kind: input, shape index: {}]
  %s7 = inlined_call_operand.vmem [shape: f32[8,4], index: 7, kind: input, shape index: {}]
  %s8 = inlined_call_operand.vmem [shape: f32[8,1], index: 8, kind: input, shape index: {}]
  %s9 = inlined_call_operand.vmem [shape: f32[9,8,1], index: 9, kind: input, shape index: {}]
  %s10 = inlined_call_operand.vmem [shape: f32[8,1], index: 10, kind: input, shape index: {}]
  %s11 = inlined_call_operand.vmem [shape: f32[8,1], index: 11, kind: input, shape index: {}]
  %s12 = inlined_call_operand.vmem [shape: f32[8,1], index: 12, kind: input, shape index: {}]
  %s13 = inlined_call_operand.vmem [shape: f32[12,8], index: 13, kind: input, shape index: {}]
  %s14 = inlined_call_operand.vmem [shape: f32[12,1], index: 14, kind: input, shape index: {}]
  %s15 = inlined_call_operand.vmem [shape: f32[12,8], index: 15, kind: input, shape index: {}]
  %s16 = inlined_call_operand.vmem [shape: f32[12,1], index: 16, kind: input, shape index: {}]
  %s17 = inlined_call_operand.vmem [shape: f32[12,1], index: 17, kind: input, shape index: {}]
  %s18 = inlined_call_operand.vmem [shape: f32[12,1], index: 18, kind: input, shape index: {}]
  %s19 = inlined_call_operand.vmem [shape: f32[16,12], index: 19, kind: input, shape index: {}]
  %s20 = inlined_call_operand.vmem [shape: f32[16,1], index: 20, kind: input, shape index: {}]
  %s21 = inlined_call_operand.vmem [shape: f32[16,1], index: 21, kind: input, shape index: {}]
  %s22 = inlined_call_operand.vmem [shape: f32[16,1], index: 22, kind: input, shape index: {}]
  %s23 = inlined_call_operand.vmem [shape: f32[16,144], index: 23, kind: input, shape index: {}]
  %s24 = inlined_call_operand.vmem [shape: f32[16,1], index: 24, kind: input, shape index: {}]
  %s25 = inlined_call_operand.vmem [shape: f32[16,1], index: 25, kind: input, shape index: {}]
  %s26 = inlined_call_operand.vmem [shape: f32[16,1], index: 26, kind: input, shape index: {}]
  %s27 = inlined_call_operand.vmem [shape: f32[16,1024], index: 27, kind: output, shape index: {}]
  %s28 = sld [smem:[#allocation0]]
  $region118: #{downsample_layers_forward.1} parent=0
    _
  %s30 = ssub.s32 1, %s28
  %s31 = scalar_select 0, %s30, %s28
  // Predicated region
  $region2: #{downsample_layers_forward.1} parent=0 // pred_check
    _
  $region3: #{downsample_layers_forward.1} parent=0 // pred_check_branch
    %33 = sbr.rel (0) target = $region5
  $region4: #{downsample_layers_forward.1} parent=0 // pred_region
    _
  $region5: #{downsample_layers_forward.1} parent=0 // pred_fallthru
    _
  // Predicated region
  $region6: #{downsample_layers_forward.1} parent=0 // pred_check
    _
  $region7: #{downsample_layers_forward.1} parent=0 // pred_check_branch
    %35 = sbr.rel (0) target = $region9
  $region8: #{downsample_layers_forward.1} parent=0 // pred_region
    _
  $region9: #{downsample_layers_forward.1} parent=0 // pred_fallthru
    _
  // Predicated region
  $region10: #{downsample_layers_forward.1} parent=0 // pred_check
    _
  $region11: #{downsample_layers_forward.1} parent=0 // pred_check_branch
    %37 = sbr.rel (0) target = $region13
  $region12: #{downsample_layers_forward.1} parent=0 // pred_region
    _
  $region13: #{downsample_layers_forward.1} parent=0 // pred_fallthru
    _
  // Predicated region
  $region14: #{downsample_layers_forward.1} parent=0 // pred_check
    _
  $region15: #{downsample_layers_forward.1} parent=0 // pred_check_branch
    %39 = sbr.rel (0) target = $region17
  $region16: #{downsample_layers_forward.1} parent=0 // pred_region
    _
  $region17: #{downsample_layers_forward.1} parent=0 // pred_fallthru
    _
  // Predicated region
  $region18: #{downsample_layers_forward.1} parent=0 // pred_check
    _
  $region19: #{downsample_layers_forward.1} parent=0 // pred_check_branch
    %41 = sbr.rel (0) target = $region21
  $region20: #{downsample_layers_forward.1} parent=0 // pred_region
    _
  $region21: #{downsample_layers_forward.1} parent=0 // pred_fallthru
    _
  // Predicated region
  $region22: #{downsample_layers_forward.1} parent=0 // pred_check
    _
  $region23: #{downsample_layers_forward.1} parent=0 // pred_check_branch
    %43 = sbr.rel (0) target = $region25
  $region24: #{downsample_layers_forward.1} parent=0 // pred_region
    _
  $region25: #{downsample_layers_forward.1} parent=0 // pred_fallthru
    _
  // Predicated region
  $region26: #{downsample_layers_forward.1} parent=0 // pred_check
    _
  $region27: #{downsample_layers_forward.1} parent=0 // pred_check_branch
    %45 = sbr.rel (0) target = $region29
  $region28: #{downsample_layers_forward.1} parent=0 // pred_region
    _
  $region29: #{downsample_layers_forward.1} parent=0 // pred_fallthru
    _
  // Predicated region
  $region30: #{downsample_layers_forward.1} parent=0 // pred_check
    _
  $region31: #{downsample_layers_forward.1} parent=0 // pred_check_branch
    %47 = sbr.rel (0) target = $region33
  $region32: #{downsample_layers_forward.1} parent=0 // pred_region
    _
  $region33: #{downsample_layers_forward.1} parent=0 // pred_fallthru
    _
  // Predicated region
  $region34: #{downsample_layers_forward.1} parent=0 // pred_check
    _
  $region35: #{downsample_layers_forward.1} parent=0 // pred_check_branch
    %49 = sbr.rel (0) target = $region37
  $region36: #{downsample_layers_forward.1} parent=0 // pred_region
    _
  $region37: #{downsample_layers_forward.1} parent=0 // pred_fallthru
    _
  // Predicated region
  $region38: #{downsample_layers_forward.1} parent=0 // pred_check
    _
  $region39: #{downsample_layers_forward.1} parent=0 // pred_check_branch
    %51 = sbr.rel (0) target = $region41
  $region40: #{downsample_layers_forward.1} parent=0 // pred_region
    _
  $region41: #{downsample_layers_forward.1} parent=0 // pred_fallthru
    _
  // Predicated region
  $region42: #{downsample_layers_forward.1} parent=0 // pred_check
    _
  $region43: #{downsample_layers_forward.1} parent=0 // pred_check_branch
    %53 = sbr.rel (0) target = $region45
  $region44: #{downsample_layers_forward.1} parent=0 // pred_region
    _
  $region45: #{downsample_layers_forward.1} parent=0 // pred_fallthru
    _
  // Predicated region
  $region46: #{downsample_layers_forward.1} parent=0 // pred_check
    _
  $region47: #{downsample_layers_forward.1} parent=0 // pred_check_branch
    %55 = sbr.rel (0) target = $region49
  $region48: #{downsample_layers_forward.1} parent=0 // pred_region
    _
  $region49: #{downsample_layers_forward.1} parent=0 // pred_fallthru
    _
  // Predicated region
  $region50: #{downsample_layers_forward.1} parent=0 // pred_check
    _
  $region51: #{downsample_layers_forward.1} parent=0 // pred_check_branch
    %57 = sbr.rel (0) target = $region53
  $region52: #{downsample_layers_forward.1} parent=0 // pred_region
    _
  $region53: #{downsample_layers_forward.1} parent=0 // pred_fallthru
    _
  // Predicated region
  $region54: #{downsample_layers_forward.1} parent=0 // pred_check
    _
  $region55: #{downsample_layers_forward.1} parent=0 // pred_check_branch
    %59 = sbr.rel (0) target = $region57
  $region56: #{downsample_layers_forward.1} parent=0 // pred_region
    _
  $region57: #{downsample_layers_forward.1} parent=0 // pred_fallthru
    _
  // Predicated region
  $region58: #{downsample_layers_forward.1} parent=0 // pred_check
    _
  $region59: #{downsample_layers_forward.1} parent=0 // pred_check_branch
    %61 = sbr.rel (0) target = $region61
  $region60: #{downsample_layers_forward.1} parent=0 // pred_region
    _
  $region61: #{downsample_layers_forward.1} parent=0 // pred_fallthru
    _
  // Predicated region
  $region62: #{downsample_layers_forward.1} parent=0 // pred_check
    _
  $region63: #{downsample_layers_forward.1} parent=0 // pred_check_branch
    %63 = sbr.rel (0) target = $region65
  $region64: #{downsample_layers_forward.1} parent=0 // pred_region
    _
  $region65: #{downsample_layers_forward.1} parent=0 // pred_fallthru
    _
  // Predicated region
  $region66: #{downsample_layers_forward.1} parent=0 // pred_check
    _
  $region67: #{downsample_layers_forward.1} parent=0 // pred_check_branch
    %65 = sbr.rel (0) target = $region69
  $region68: #{downsample_layers_forward.1} parent=0 // pred_region
    _
  $region69: #{downsample_layers_forward.1} parent=0 // pred_fallthru
    _
  // Predicated region
  $region70: #{downsample_layers_forward.1} parent=0 // pred_check
    _
  $region71: #{downsample_layers_forward.1} parent=0 // pred_check_branch
    %67 = sbr.rel (0) target = $region73
  $region72: #{downsample_layers_forward.1} parent=0 // pred_region
    _
  $region73: #{downsample_layers_forward.1} parent=0 // pred_fallthru
    _
  // Predicated region
  $region74: #{downsample_layers_forward.1} parent=0 // pred_check
    _
  $region75: #{downsample_layers_forward.1} parent=0 // pred_check_branch
    %69 = sbr.rel (0) target = $region77
  $region76: #{downsample_layers_forward.1} parent=0 // pred_region
    _
  $region77: #{downsample_layers_forward.1} parent=0 // pred_fallthru
    _
  // Predicated region
  $region78: #{downsample_layers_forward.1} parent=0 // pred_check
    _
  $region79: #{downsample_layers_forward.1} parent=0 // pred_check_branch
    %71 = sbr.rel (0) target = $region81
  $region80: #{downsample_layers_forward.1} parent=0 // pred_region
    _
  $region81: #{downsample_layers_forward.1} parent=0 // pred_fallthru
    _
  // Predicated region
  $region82: #{downsample_layers_forward.1} parent=0 // pred_check
    _
  $region83: #{downsample_layers_forward.1} parent=0 // pred_check_branch
    %73 = sbr.rel (0) target = $region85
  $region84: #{downsample_layers_forward.1} parent=0 // pred_region
    _
  $region85: #{downsample_layers_forward.1} parent=0 // pred_fallthru
    _
  // Predicated region
  $region86: #{downsample_layers_forward.1} parent=0 // pred_check
    _
  $region87: #{downsample_layers_forward.1} parent=0 // pred_check_branch
    %75 = sbr.rel (0) target = $region89
  $region88: #{downsample_layers_forward.1} parent=0 // pred_region
    _
  $region89: #{downsample_layers_forward.1} parent=0 // pred_fallthru
    _
  // Predicated region
  $region90: #{downsample_layers_forward.1} parent=0 // pred_check
    _
  $region91: #{downsample_layers_forward.1} parent=0 // pred_check_branch
    %77 = sbr.rel (0) target = $region93
  $region92: #{downsample_layers_forward.1} parent=0 // pred_region
    _
  $region93: #{downsample_layers_forward.1} parent=0 // pred_fallthru
    _
  // Predicated region
  $region94: #{downsample_layers_forward.1} parent=0 // pred_check
    _
  $region95: #{downsample_layers_forward.1} parent=0 // pred_check_branch
    %79 = sbr.rel (0) target = $region97
  $region96: #{downsample_layers_forward.1} parent=0 // pred_region
    _
  $region97: #{downsample_layers_forward.1} parent=0 // pred_fallthru
    _
  // Predicated region
  $region98: #{downsample_layers_forward.1} parent=0 // pred_check
    _
  $region99: #{downsample_layers_forward.1} parent=0 // pred_check_branch
    %81 = sbr.rel (0) target = $region101
  $region100: #{downsample_layers_forward.1} parent=0 // pred_region
    _
  $region101: #{downsample_layers_forward.1} parent=0 // pred_fallthru
    _
  // Predicated region
  $region102: #{downsample_layers_forward.1} parent=0 // pred_check
    _
  $region103: #{downsample_layers_forward.1} parent=0 // pred_check_branch
    %83 = sbr.rel (0) target = $region105
  $region104: #{downsample_layers_forward.1} parent=0 // pred_region
    _
  $region105: #{downsample_layers_forward.1} parent=0 // pred_fallthru
    _
  // Predicated region
  $region106: #{downsample_layers_forward.1} parent=0 // pred_check
    _
  $region107: #{downsample_layers_forward.1} parent=0 // pred_check_branch
    %85 = sbr.rel (0) target = $region109
  $region108: #{downsample_layers_forward.1} parent=0 // pred_region
    _
  $region109: #{downsample_layers_forward.1} parent=0 // pred_fallthru
    _
  %v86 = vld [vmem:[%s0] sm:$0xff]
  %v87 = vld [vmem:[%s0 + $0x8] sm:$0xff]
  %v88 = vld [vmem:[%s0 + $0x10] sm:$0xff]
  %v89 = vld [vmem:[%s0 + $0x18] sm:$0xff]
  %v90 = vld [vmem:[%s0 + $0x20] sm:$0xff]
  %v91 = vld [vmem:[%s0 + $0x28] sm:$0xff]
  %v92 = vld [vmem:[%s0 + $0x30] sm:$0xff]
  %v93 = vld [vmem:[%s0 + $0x38] sm:$0xff]
  %v94 = vld [vmem:[%s1] sm:$0xff]
  %v96 = vperm.slane %v94, 0
  %v97 = vperm.slane %v94, 1
  %v98 = vperm.slane %v94, 2
  %v99 = vperm.slane %v94, 3
  %v100 = vperm.slane %v94, 4
  %v101 = vperm.slane %v94, 5
  %v102 = vperm.slane %v94, 6
  %v103 = vperm.slane %v94, 7
  %v112 = vmul.f32 %v86, %v96
  %v113 = vmul.f32 %v87, %v97
  %v114 = vmul.f32 %v88, %v98
  %v115 = vmul.f32 %v89, %v99
  %v116 = vmul.f32 %v90, %v100
  %v117 = vmul.f32 %v91, %v101
  %v118 = vmul.f32 %v92, %v102
  %v119 = vmul.f32 %v93, %v103
  %v120 = vadd.f32 %v112, %v113
  %v121 = vadd.f32 %v120, %v114
  %v122 = vadd.f32 %v121, %v115
  %v123 = vadd.f32 %v122, %v116
  %v124 = vadd.f32 %v123, %v117
  %v125 = vadd.f32 %v124, %v118
  %v126 = vadd.f32 %v125, %v119
  %127 = vadd.xlane.f32.xlu0 %v126
  %v128 = vpop.xlane.xlu0 %127
  %v129 = vmul.f32 %v128, 0.00390625
  %v130 = vld [vmem:[%s5] sm:$0xf]
  %v131 = vld [vmem:[%s6] sm:$0xf]
  %vm132 = vcmask 64512
  %v134 = vsel %vm132, %v130, 0
  %136 = vmatpush.msra.mxu0 0.0
  %137 = vmatpush.msra.mxu0 0.0
  %138 = vmatpush.msra.mxu0 0.0
  %139 = vmatpush.msra.mxu0 0.0
  %140 = vmatpush.msra.mxu0 0.0
  %141 = vmatpush.msra.mxu0 0.0
  %142 = vmatpush.msra.mxu0 0.0
  %143 = vmatpush.msra.mxu0 0.0
  %144 = vmatpush.msra.mxu0 0.0
  %145 = vmatpush.msra.mxu0 0.0
  %146 = vmatpush.msra.mxu0 0.0
  %147 = vmatpush.msra.mxu0 0.0
  %148 = vmatpush.msra.mxu0 0.0
  %149 = vmatpush.msra.mxu0 0.0
  %150 = vmatpush.msra.mxu0 0.0
  %151 = vmatpush.msra.mxu0 %v129
  %152 = vmatmul.f32.gmra.mxu0 %v134
  %v153 = vpop.f32.mrf.mxu0
  %v154 = vadd.f32 %v131, %v153
  %155 = vdwg.mxu0
  %v156 = vmax.f32 %v154, 0.0
  %v157 = vld [vmem:[%s7] sm:$0xff]
  %v158 = vld [vmem:[%s8] sm:$0xff]
  %vm159 = vcmask 31744
  %v161 = vsel %vm159, %v157, 0
  %vm163 = vcmask 1043456
  %v165 = vsel %vm163, %v156, 0
  %167 = vmatpush.msra.mxu0 0.0
  %168 = vmatpush.msra.mxu0 0.0
  %169 = vmatpush.msra.mxu0 0.0
  %170 = vmatpush.msra.mxu0 0.0
  %171 = vmatpush.msra.mxu0 0.0
  %172 = vmatpush.msra.mxu0 0.0
  %173 = vmatpush.msra.mxu0 0.0
  %174 = vmatpush.msra.mxu0 0.0
  %175 = vmatpush.msra.mxu0 0.0
  %176 = vmatpush.msra.mxu0 0.0
  %177 = vmatpush.msra.mxu0 0.0
  %178 = vmatpush.msra.mxu0 0.0
  %179 = vmatpush.msra.mxu0 0.0
  %180 = vmatpush.msra.mxu0 0.0
  %181 = vmatpush.msra.mxu0 0.0
  %182 = vmatpush.msra.mxu0 %v165
  %183 = vmatmul.f32.gmra.mxu0 %v161
  %v184 = vpop.f32.mrf.mxu0
  %v185 = vadd.f32 %v158, %v184
  %186 = vdwg.mxu0
  %v187 = vmax.f32 %v185, -30.0
  %v188 = vmin.f32 %v187, 30.0
  %v189 = vsub.f32 0.0, %v188
  %v190 = vmul.f32 %v189, 1.442695
  %v191 = vpow.pop %v190
  %v192 = vadd.f32 %v191, 1.0
  %v193 = vrcp.pop %v192
  %v194 = vmul.f32 %v192, %v193
  %v195 = vsub.f32 1.0, %v194
  %v196 = vmul.f32 %v193, %v195
  %v197 = vadd.f32 %v193, %v196
  %vm198 = vweird.f32 %v192
  %vm199 = vweird.f32 %v193
  %vm200 = vmor %vm198, %vm199
  %v201 = vsel %vm200, %v193, %v197
  %v202 = vand.u32 2147483647, %v192
  %vm203 = vcmp.eq.f32.partialorder %v202, 8.507059e+37
  %v204 = vand.u32 %v192, 2147483648
  %v205 = vor.u32 1.1754944e-38, %v204
  %v206 = vsel %vm203, %v205, %v201
  %v207 = vmul.f32 1.0, %v206
  %209 = vset.pattern.permute.xlu0 0
  %210 = vperm.xlu0 %209, %v207
  %v211 = vpop.permute.xlu0 %210
  %v213 = vmul.f32 %v96, %v211
  %v214 = vmul.f32 %v97, %v211
  %v215 = vmul.f32 %v98, %v211
  %v216 = vmul.f32 %v99, %v211
  %v217 = vmul.f32 %v100, %v211
  %v218 = vmul.f32 %v101, %v211
  %v219 = vmul.f32 %v102, %v211
  %v220 = vmul.f32 %v103, %v211
  %v221 = vadd.f32 %v213, 0.0
  %v222 = vadd.f32 %v214, 0.0
  %v223 = vadd.f32 %v215, 0.0
  %v224 = vadd.f32 %v216, 0.0
  %v225 = vadd.f32 %v217, 0.0
  %v226 = vadd.f32 %v218, 0.0
  %v227 = vadd.f32 %v219, 0.0
  %v228 = vadd.f32 %v220, 0.0
  %s229 = scalar_lea.vmem %s1, 8
  %v230 = vld [vmem:[%s229] sm:$0xff]
  %v232 = vperm.slane %v230, 0
  %v233 = vperm.slane %v230, 1
  %v234 = vperm.slane %v230, 2
  %v235 = vperm.slane %v230, 3
  %v236 = vperm.slane %v230, 4
  %v237 = vperm.slane %v230, 5
  %v238 = vperm.slane %v230, 6
  %v239 = vperm.slane %v230, 7
  %v248 = vmul.f32 %v86, %v232
  %v249 = vmul.f32 %v87, %v233
  %v250 = vmul.f32 %v88, %v234
  %v251 = vmul.f32 %v89, %v235
  %v252 = vmul.f32 %v90, %v236
  %v253 = vmul.f32 %v91, %v237
  %v254 = vmul.f32 %v92, %v238
  %v255 = vmul.f32 %v93, %v239
  %v256 = vadd.f32 %v248, %v249
  %v257 = vadd.f32 %v256, %v250
  %v258 = vadd.f32 %v257, %v251
  %v259 = vadd.f32 %v258, %v252
  %v260 = vadd.f32 %v259, %v253
  %v261 = vadd.f32 %v260, %v254
  %v262 = vadd.f32 %v261, %v255
  %263 = vadd.xlane.f32.xlu0 %v262
  %v264 = vpop.xlane.xlu0 %263
  %v265 = vmul.f32 %v264, 0.00390625
  %266 = vmatpush.msra.mxu0 0.0
  %267 = vmatpush.msra.mxu0 0.0
  %268 = vmatpush.msra.mxu0 0.0
  %269 = vmatpush.msra.mxu0 0.0
  %270 = vmatpush.msra.mxu0 0.0
  %271 = vmatpush.msra.mxu0 0.0
  %272 = vmatpush.msra.mxu0 0.0
  %273 = vmatpush.msra.mxu0 0.0
  %274 = vmatpush.msra.mxu0 0.0
  %275 = vmatpush.msra.mxu0 0.0
  %276 = vmatpush.msra.mxu0 0.0
  %277 = vmatpush.msra.mxu0 0.0
  %278 = vmatpush.msra.mxu0 0.0
  %279 = vmatpush.msra.mxu0 0.0
  %280 = vmatpush.msra.mxu0 0.0
  %281 = vmatpush.msra.mxu0 %v265
  %282 = vmatmul.f32.gmra.mxu0 %v134
  %v283 = vpop.f32.mrf.mxu0
  %v284 = vadd.f32 %v131, %v283
  %285 = vdwg.mxu0
  %v286 = vmax.f32 %v284, 0.0
  %v288 = vsel %vm163, %v286, 0
  %290 = vmatpush.msra.mxu0 0.0
  %291 = vmatpush.msra.mxu0 0.0
  %292 = vmatpush.msra.mxu0 0.0
  %293 = vmatpush.msra.mxu0 0.0
  %294 = vmatpush.msra.mxu0 0.0
  %295 = vmatpush.msra.mxu0 0.0
  %296 = vmatpush.msra.mxu0 0.0
  %297 = vmatpush.msra.mxu0 0.0
  %298 = vmatpush.msra.mxu0 0.0
  %299 = vmatpush.msra.mxu0 0.0
  %300 = vmatpush.msra.mxu0 0.0
  %301 = vmatpush.msra.mxu0 0.0
  %302 = vmatpush.msra.mxu0 0.0
  %303 = vmatpush.msra.mxu0 0.0
  %304 = vmatpush.msra.mxu0 0.0
  %305 = vmatpush.msra.mxu0 %v288
  %306 = vmatmul.f32.gmra.mxu0 %v161
  %v307 = vpop.f32.mrf.mxu0
  %v308 = vadd.f32 %v158, %v307
  %309 = vdwg.mxu0
  %v310 = vmax.f32 %v308, -30.0
  %v311 = vmin.f32 %v310, 30.0
  %v312 = vsub.f32 0.0, %v311
  %v313 = vmul.f32 %v312, 1.442695
  %v314 = vpow.pop %v313
  %v315 = vadd.f32 %v314, 1.0
  %v316 = vrcp.pop %v315
  %v317 = vmul.f32 %v315, %v316
  %v318 = vsub.f32 1.0, %v317
  %v319 = vmul.f32 %v316, %v318
  %v320 = vadd.f32 %v316, %v319
  %vm321 = vweird.f32 %v315
  %vm322 = vweird.f32 %v316
  %vm323 = vmor %vm321, %vm322
  %v324 = vsel %vm323, %v316, %v320
  %v325 = vand.u32 2147483647, %v315
  %vm326 = vcmp.eq.f32.partialorder %v325, 8.507059e+37
  %v327 = vand.u32 %v315, 2147483648
  %v328 = vor.u32 1.1754944e-38, %v327
  %v329 = vsel %vm326, %v328, %v324
  %v330 = vmul.f32 1.0, %v329
  %332 = vset.pattern.permute.xlu0 0
  %333 = vperm.xlu0 %332, %v330
  %v334 = vpop.permute.xlu0 %333
  %v336 = vmul.f32 %v232, %v334
  %v337 = vmul.f32 %v233, %v334
  %v338 = vmul.f32 %v234, %v334
  %v339 = vmul.f32 %v235, %v334
  %v340 = vmul.f32 %v236, %v334
  %v341 = vmul.f32 %v237, %v334
  %v342 = vmul.f32 %v238, %v334
  %v343 = vmul.f32 %v239, %v334
  %v344 = vadd.f32 %v221, %v336
  %v345 = vadd.f32 %v222, %v337
  %v346 = vadd.f32 %v223, %v338
  %v347 = vadd.f32 %v224, %v339
  %v348 = vadd.f32 %v225, %v340
  %v349 = vadd.f32 %v226, %v341
  %v350 = vadd.f32 %v227, %v342
  %v351 = vadd.f32 %v228, %v343
  %v352 = vadd.f32 %v344, 1.0
  %v353 = vadd.f32 %v345, 1.0
  %v354 = vadd.f32 %v346, 1.0
  %v355 = vadd.f32 %v347, 1.0
  %v356 = vadd.f32 %v348, 1.0
  %v357 = vadd.f32 %v349, 1.0
  %v358 = vadd.f32 %v350, 1.0
  %v359 = vadd.f32 %v351, 1.0
  %v360 = vmul.f32 %v86, %v352
  %v361 = vmul.f32 %v87, %v353
  %v362 = vmul.f32 %v88, %v354
  %v363 = vmul.f32 %v89, %v355
  %v364 = vmul.f32 %v90, %v356
  %v365 = vmul.f32 %v91, %v357
  %v366 = vmul.f32 %v92, %v358
  %v367 = vmul.f32 %v93, %v359
  %368 = vrot.lane.b32.xlu0 %v86, 23
  %v369 = vpop.permute.xlu0 %368
  %370 = vrot.lane.b32.xlu0 %v87, 23
  %v371 = vpop.permute.xlu0 %370
  %372 = vrot.lane.b32.xlu0 %v88, 23
  %v373 = vpop.permute.xlu0 %372
  %374 = vrot.lane.b32.xlu0 %v89, 23
  %v375 = vpop.permute.xlu0 %374
  %376 = vrot.lane.b32.xlu0 %v90, 23
  %v377 = vpop.permute.xlu0 %376
  %378 = vrot.lane.b32.xlu0 %v91, 23
  %v379 = vpop.permute.xlu0 %378
  %380 = vrot.lane.b32.xlu0 %v92, 23
  %v381 = vpop.permute.xlu0 %380
  %382 = vrot.lane.b32.xlu0 %v93, 23
  %v383 = vpop.permute.xlu0 %382
  %v384 = vlaneseq
  %v385 = vand.u32 %v384, 127
  %vm386 = vcmp.lt.s32.totalorder %v385, 23
  %v387 = vsel %vm386, %v381, %v383
  %v388 = vsel %vm386, %v379, %v381
  %v389 = vsel %vm386, %v377, %v379
  %v390 = vsel %vm386, %v375, %v377
  %v391 = vsel %vm386, %v373, %v375
  %v392 = vsel %vm386, %v371, %v373
  %v393 = vsel %vm386, %v369, %v371
  %v394 = vsel %vm386, %v383, %v369
  %v395 = vld [vmem:[%s9] sm:$0xff]
  %397 = vset.pattern.permute.xlu0 0
  %398 = vperm.xlu0 %397, %v395
  %v399 = vpop.permute.xlu0 %398
  %v401 = vmul.f32 %v394, %v399
  %v402 = vmul.f32 %v393, %v399
  %v403 = vmul.f32 %v392, %v399
  %v404 = vmul.f32 %v391, %v399
  %v405 = vmul.f32 %v390, %v399
  %v406 = vmul.f32 %v389, %v399
  %v407 = vmul.f32 %v388, %v399
  %v408 = vmul.f32 %v387, %v399
  %v409 = vadd.f32 %v401, 0.0
  %v410 = vadd.f32 %v402, 0.0
  %v411 = vadd.f32 %v403, 0.0
  %v412 = vadd.f32 %v404, 0.0
  %v413 = vadd.f32 %v405, 0.0
  %v414 = vadd.f32 %v406, 0.0
  %v415 = vadd.f32 %v407, 0.0
  %v416 = vadd.f32 %v408, 0.0
  %417 = vrot.lane.b32.xlu0 %v86, 22
  %v418 = vpop.permute.xlu0 %417
  %419 = vrot.lane.b32.xlu0 %v87, 22
  %v420 = vpop.permute.xlu0 %419
  %421 = vrot.lane.b32.xlu0 %v88, 22
  %v422 = vpop.permute.xlu0 %421
  %423 = vrot.lane.b32.xlu0 %v89, 22
  %v424 = vpop.permute.xlu0 %423
  %425 = vrot.lane.b32.xlu0 %v90, 22
  %v426 = vpop.permute.xlu0 %425
  %427 = vrot.lane.b32.xlu0 %v91, 22
  %v428 = vpop.permute.xlu0 %427
  %429 = vrot.lane.b32.xlu0 %v92, 22
  %v430 = vpop.permute.xlu0 %429
  %431 = vrot.lane.b32.xlu0 %v93, 22
  %v432 = vpop.permute.xlu0 %431
  %vm433 = vcmp.lt.s32.totalorder %v385, 22
  %v434 = vsel %vm433, %v430, %v432
  %v435 = vsel %vm433, %v428, %v430
  %v436 = vsel %vm433, %v426, %v428
  %v437 = vsel %vm433, %v424, %v426
  %v438 = vsel %vm433, %v422, %v424
  %v439 = vsel %vm433, %v420, %v422
  %v440 = vsel %vm433, %v418, %v420
  %v441 = vsel %vm433, %v432, %v418
  %s442 = scalar_lea.vmem %s9, 8
  %v443 = vld [vmem:[%s442] sm:$0xff]
  %445 = vset.pattern.permute.xlu0 0
  %446 = vperm.xlu0 %445, %v443
  %v447 = vpop.permute.xlu0 %446
  %v449 = vmul.f32 %v441, %v447
  %v450 = vmul.f32 %v440, %v447
  %v451 = vmul.f32 %v439, %v447
  %v452 = vmul.f32 %v438, %v447
  %v453 = vmul.f32 %v437, %v447
  %v454 = vmul.f32 %v436, %v447
  %v455 = vmul.f32 %v435, %v447
  %v456 = vmul.f32 %v434, %v447
  %v457 = vadd.f32 %v409, %v449
  %v458 = vadd.f32 %v410, %v450
  %v459 = vadd.f32 %v411, %v451
  %v460 = vadd.f32 %v412, %v452
  %v461 = vadd.f32 %v413, %v453
  %v462 = vadd.f32 %v414, %v454
  %v463 = vadd.f32 %v415, %v455
  %v464 = vadd.f32 %v416, %v456
  %465 = vrot.lane.b32.xlu0 %v86, 21
  %v466 = vpop.permute.xlu0 %465
  %467 = vrot.lane.b32.xlu0 %v87, 21
  %v468 = vpop.permute.xlu0 %467
  %469 = vrot.lane.b32.xlu0 %v88, 21
  %v470 = vpop.permute.xlu0 %469
  %471 = vrot.lane.b32.xlu0 %v89, 21
  %v472 = vpop.permute.xlu0 %471
  %473 = vrot.lane.b32.xlu0 %v90, 21
  %v474 = vpop.permute.xlu0 %473
  %475 = vrot.lane.b32.xlu0 %v91, 21
  %v476 = vpop.permute.xlu0 %475
  %477 = vrot.lane.b32.xlu0 %v92, 21
  %v478 = vpop.permute.xlu0 %477
  %479 = vrot.lane.b32.xlu0 %v93, 21
  %v480 = vpop.permute.xlu0 %479
  %vm481 = vcmp.lt.s32.totalorder %v385, 21
  %v482 = vsel %vm481, %v478, %v480
  %v483 = vsel %vm481, %v476, %v478
  %v484 = vsel %vm481, %v474, %v476
  %v485 = vsel %vm481, %v472, %v474
  %v486 = vsel %vm481, %v470, %v472
  %v487 = vsel %vm481, %v468, %v470
  %v488 = vsel %vm481, %v466, %v468
  %v489 = vsel %vm481, %v480, %v466
  %s490 = scalar_lea.vmem %s9, 16
  %v491 = vld [vmem:[%s490] sm:$0xff]
  %493 = vset.pattern.permute.xlu0 0
  %494 = vperm.xlu0 %493, %v491
  %v495 = vpop.permute.xlu0 %494
  %v497 = vmul.f32 %v489, %v495
  %v498 = vmul.f32 %v488, %v495
  %v499 = vmul.f32 %v487, %v495
  %v500 = vmul.f32 %v486, %v495
  %v501 = vmul.f32 %v485, %v495
  %v502 = vmul.f32 %v484, %v495
  %v503 = vmul.f32 %v483, %v495
  %v504 = vmul.f32 %v482, %v495
  %v505 = vadd.f32 %v457, %v497
  %v506 = vadd.f32 %v458, %v498
  %v507 = vadd.f32 %v459, %v499
  %v508 = vadd.f32 %v460, %v500
  %v509 = vadd.f32 %v461, %v501
  %v510 = vadd.f32 %v462, %v502
  %v511 = vadd.f32 %v463, %v503
  %v512 = vadd.f32 %v464, %v504
  %513 = vrot.lane.b32.xlu0 %v86, 1
  %v514 = vpop.permute.xlu0 %513
  %515 = vrot.lane.b32.xlu0 %v87, 1
  %v516 = vpop.permute.xlu0 %515
  %517 = vrot.lane.b32.xlu0 %v88, 1
  %v518 = vpop.permute.xlu0 %517
  %519 = vrot.lane.b32.xlu0 %v89, 1
  %v520 = vpop.permute.xlu0 %519
  %521 = vrot.lane.b32.xlu0 %v90, 1
  %v522 = vpop.permute.xlu0 %521
  %523 = vrot.lane.b32.xlu0 %v91, 1
  %v524 = vpop.permute.xlu0 %523
  %525 = vrot.lane.b32.xlu0 %v92, 1
  %v526 = vpop.permute.xlu0 %525
  %527 = vrot.lane.b32.xlu0 %v93, 1
  %v528 = vpop.permute.xlu0 %527
  %vm529 = vcmp.lt.s32.totalorder %v385, 1
  %v530 = vsel %vm529, %v526, %v528
  %v531 = vsel %vm529, %v524, %v526
  %v532 = vsel %vm529, %v522, %v524
  %v533 = vsel %vm529, %v520, %v522
  %v534 = vsel %vm529, %v518, %v520
  %v535 = vsel %vm529, %v516, %v518
  %v536 = vsel %vm529, %v514, %v516
  %v537 = vsel %vm529, %v528, %v514
  %s538 = scalar_lea.vmem %s9, 24
  %v539 = vld [vmem:[%s538] sm:$0xff]
  %541 = vset.pattern.permute.xlu0 0
  %542 = vperm.xlu0 %541, %v539
  %v543 = vpop.permute.xlu0 %542
  %v545 = vmul.f32 %v537, %v543
  %v546 = vmul.f32 %v536, %v543
  %v547 = vmul.f32 %v535, %v543
  %v548 = vmul.f32 %v534, %v543
  %v549 = vmul.f32 %v533, %v543
  %v550 = vmul.f32 %v532, %v543
  %v551 = vmul.f32 %v531, %v543
  %v552 = vmul.f32 %v530, %v543
  %v553 = vadd.f32 %v505, %v545
  %v554 = vadd.f32 %v506, %v546
  %v555 = vadd.f32 %v507, %v547
  %v556 = vadd.f32 %v508, %v548
  %v557 = vadd.f32 %v509, %v549
  %v558 = vadd.f32 %v510, %v550
  %v559 = vadd.f32 %v511, %v551
  %v560 = vadd.f32 %v512, %v552
  %s561 = scalar_lea.vmem %s9, 32
  %v562 = vld [vmem:[%s561] sm:$0xff]
  %564 = vset.pattern.permute.xlu0 0
  %565 = vperm.xlu0 %564, %v562
  %v566 = vpop.permute.xlu0 %565
  %v568 = vmul.f32 %v86, %v566
  %v569 = vmul.f32 %v87, %v566
  %v570 = vmul.f32 %v88, %v566
  %v571 = vmul.f32 %v89, %v566
  %v572 = vmul.f32 %v90, %v566
  %v573 = vmul.f32 %v91, %v566
  %v574 = vmul.f32 %v92, %v566
  %v575 = vmul.f32 %v93, %v566
  %v576 = vadd.f32 %v553, %v568
  %v577 = vadd.f32 %v554, %v569
  %v578 = vadd.f32 %v555, %v570
  %v579 = vadd.f32 %v556, %v571
  %v580 = vadd.f32 %v557, %v572
  %v581 = vadd.f32 %v558, %v573
  %v582 = vadd.f32 %v559, %v574
  %v583 = vadd.f32 %v560, %v575
  %584 = vrot.lane.b32.xlu0 %v86, 127
  %v585 = vpop.permute.xlu0 %584
  %586 = vrot.lane.b32.xlu0 %v87, 127
  %v587 = vpop.permute.xlu0 %586
  %588 = vrot.lane.b32.xlu0 %v88, 127
  %v589 = vpop.permute.xlu0 %588
  %590 = vrot.lane.b32.xlu0 %v89, 127
  %v591 = vpop.permute.xlu0 %590
  %592 = vrot.lane.b32.xlu0 %v90, 127
  %v593 = vpop.permute.xlu0 %592
  %594 = vrot.lane.b32.xlu0 %v91, 127
  %v595 = vpop.permute.xlu0 %594
  %596 = vrot.lane.b32.xlu0 %v92, 127
  %v597 = vpop.permute.xlu0 %596
  %598 = vrot.lane.b32.xlu0 %v93, 127
  %v599 = vpop.permute.xlu0 %598
  %vm600 = vcmp.lt.s32.totalorder %v385, 127
  %v601 = vsel %vm600, %v597, %v599
  %v602 = vsel %vm600, %v595, %v597
  %v603 = vsel %vm600, %v593, %v595
  %v604 = vsel %vm600, %v591, %v593
  %v605 = vsel %vm600, %v589, %v591
  %v606 = vsel %vm600, %v587, %v589
  %v607 = vsel %vm600, %v585, %v587
  %v608 = vsel %vm600, %v599, %v585
  %s609 = scalar_lea.vmem %s9, 40
  %v610 = vld [vmem:[%s609] sm:$0xff]
  %612 = vset.pattern.permute.xlu0 0
  %613 = vperm.xlu0 %612, %v610
  %v614 = vpop.permute.xlu0 %613
  %v616 = vmul.f32 %v607, %v614
  %v617 = vmul.f32 %v606, %v614
  %v618 = vmul.f32 %v605, %v614
  %v619 = vmul.f32 %v604, %v614
  %v620 = vmul.f32 %v603, %v614
  %v621 = vmul.f32 %v602, %v614
  %v622 = vmul.f32 %v601, %v614
  %v623 = vmul.f32 %v608, %v614
  %v624 = vadd.f32 %v576, %v616
  %v625 = vadd.f32 %v577, %v617
  %v626 = vadd.f32 %v578, %v618
  %v627 = vadd.f32 %v579, %v619
  %v628 = vadd.f32 %v580, %v620
  %v629 = vadd.f32 %v581, %v621
  %v630 = vadd.f32 %v582, %v622
  %v631 = vadd.f32 %v583, %v623
  %632 = vrot.lane.b32.xlu0 %v86, 107
  %v633 = vpop.permute.xlu0 %632
  %634 = vrot.lane.b32.xlu0 %v87, 107
  %v635 = vpop.permute.xlu0 %634
  %636 = vrot.lane.b32.xlu0 %v88, 107
  %v637 = vpop.permute.xlu0 %636
  %638 = vrot.lane.b32.xlu0 %v89, 107
  %v639 = vpop.permute.xlu0 %638
  %640 = vrot.lane.b32.xlu0 %v90, 107
  %v641 = vpop.permute.xlu0 %640
  %642 = vrot.lane.b32.xlu0 %v91, 107
  %v643 = vpop.permute.xlu0 %642
  %644 = vrot.lane.b32.xlu0 %v92, 107
  %v645 = vpop.permute.xlu0 %644
  %646 = vrot.lane.b32.xlu0 %v93, 107
  %v647 = vpop.permute.xlu0 %646
  %vm648 = vcmp.lt.s32.totalorder %v385, 107
  %v649 = vsel %vm648, %v645, %v647
  %v650 = vsel %vm648, %v643, %v645
  %v651 = vsel %vm648, %v641, %v643
  %v652 = vsel %vm648, %v639, %v641
  %v653 = vsel %vm648, %v637, %v639
  %v654 = vsel %vm648, %v635, %v637
  %v655 = vsel %vm648, %v633, %v635
  %v656 = vsel %vm648, %v647, %v633
  %s657 = scalar_lea.vmem %s9, 48
  %v658 = vld [vmem:[%s657] sm:$0xff]
  %660 = vset.pattern.permute.xlu0 0
  %661 = vperm.xlu0 %660, %v658
  %v662 = vpop.permute.xlu0 %661
  %v664 = vmul.f32 %v655, %v662
  %v665 = vmul.f32 %v654, %v662
  %v666 = vmul.f32 %v653, %v662
  %v667 = vmul.f32 %v652, %v662
  %v668 = vmul.f32 %v651, %v662
  %v669 = vmul.f32 %v650, %v662
  %v670 = vmul.f32 %v649, %v662
  %v671 = vmul.f32 %v656, %v662
  %v672 = vadd.f32 %v624, %v664
  %v673 = vadd.f32 %v625, %v665
  %v674 = vadd.f32 %v626, %v666
  %v675 = vadd.f32 %v627, %v667
  %v676 = vadd.f32 %v628, %v668
  %v677 = vadd.f32 %v629, %v669
  %v678 = vadd.f32 %v630, %v670
  %v679 = vadd.f32 %v631, %v671
  %680 = vrot.lane.b32.xlu0 %v86, 106
  %v681 = vpop.permute.xlu0 %680
  %682 = vrot.lane.b32.xlu0 %v87, 106
  %v683 = vpop.permute.xlu0 %682
  %684 = vrot.lane.b32.xlu0 %v88, 106
  %v685 = vpop.permute.xlu0 %684
  %686 = vrot.lane.b32.xlu0 %v89, 106
  %v687 = vpop.permute.xlu0 %686
  %688 = vrot.lane.b32.xlu0 %v90, 106
  %v689 = vpop.permute.xlu0 %688
  %690 = vrot.lane.b32.xlu0 %v91, 106
  %v691 = vpop.permute.xlu0 %690
  %692 = vrot.lane.b32.xlu0 %v92, 106
  %v693 = vpop.permute.xlu0 %692
  %694 = vrot.lane.b32.xlu0 %v93, 106
  %v695 = vpop.permute.xlu0 %694
  %vm696 = vcmp.lt.s32.totalorder %v385, 106
  %v697 = vsel %vm696, %v693, %v695
  %v698 = vsel %vm696, %v691, %v693
  %v699 = vsel %vm696, %v689, %v691
  %v700 = vsel %vm696, %v687, %v689
  %v701 = vsel %vm696, %v685, %v687
  %v702 = vsel %vm696, %v683, %v685
  %v703 = vsel %vm696, %v681, %v683
  %v704 = vsel %vm696, %v695, %v681
  %s705 = scalar_lea.vmem %s9, 56
  %v706 = vld [vmem:[%s705] sm:$0xff]
  %708 = vset.pattern.permute.xlu0 0
  %709 = vperm.xlu0 %708, %v706
  %v710 = vpop.permute.xlu0 %709
  %v712 = vmul.f32 %v703, %v710
  %v713 = vmul.f32 %v702, %v710
  %v714 = vmul.f32 %v701, %v710
  %v715 = vmul.f32 %v700, %v710
  %v716 = vmul.f32 %v699, %v710
  %v717 = vmul.f32 %v698, %v710
  %v718 = vmul.f32 %v697, %v710
  %v719 = vmul.f32 %v704, %v710
  %v720 = vadd.f32 %v672, %v712
  %v721 = vadd.f32 %v673, %v713
  %v722 = vadd.f32 %v674, %v714
  %v723 = vadd.f32 %v675, %v715
  %v724 = vadd.f32 %v676, %v716
  %v725 = vadd.f32 %v677, %v717
  %v726 = vadd.f32 %v678, %v718
  %v727 = vadd.f32 %v679, %v719
  %728 = vrot.lane.b32.xlu0 %v86, 105
  %v729 = vpop.permute.xlu0 %728
  %730 = vrot.lane.b32.xlu0 %v87, 105
  %v731 = vpop.permute.xlu0 %730
  %732 = vrot.lane.b32.xlu0 %v88, 105
  %v733 = vpop.permute.xlu0 %732
  %734 = vrot.lane.b32.xlu0 %v89, 105
  %v735 = vpop.permute.xlu0 %734
  %736 = vrot.lane.b32.xlu0 %v90, 105
  %v737 = vpop.permute.xlu0 %736
  %738 = vrot.lane.b32.xlu0 %v91, 105
  %v739 = vpop.permute.xlu0 %738
  %740 = vrot.lane.b32.xlu0 %v92, 105
  %v741 = vpop.permute.xlu0 %740
  %742 = vrot.lane.b32.xlu0 %v93, 105
  %v743 = vpop.permute.xlu0 %742
  %vm744 = vcmp.lt.s32.totalorder %v385, 105
  %v745 = vsel %vm744, %v741, %v743
  %v746 = vsel %vm744, %v739, %v741
  %v747 = vsel %vm744, %v737, %v739
  %v748 = vsel %vm744, %v735, %v737
  %v749 = vsel %vm744, %v733, %v735
  %v750 = vsel %vm744, %v731, %v733
  %v751 = vsel %vm744, %v729, %v731
  %v752 = vsel %vm744, %v743, %v729
  %s753 = scalar_lea.vmem %s9, 64
  %v754 = vld [vmem:[%s753] sm:$0xff]
  %756 = vset.pattern.permute.xlu0 0
  %757 = vperm.xlu0 %756, %v754
  %v758 = vpop.permute.xlu0 %757
  %v760 = vmul.f32 %v751, %v758
  %v761 = vmul.f32 %v750, %v758
  %v762 = vmul.f32 %v749, %v758
  %v763 = vmul.f32 %v748, %v758
  %v764 = vmul.f32 %v747, %v758
  %v765 = vmul.f32 %v746, %v758
  %v766 = vmul.f32 %v745, %v758
  %v767 = vmul.f32 %v752, %v758
  %v768 = vadd.f32 %v720, %v760
  %v769 = vadd.f32 %v721, %v761
  %v770 = vadd.f32 %v722, %v762
  %v771 = vadd.f32 %v723, %v763
  %v772 = vadd.f32 %v724, %v764
  %v773 = vadd.f32 %v725, %v765
  %v774 = vadd.f32 %v726, %v766
  %v775 = vadd.f32 %v727, %v767
  %v776 = vld [vmem:[%s2] sm:$0xff]
  %v777 = vld [vmem:[%s10] sm:$0xff]
  %779 = vset.pattern.permute.xlu0 0
  %780 = vperm.xlu0 %779, %v777
  %v781 = vpop.permute.xlu0 %780
  %v783 = vadd.f32 %v768, %v781
  %v784 = vadd.f32 %v769, %v781
  %v785 = vadd.f32 %v770, %v781
  %v786 = vadd.f32 %v771, %v781
  %v787 = vadd.f32 %v772, %v781
  %v788 = vadd.f32 %v773, %v781
  %v789 = vadd.f32 %v774, %v781
  %v790 = vadd.f32 %v775, %v781
  %v791 = vld [vmem:[%s11] sm:$0xff]
  %v792 = vld [vmem:[%s12] sm:$0xff]
  %794 = vset.pattern.permute.xlu0 0
  %795 = vperm.xlu0 %794, %v791
  %v796 = vpop.permute.xlu0 %795
  %v798 = vmul.f32 %v796, %v783
  %v799 = vmul.f32 %v796, %v784
  %v800 = vmul.f32 %v796, %v785
  %v801 = vmul.f32 %v796, %v786
  %v802 = vmul.f32 %v796, %v787
  %v803 = vmul.f32 %v796, %v788
  %v804 = vmul.f32 %v796, %v789
  %v805 = vmul.f32 %v796, %v790
  %v806 = vmul.f32 %v783, 0.70710677
  %v807 = vmul.f32 %v784, 0.70710677
  %v808 = vmul.f32 %v785, 0.70710677
  %v809 = vmul.f32 %v786, 0.70710677
  %v810 = vmul.f32 %v787, 0.70710677
  %v811 = vmul.f32 %v788, 0.70710677
  %v812 = vmul.f32 %v789, 0.70710677
  %v813 = vmul.f32 %v790, 0.70710677
  %vm814 = vcmp.ge.f32.partialorder %v806, 0.0
  %vm815 = vcmp.ge.f32.partialorder %v807, 0.0
  %vm816 = vcmp.ge.f32.partialorder %v808, 0.0
  %vm817 = vcmp.ge.f32.partialorder %v809, 0.0
  %vm818 = vcmp.ge.f32.partialorder %v810, 0.0
  %vm819 = vcmp.ge.f32.partialorder %v811, 0.0
  %vm820 = vcmp.ge.f32.partialorder %v812, 0.0
  %vm821 = vcmp.ge.f32.partialorder %v813, 0.0
  %v822 = vsel %vm814, 1.0, -1.0
  %v823 = vsel %vm815, 1.0, -1.0
  %v824 = vsel %vm816, 1.0, -1.0
  %v825 = vsel %vm817, 1.0, -1.0
  %v826 = vsel %vm818, 1.0, -1.0
  %v827 = vsel %vm819, 1.0, -1.0
  %v828 = vsel %vm820, 1.0, -1.0
  %v829 = vsel %vm821, 1.0, -1.0
  %v830 = vand.u32 2147483647, %v806
  %v831 = vand.u32 2147483647, %v807
  %v832 = vand.u32 2147483647, %v808
  %v833 = vand.u32 2147483647, %v809
  %v834 = vand.u32 2147483647, %v810
  %v835 = vand.u32 2147483647, %v811
  %v836 = vand.u32 2147483647, %v812
  %v837 = vand.u32 2147483647, %v813
  %v838 = vmul.f32 %v830, 0.3275911
  %v839 = vmul.f32 %v831, 0.3275911
  %v840 = vmul.f32 %v832, 0.3275911
  %v841 = vmul.f32 %v833, 0.3275911
  %v842 = vmul.f32 %v834, 0.3275911
  %v843 = vmul.f32 %v835, 0.3275911
  %v844 = vmul.f32 %v836, 0.3275911
  %v845 = vmul.f32 %v837, 0.3275911
  %v846 = vadd.f32 %v838, 1.0
  %v847 = vadd.f32 %v839, 1.0
  %v848 = vadd.f32 %v840, 1.0
  %v849 = vadd.f32 %v841, 1.0
  %v850 = vadd.f32 %v842, 1.0
  %v851 = vadd.f32 %v843, 1.0
  %v852 = vadd.f32 %v844, 1.0
  %v853 = vadd.f32 %v845, 1.0
  %v854 = vrcp.pop %v846
  %v855 = vmul.f32 %v846, %v854
  %v856 = vsub.f32 1.0, %v855
  %v857 = vmul.f32 %v854, %v856
  %v858 = vadd.f32 %v854, %v857
  %vm859 = vweird.f32 %v846
  %vm860 = vweird.f32 %v854
  %vm861 = vmor %vm859, %vm860
  %v862 = vsel %vm861, %v854, %v858
  %v863 = vand.u32 2147483647, %v846
  %vm864 = vcmp.eq.f32.partialorder %v863, 8.507059e+37
  %v865 = vand.u32 %v846, 2147483648
  %v866 = vor.u32 1.1754944e-38, %v865
  %v867 = vsel %vm864, %v866, %v862
  %v868 = vmul.f32 1.0, %v867
  %v869 = vrcp.pop %v847
  %v870 = vmul.f32 %v847, %v869
  %v871 = vsub.f32 1.0, %v870
  %v872 = vmul.f32 %v869, %v871
  %v873 = vadd.f32 %v869, %v872
  %vm874 = vweird.f32 %v847
  %vm875 = vweird.f32 %v869
  %vm876 = vmor %vm874, %vm875
  %v877 = vsel %vm876, %v869, %v873
  %v878 = vand.u32 2147483647, %v847
  %vm879 = vcmp.eq.f32.partialorder %v878, 8.507059e+37
  %v880 = vand.u32 %v847, 2147483648
  %v881 = vor.u32 1.1754944e-38, %v880
  %v882 = vsel %vm879, %v881, %v877
  %v883 = vmul.f32 1.0, %v882
  %v884 = vrcp.pop %v848
  %v885 = vmul.f32 %v848, %v884
  %v886 = vsub.f32 1.0, %v885
  %v887 = vmul.f32 %v884, %v886
  %v888 = vadd.f32 %v884, %v887
  %vm889 = vweird.f32 %v848
  %vm890 = vweird.f32 %v884
  %vm891 = vmor %vm889, %vm890
  %v892 = vsel %vm891, %v884, %v888
  %v893 = vand.u32 2147483647, %v848
  %vm894 = vcmp.eq.f32.partialorder %v893, 8.507059e+37
  %v895 = vand.u32 %v848, 2147483648
  %v896 = vor.u32 1.1754944e-38, %v895
  %v897 = vsel %vm894, %v896, %v892
  %v898 = vmul.f32 1.0, %v897
  %v899 = vrcp.pop %v849
  %v900 = vmul.f32 %v849, %v899
  %v901 = vsub.f32 1.0, %v900
  %v902 = vmul.f32 %v899, %v901
  %v903 = vadd.f32 %v899, %v902
  %vm904 = vweird.f32 %v849
  %vm905 = vweird.f32 %v899
  %vm906 = vmor %vm904, %vm905
  %v907 = vsel %vm906, %v899, %v903
  %v908 = vand.u32 2147483647, %v849
  %vm909 = vcmp.eq.f32.partialorder %v908, 8.507059e+37
  %v910 = vand.u32 %v849, 2147483648
  %v911 = vor.u32 1.1754944e-38, %v910
  %v912 = vsel %vm909, %v911, %v907
  %v913 = vmul.f32 1.0, %v912
  %v914 = vrcp.pop %v850
  %v915 = vmul.f32 %v850, %v914
  %v916 = vsub.f32 1.0, %v915
  %v917 = vmul.f32 %v914, %v916
  %v918 = vadd.f32 %v914, %v917
  %vm919 = vweird.f32 %v850
  %vm920 = vweird.f32 %v914
  %vm921 = vmor %vm919, %vm920
  %v922 = vsel %vm921, %v914, %v918
  %v923 = vand.u32 2147483647, %v850
  %vm924 = vcmp.eq.f32.partialorder %v923, 8.507059e+37
  %v925 = vand.u32 %v850, 2147483648
  %v926 = vor.u32 1.1754944e-38, %v925
  %v927 = vsel %vm924, %v926, %v922
  %v928 = vmul.f32 1.0, %v927
  %v929 = vrcp.pop %v851
  %v930 = vmul.f32 %v851, %v929
  %v931 = vsub.f32 1.0, %v930
  %v932 = vmul.f32 %v929, %v931
  %v933 = vadd.f32 %v929, %v932
  %vm934 = vweird.f32 %v851
  %vm935 = vweird.f32 %v929
  %vm936 = vmor %vm934, %vm935
  %v937 = vsel %vm936, %v929, %v933
  %v938 = vand.u32 2147483647, %v851
  %vm939 = vcmp.eq.f32.partialorder %v938, 8.507059e+37
  %v940 = vand.u32 %v851, 2147483648
  %v941 = vor.u32 1.1754944e-38, %v940
  %v942 = vsel %vm939, %v941, %v937
  %v943 = vmul.f32 1.0, %v942
  %v944 = vrcp.pop %v852
  %v945 = vmul.f32 %v852, %v944
  %v946 = vsub.f32 1.0, %v945
  %v947 = vmul.f32 %v944, %v946
  %v948 = vadd.f32 %v944, %v947
  %vm949 = vweird.f32 %v852
  %vm950 = vweird.f32 %v944
  %vm951 = vmor %vm949, %vm950
  %v952 = vsel %vm951, %v944, %v948
  %v953 = vand.u32 2147483647, %v852
  %vm954 = vcmp.eq.f32.partialorder %v953, 8.507059e+37
  %v955 = vand.u32 %v852, 2147483648
  %v956 = vor.u32 1.1754944e-38, %v955
  %v957 = vsel %vm954, %v956, %v952
  %v958 = vmul.f32 1.0, %v957
  %v959 = vrcp.pop %v853
  %v960 = vmul.f32 %v853, %v959
  %v961 = vsub.f32 1.0, %v960
  %v962 = vmul.f32 %v959, %v961
  %v963 = vadd.f32 %v959, %v962
  %vm964 = vweird.f32 %v853
  %vm965 = vweird.f32 %v959
  %vm966 = vmor %vm964, %vm965
  %v967 = vsel %vm966, %v959, %v963
  %v968 = vand.u32 2147483647, %v853
  %vm969 = vcmp.eq.f32.partialorder %v968, 8.507059e+37
  %v970 = vand.u32 %v853, 2147483648
  %v971 = vor.u32 1.1754944e-38, %v970
  %v972 = vsel %vm969, %v971, %v967
  %v973 = vmul.f32 1.0, %v972
  %v974 = vmul.f32 %v868, 1.0614054
  %v975 = vmul.f32 %v883, 1.0614054
  %v976 = vmul.f32 %v898, 1.0614054
  %v977 = vmul.f32 %v913, 1.0614054
  %v978 = vmul.f32 %v928, 1.0614054
  %v979 = vmul.f32 %v943, 1.0614054
  %v980 = vmul.f32 %v958, 1.0614054
  %v981 = vmul.f32 %v973, 1.0614054
  %v982 = vadd.f32 %v974, -1.4531521
  %v983 = vadd.f32 %v975, -1.4531521
  %v984 = vadd.f32 %v976, -1.4531521
  %v985 = vadd.f32 %v977, -1.4531521
  %v986 = vadd.f32 %v978, -1.4531521
  %v987 = vadd.f32 %v979, -1.4531521
  %v988 = vadd.f32 %v980, -1.4531521
  %v989 = vadd.f32 %v981, -1.4531521
  %v990 = vmul.f32 %v982, %v868
  %v991 = vmul.f32 %v983, %v883
  %v992 = vmul.f32 %v984, %v898
  %v993 = vmul.f32 %v985, %v913
  %v994 = vmul.f32 %v986, %v928
  %v995 = vmul.f32 %v987, %v943
  %v996 = vmul.f32 %v988, %v958
  %v997 = vmul.f32 %v989, %v973
  %v998 = vadd.f32 %v990, 1.4214138
  %v999 = vadd.f32 %v991, 1.4214138
  %v1000 = vadd.f32 %v992, 1.4214138
  %v1001 = vadd.f32 %v993, 1.4214138
  %v1002 = vadd.f32 %v994, 1.4214138
  %v1003 = vadd.f32 %v995, 1.4214138
  %v1004 = vadd.f32 %v996, 1.4214138
  %v1005 = vadd.f32 %v997, 1.4214138
  %v1006 = vmul.f32 %v998, %v868
  %v1007 = vmul.f32 %v999, %v883
  %v1008 = vmul.f32 %v1000, %v898
  %v1009 = vmul.f32 %v1001, %v913
  %v1010 = vmul.f32 %v1002, %v928
  %v1011 = vmul.f32 %v1003, %v943
  %v1012 = vmul.f32 %v1004, %v958
  %v1013 = vmul.f32 %v1005, %v973
  %v1014 = vadd.f32 %v1006, -0.28449672
  %v1015 = vadd.f32 %v1007, -0.28449672
  %v1016 = vadd.f32 %v1008, -0.28449672
  %v1017 = vadd.f32 %v1009, -0.28449672
  %v1018 = vadd.f32 %v1010, -0.28449672
  %v1019 = vadd.f32 %v1011, -0.28449672
  %v1020 = vadd.f32 %v1012, -0.28449672
  %v1021 = vadd.f32 %v1013, -0.28449672
  %v1022 = vmul.f32 %v1014, %v868
  %v1023 = vmul.f32 %v1015, %v883
  %v1024 = vmul.f32 %v1016, %v898
  %v1025 = vmul.f32 %v1017, %v913
  %v1026 = vmul.f32 %v1018, %v928
  %v1027 = vmul.f32 %v1019, %v943
  %v1028 = vmul.f32 %v1020, %v958
  %v1029 = vmul.f32 %v1021, %v973
  %v1030 = vadd.f32 %v1022, 0.2548296
  %v1031 = vadd.f32 %v1023, 0.2548296
  %v1032 = vadd.f32 %v1024, 0.2548296
  %v1033 = vadd.f32 %v1025, 0.2548296
  %v1034 = vadd.f32 %v1026, 0.2548296
  %v1035 = vadd.f32 %v1027, 0.2548296
  %v1036 = vadd.f32 %v1028, 0.2548296
  %v1037 = vadd.f32 %v1029, 0.2548296
  %v1038 = vmul.f32 %v1030, %v868
  %v1039 = vmul.f32 %v1031, %v883
  %v1040 = vmul.f32 %v1032, %v898
  %v1041 = vmul.f32 %v1033, %v913
  %v1042 = vmul.f32 %v1034, %v928
  %v1043 = vmul.f32 %v1035, %v943
  %v1044 = vmul.f32 %v1036, %v958
  %v1045 = vmul.f32 %v1037, %v973
  %v1046 = vsub.f32 0.0, %v830
  %v1047 = vsub.f32 0.0, %v831
  %v1048 = vsub.f32 0.0, %v832
  %v1049 = vsub.f32 0.0, %v833
  %v1050 = vsub.f32 0.0, %v834
  %v1051 = vsub.f32 0.0, %v835
  %v1052 = vsub.f32 0.0, %v836
  %v1053 = vsub.f32 0.0, %v837
  %v1054 = vmul.f32 %v1046, %v830
  %v1055 = vmul.f32 %v1047, %v831
  %v1056 = vmul.f32 %v1048, %v832
  %v1057 = vmul.f32 %v1049, %v833
  %v1058 = vmul.f32 %v1050, %v834
  %v1059 = vmul.f32 %v1051, %v835
  %v1060 = vmul.f32 %v1052, %v836
  %v1061 = vmul.f32 %v1053, %v837
  %v1062 = vmul.f32 %v1054, 1.442695
  %v1063 = vpow.pop %v1062
  %v1064 = vmul.f32 %v1055, 1.442695
  %v1065 = vpow.pop %v1064
  %v1066 = vmul.f32 %v1056, 1.442695
  %v1067 = vpow.pop %v1066
  %v1068 = vmul.f32 %v1057, 1.442695
  %v1069 = vpow.pop %v1068
  %v1070 = vmul.f32 %v1058, 1.442695
  %v1071 = vpow.pop %v1070
  %v1072 = vmul.f32 %v1059, 1.442695
  %v1073 = vpow.pop %v1072
  %v1074 = vmul.f32 %v1060, 1.442695
  %v1075 = vpow.pop %v1074
  %v1076 = vmul.f32 %v1061, 1.442695
  %v1077 = vpow.pop %v1076
  %v1078 = vmul.f32 %v1038, %v1063
  %v1079 = vmul.f32 %v1039, %v1065
  %v1080 = vmul.f32 %v1040, %v1067
  %v1081 = vmul.f32 %v1041, %v1069
  %v1082 = vmul.f32 %v1042, %v1071
  %v1083 = vmul.f32 %v1043, %v1073
  %v1084 = vmul.f32 %v1044, %v1075
  %v1085 = vmul.f32 %v1045, %v1077
  %v1086 = vsub.f32 1.0, %v1078
  %v1087 = vsub.f32 1.0, %v1079
  %v1088 = vsub.f32 1.0, %v1080
  %v1089 = vsub.f32 1.0, %v1081
  %v1090 = vsub.f32 1.0, %v1082
  %v1091 = vsub.f32 1.0, %v1083
  %v1092 = vsub.f32 1.0, %v1084
  %v1093 = vsub.f32 1.0, %v1085
  %v1094 = vmul.f32 %v822, %v1086
  %v1095 = vmul.f32 %v823, %v1087
  %v1096 = vmul.f32 %v824, %v1088
  %v1097 = vmul.f32 %v825, %v1089
  %v1098 = vmul.f32 %v826, %v1090
  %v1099 = vmul.f32 %v827, %v1091
  %v1100 = vmul.f32 %v828, %v1092
  %v1101 = vmul.f32 %v829, %v1093
  %v1102 = vadd.f32 %v1094, 1.0
  %v1103 = vadd.f32 %v1095, 1.0
  %v1104 = vadd.f32 %v1096, 1.0
  %v1105 = vadd.f32 %v1097, 1.0
  %v1106 = vadd.f32 %v1098, 1.0
  %v1107 = vadd.f32 %v1099, 1.0
  %v1108 = vadd.f32 %v1100, 1.0
  %v1109 = vadd.f32 %v1101, 1.0
  %v1110 = vmul.f32 %v798, %v1102
  %v1111 = vmul.f32 %v799, %v1103
  %v1112 = vmul.f32 %v800, %v1104
  %v1113 = vmul.f32 %v801, %v1105
  %v1114 = vmul.f32 %v802, %v1106
  %v1115 = vmul.f32 %v803, %v1107
  %v1116 = vmul.f32 %v804, %v1108
  %v1117 = vmul.f32 %v805, %v1109
  %1119 = vset.pattern.permute.xlu0 0
  %1120 = vperm.xlu0 %1119, %v792
  %v1121 = vpop.permute.xlu0 %1120
  %v1123 = vadd.f32 %v1110, %v1121
  %v1124 = vadd.f32 %v1111, %v1121
  %v1125 = vadd.f32 %v1112, %v1121
  %v1126 = vadd.f32 %v1113, %v1121
  %v1127 = vadd.f32 %v1114, %v1121
  %v1128 = vadd.f32 %v1115, %v1121
  %v1129 = vadd.f32 %v1116, %v1121
  %v1130 = vadd.f32 %v1117, %v1121
  %v1132 = vperm.slane %v776, 0
  %v1133 = vperm.slane %v776, 1
  %v1134 = vperm.slane %v776, 2
  %v1135 = vperm.slane %v776, 3
  %v1136 = vperm.slane %v776, 4
  %v1137 = vperm.slane %v776, 5
  %v1138 = vperm.slane %v776, 6
  %v1139 = vperm.slane %v776, 7
  %v1148 = vmul.f32 %v1132, %v1123
  %v1149 = vmul.f32 %v1133, %v1124
  %v1150 = vmul.f32 %v1134, %v1125
  %v1151 = vmul.f32 %v1135, %v1126
  %v1152 = vmul.f32 %v1136, %v1127
  %v1153 = vmul.f32 %v1137, %v1128
  %v1154 = vmul.f32 %v1138, %v1129
  %v1155 = vmul.f32 %v1139, %v1130
  %v1156 = vld [vmem:[%s13] sm:$0xff]
  %v1157 = vld [vmem:[%s13 + $0x8] sm:$0xf]
  %v1158 = vld [vmem:[%s14] sm:$0xff]
  %v1159 = vld [vmem:[%s14 + $0x8] sm:$0xf]
  %1161 = vset.pattern.permute.xlu0 0
  %1162 = vperm.xlu0 %1161, %v1158
  %v1163 = vpop.permute.xlu0 %1162
  %1166 = vset.pattern.permute.xlu0 0
  %1167 = vperm.xlu0 %1166, %v1159
  %v1168 = vpop.permute.xlu0 %1167
  %v1171 = vsel %vm132, %v1156, 0
  %v1174 = vsel %vm132, %v1157, 0
  %1176 = vmatpush.msra.mxu0 0.0
  %1177 = vmatpush.msra.mxu0 0.0
  %1178 = vmatpush.msra.mxu0 0.0
  %1179 = vmatpush.msra.mxu0 0.0
  %1180 = vmatpush.msra.mxu0 0.0
  %1181 = vmatpush.msra.mxu0 0.0
  %1182 = vmatpush.msra.mxu0 0.0
  %1183 = vmatpush.msra.mxu0 0.0
  %1184 = vmatpush.msra.mxu0 0.0
  %1185 = vmatpush.msra.mxu0 0.0
  %1186 = vmatpush.msra.mxu0 0.0
  %1187 = vmatpush.msra.mxu0 0.0
  %1188 = vmatpush.msra.mxu0 0.0
  %1189 = vmatpush.msra.mxu0 0.0
  %1190 = vmatpush.msra.mxu0 0.0
  %1191 = vmatpush.msra.mxu0 %v360
  %1192 = vmatmul.f32.gmra.mxu0 %v1171
  %v1193 = vpop.f32.mrf.mxu0
  %v1194 = vadd.f32 %v1163, %v1193
  %1195 = vmatmul.f32.gmra.mxu0 %v1174
  %v1196 = vpop.f32.mrf.mxu0
  %v1197 = vadd.f32 %v1168, %v1196
  %1198 = vdwg.mxu0
  %1199 = vmatpush.msra.mxu0 0.0
  %1200 = vmatpush.msra.mxu0 0.0
  %1201 = vmatpush.msra.mxu0 0.0
  %1202 = vmatpush.msra.mxu0 0.0
  %1203 = vmatpush.msra.mxu0 0.0
  %1204 = vmatpush.msra.mxu0 0.0
  %1205 = vmatpush.msra.mxu0 0.0
  %1206 = vmatpush.msra.mxu0 0.0
  %1207 = vmatpush.msra.mxu0 0.0
  %1208 = vmatpush.msra.mxu0 0.0
  %1209 = vmatpush.msra.mxu0 0.0
  %1210 = vmatpush.msra.mxu0 0.0
  %1211 = vmatpush.msra.mxu0 0.0
  %1212 = vmatpush.msra.mxu0 0.0
  %1213 = vmatpush.msra.mxu0 0.0
  %1214 = vmatpush.msra.mxu0 %v361
  %1215 = vmatmul.f32.gmra.mxu0 %v1171
  %v1216 = vpop.f32.mrf.mxu0
  %v1217 = vadd.f32 %v1163, %v1216
  %1218 = vmatmul.f32.gmra.mxu0 %v1174
  %v1219 = vpop.f32.mrf.mxu0
  %v1220 = vadd.f32 %v1168, %v1219
  %1221 = vdwg.mxu0
  %1222 = vmatpush.msra.mxu0 0.0
  %1223 = vmatpush.msra.mxu0 0.0
  %1224 = vmatpush.msra.mxu0 0.0
  %1225 = vmatpush.msra.mxu0 0.0
  %1226 = vmatpush.msra.mxu0 0.0
  %1227 = vmatpush.msra.mxu0 0.0
  %1228 = vmatpush.msra.mxu0 0.0
  %1229 = vmatpush.msra.mxu0 0.0
  %1230 = vmatpush.msra.mxu0 0.0
  %1231 = vmatpush.msra.mxu0 0.0
  %1232 = vmatpush.msra.mxu0 0.0
  %1233 = vmatpush.msra.mxu0 0.0
  %1234 = vmatpush.msra.mxu0 0.0
  %1235 = vmatpush.msra.mxu0 0.0
  %1236 = vmatpush.msra.mxu0 0.0
  %1237 = vmatpush.msra.mxu0 %v362
  %1238 = vmatmul.f32.gmra.mxu0 %v1171
  %v1239 = vpop.f32.mrf.mxu0
  %v1240 = vadd.f32 %v1163, %v1239
  %1241 = vmatmul.f32.gmra.mxu0 %v1174
  %v1242 = vpop.f32.mrf.mxu0
  %v1243 = vadd.f32 %v1168, %v1242
  %1244 = vdwg.mxu0
  %1245 = vmatpush.msra.mxu0 0.0
  %1246 = vmatpush.msra.mxu0 0.0
  %1247 = vmatpush.msra.mxu0 0.0
  %1248 = vmatpush.msra.mxu0 0.0
  %1249 = vmatpush.msra.mxu0 0.0
  %1250 = vmatpush.msra.mxu0 0.0
  %1251 = vmatpush.msra.mxu0 0.0
  %1252 = vmatpush.msra.mxu0 0.0
  %1253 = vmatpush.msra.mxu0 0.0
  %1254 = vmatpush.msra.mxu0 0.0
  %1255 = vmatpush.msra.mxu0 0.0
  %1256 = vmatpush.msra.mxu0 0.0
  %1257 = vmatpush.msra.mxu0 0.0
  %1258 = vmatpush.msra.mxu0 0.0
  %1259 = vmatpush.msra.mxu0 0.0
  %1260 = vmatpush.msra.mxu0 %v363
  %1261 = vmatmul.f32.gmra.mxu0 %v1171
  %v1262 = vpop.f32.mrf.mxu0
  %v1263 = vadd.f32 %v1163, %v1262
  %1264 = vmatmul.f32.gmra.mxu0 %v1174
  %v1265 = vpop.f32.mrf.mxu0
  %v1266 = vadd.f32 %v1168, %v1265
  %1267 = vdwg.mxu0
  %1268 = vmatpush.msra.mxu0 0.0
  %1269 = vmatpush.msra.mxu0 0.0
  %1270 = vmatpush.msra.mxu0 0.0
  %1271 = vmatpush.msra.mxu0 0.0
  %1272 = vmatpush.msra.mxu0 0.0
  %1273 = vmatpush.msra.mxu0 0.0
  %1274 = vmatpush.msra.mxu0 0.0
  %1275 = vmatpush.msra.mxu0 0.0
  %1276 = vmatpush.msra.mxu0 0.0
  %1277 = vmatpush.msra.mxu0 0.0
  %1278 = vmatpush.msra.mxu0 0.0
  %1279 = vmatpush.msra.mxu0 0.0
  %1280 = vmatpush.msra.mxu0 0.0
  %1281 = vmatpush.msra.mxu0 0.0
  %1282 = vmatpush.msra.mxu0 0.0
  %1283 = vmatpush.msra.mxu0 %v364
  %1284 = vmatmul.f32.gmra.mxu0 %v1171
  %v1285 = vpop.f32.mrf.mxu0
  %v1286 = vadd.f32 %v1163, %v1285
  %1287 = vmatmul.f32.gmra.mxu0 %v1174
  %v1288 = vpop.f32.mrf.mxu0
  %v1289 = vadd.f32 %v1168, %v1288
  %1290 = vdwg.mxu0
  %1291 = vmatpush.msra.mxu0 0.0
  %1292 = vmatpush.msra.mxu0 0.0
  %1293 = vmatpush.msra.mxu0 0.0
  %1294 = vmatpush.msra.mxu0 0.0
  %1295 = vmatpush.msra.mxu0 0.0
  %1296 = vmatpush.msra.mxu0 0.0
  %1297 = vmatpush.msra.mxu0 0.0
  %1298 = vmatpush.msra.mxu0 0.0
  %1299 = vmatpush.msra.mxu0 0.0
  %1300 = vmatpush.msra.mxu0 0.0
  %1301 = vmatpush.msra.mxu0 0.0
  %1302 = vmatpush.msra.mxu0 0.0
  %1303 = vmatpush.msra.mxu0 0.0
  %1304 = vmatpush.msra.mxu0 0.0
  %1305 = vmatpush.msra.mxu0 0.0
  %1306 = vmatpush.msra.mxu0 %v365
  %1307 = vmatmul.f32.gmra.mxu0 %v1171
  %v1308 = vpop.f32.mrf.mxu0
  %v1309 = vadd.f32 %v1163, %v1308
  %1310 = vmatmul.f32.gmra.mxu0 %v1174
  %v1311 = vpop.f32.mrf.mxu0
  %v1312 = vadd.f32 %v1168, %v1311
  %1313 = vdwg.mxu0
  %1314 = vmatpush.msra.mxu0 0.0
  %1315 = vmatpush.msra.mxu0 0.0
  %1316 = vmatpush.msra.mxu0 0.0
  %1317 = vmatpush.msra.mxu0 0.0
  %1318 = vmatpush.msra.mxu0 0.0
  %1319 = vmatpush.msra.mxu0 0.0
  %1320 = vmatpush.msra.mxu0 0.0
  %1321 = vmatpush.msra.mxu0 0.0
  %1322 = vmatpush.msra.mxu0 0.0
  %1323 = vmatpush.msra.mxu0 0.0
  %1324 = vmatpush.msra.mxu0 0.0
  %1325 = vmatpush.msra.mxu0 0.0
  %1326 = vmatpush.msra.mxu0 0.0
  %1327 = vmatpush.msra.mxu0 0.0
  %1328 = vmatpush.msra.mxu0 0.0
  %1329 = vmatpush.msra.mxu0 %v366
  %1330 = vmatmul.f32.gmra.mxu0 %v1171
  %v1331 = vpop.f32.mrf.mxu0
  %v1332 = vadd.f32 %v1163, %v1331
  %1333 = vmatmul.f32.gmra.mxu0 %v1174
  %v1334 = vpop.f32.mrf.mxu0
  %v1335 = vadd.f32 %v1168, %v1334
  %1336 = vdwg.mxu0
  %1337 = vmatpush.msra.mxu0 0.0
  %1338 = vmatpush.msra.mxu0 0.0
  %1339 = vmatpush.msra.mxu0 0.0
  %1340 = vmatpush.msra.mxu0 0.0
  %1341 = vmatpush.msra.mxu0 0.0
  %1342 = vmatpush.msra.mxu0 0.0
  %1343 = vmatpush.msra.mxu0 0.0
  %1344 = vmatpush.msra.mxu0 0.0
  %1345 = vmatpush.msra.mxu0 0.0
  %1346 = vmatpush.msra.mxu0 0.0
  %1347 = vmatpush.msra.mxu0 0.0
  %1348 = vmatpush.msra.mxu0 0.0
  %1349 = vmatpush.msra.mxu0 0.0
  %1350 = vmatpush.msra.mxu0 0.0
  %1351 = vmatpush.msra.mxu0 0.0
  %1352 = vmatpush.msra.mxu0 %v367
  %1353 = vmatmul.f32.gmra.mxu0 %v1171
  %v1354 = vpop.f32.mrf.mxu0
  %v1355 = vadd.f32 %v1163, %v1354
  %1356 = vmatmul.f32.gmra.mxu0 %v1174
  %v1357 = vpop.f32.mrf.mxu0
  %v1358 = vadd.f32 %v1168, %v1357
  %1359 = vdwg.mxu0
  %v1360 = vld [vmem:[%s15] sm:$0xff]
  %v1361 = vld [vmem:[%s15 + $0x8] sm:$0xf]
  %v1362 = vld [vmem:[%s16] sm:$0xff]
  %v1363 = vld [vmem:[%s16 + $0x8] sm:$0xf]
  %1365 = vset.pattern.permute.xlu0 0
  %1366 = vperm.xlu0 %1365, %v1362
  %v1367 = vpop.permute.xlu0 %1366
  %1370 = vset.pattern.permute.xlu0 0
  %1371 = vperm.xlu0 %1370, %v1363
  %v1372 = vpop.permute.xlu0 %1371
  %v1375 = vsel %vm132, %v1360, 0
  %v1378 = vsel %vm132, %v1361, 0
  %1380 = vmatpush.msra.mxu0 0.0
  %1381 = vmatpush.msra.mxu0 0.0
  %1382 = vmatpush.msra.mxu0 0.0
  %1383 = vmatpush.msra.mxu0 0.0
  %1384 = vmatpush.msra.mxu0 0.0
  %1385 = vmatpush.msra.mxu0 0.0
  %1386 = vmatpush.msra.mxu0 0.0
  %1387 = vmatpush.msra.mxu0 0.0
  %1388 = vmatpush.msra.mxu0 0.0
  %1389 = vmatpush.msra.mxu0 0.0
  %1390 = vmatpush.msra.mxu0 0.0
  %1391 = vmatpush.msra.mxu0 0.0
  %1392 = vmatpush.msra.mxu0 0.0
  %1393 = vmatpush.msra.mxu0 0.0
  %1394 = vmatpush.msra.mxu0 0.0
  %1395 = vmatpush.msra.mxu0 %v1148
  %1396 = vmatmul.f32.gmra.mxu0 %v1375
  %v1397 = vpop.f32.mrf.mxu0
  %v1398 = vadd.f32 %v1367, %v1397
  %1399 = vmatmul.f32.gmra.mxu0 %v1378
  %v1400 = vpop.f32.mrf.mxu0
  %v1401 = vadd.f32 %v1372, %v1400
  %1402 = vdwg.mxu0
  %1403 = vmatpush.msra.mxu0 0.0
  %1404 = vmatpush.msra.mxu0 0.0
  %1405 = vmatpush.msra.mxu0 0.0
  %1406 = vmatpush.msra.mxu0 0.0
  %1407 = vmatpush.msra.mxu0 0.0
  %1408 = vmatpush.msra.mxu0 0.0
  %1409 = vmatpush.msra.mxu0 0.0
  %1410 = vmatpush.msra.mxu0 0.0
  %1411 = vmatpush.msra.mxu0 0.0
  %1412 = vmatpush.msra.mxu0 0.0
  %1413 = vmatpush.msra.mxu0 0.0
  %1414 = vmatpush.msra.mxu0 0.0
  %1415 = vmatpush.msra.mxu0 0.0
  %1416 = vmatpush.msra.mxu0 0.0
  %1417 = vmatpush.msra.mxu0 0.0
  %1418 = vmatpush.msra.mxu0 %v1149
  %1419 = vmatmul.f32.gmra.mxu0 %v1375
  %v1420 = vpop.f32.mrf.mxu0
  %v1421 = vadd.f32 %v1367, %v1420
  %1422 = vmatmul.f32.gmra.mxu0 %v1378
  %v1423 = vpop.f32.mrf.mxu0
  %v1424 = vadd.f32 %v1372, %v1423
  %1425 = vdwg.mxu0
  %1426 = vmatpush.msra.mxu0 0.0
  %1427 = vmatpush.msra.mxu0 0.0
  %1428 = vmatpush.msra.mxu0 0.0
  %1429 = vmatpush.msra.mxu0 0.0
  %1430 = vmatpush.msra.mxu0 0.0
  %1431 = vmatpush.msra.mxu0 0.0
  %1432 = vmatpush.msra.mxu0 0.0
  %1433 = vmatpush.msra.mxu0 0.0
  %1434 = vmatpush.msra.mxu0 0.0
  %1435 = vmatpush.msra.mxu0 0.0
  %1436 = vmatpush.msra.mxu0 0.0
  %1437 = vmatpush.msra.mxu0 0.0
  %1438 = vmatpush.msra.mxu0 0.0
  %1439 = vmatpush.msra.mxu0 0.0
  %1440 = vmatpush.msra.mxu0 0.0
  %1441 = vmatpush.msra.mxu0 %v1150
  %1442 = vmatmul.f32.gmra.mxu0 %v1375
  %v1443 = vpop.f32.mrf.mxu0
  %v1444 = vadd.f32 %v1367, %v1443
  %1445 = vmatmul.f32.gmra.mxu0 %v1378
  %v1446 = vpop.f32.mrf.mxu0
  %v1447 = vadd.f32 %v1372, %v1446
  %1448 = vdwg.mxu0
  %1449 = vmatpush.msra.mxu0 0.0
  %1450 = vmatpush.msra.mxu0 0.0
  %1451 = vmatpush.msra.mxu0 0.0
  %1452 = vmatpush.msra.mxu0 0.0
  %1453 = vmatpush.msra.mxu0 0.0
  %1454 = vmatpush.msra.mxu0 0.0
  %1455 = vmatpush.msra.mxu0 0.0
  %1456 = vmatpush.msra.mxu0 0.0
  %1457 = vmatpush.msra.mxu0 0.0
  %1458 = vmatpush.msra.mxu0 0.0
  %1459 = vmatpush.msra.mxu0 0.0
  %1460 = vmatpush.msra.mxu0 0.0
  %1461 = vmatpush.msra.mxu0 0.0
  %1462 = vmatpush.msra.mxu0 0.0
  %1463 = vmatpush.msra.mxu0 0.0
  %1464 = vmatpush.msra.mxu0 %v1151
  %1465 = vmatmul.f32.gmra.mxu0 %v1375
  %v1466 = vpop.f32.mrf.mxu0
  %v1467 = vadd.f32 %v1367, %v1466
  %1468 = vmatmul.f32.gmra.mxu0 %v1378
  %v1469 = vpop.f32.mrf.mxu0
  %v1470 = vadd.f32 %v1372, %v1469
  %1471 = vdwg.mxu0
  %1472 = vmatpush.msra.mxu0 0.0
  %1473 = vmatpush.msra.mxu0 0.0
  %1474 = vmatpush.msra.mxu0 0.0
  %1475 = vmatpush.msra.mxu0 0.0
  %1476 = vmatpush.msra.mxu0 0.0
  %1477 = vmatpush.msra.mxu0 0.0
  %1478 = vmatpush.msra.mxu0 0.0
  %1479 = vmatpush.msra.mxu0 0.0
  %1480 = vmatpush.msra.mxu0 0.0
  %1481 = vmatpush.msra.mxu0 0.0
  %1482 = vmatpush.msra.mxu0 0.0
  %1483 = vmatpush.msra.mxu0 0.0
  %1484 = vmatpush.msra.mxu0 0.0
  %1485 = vmatpush.msra.mxu0 0.0
  %1486 = vmatpush.msra.mxu0 0.0
  %1487 = vmatpush.msra.mxu0 %v1152
  %1488 = vmatmul.f32.gmra.mxu0 %v1375
  %v1489 = vpop.f32.mrf.mxu0
  %v1490 = vadd.f32 %v1367, %v1489
  %1491 = vmatmul.f32.gmra.mxu0 %v1378
  %v1492 = vpop.f32.mrf.mxu0
  %v1493 = vadd.f32 %v1372, %v1492
  %1494 = vdwg.mxu0
  %1495 = vmatpush.msra.mxu0 0.0
  %1496 = vmatpush.msra.mxu0 0.0
  %1497 = vmatpush.msra.mxu0 0.0
  %1498 = vmatpush.msra.mxu0 0.0
  %1499 = vmatpush.msra.mxu0 0.0
  %1500 = vmatpush.msra.mxu0 0.0
  %1501 = vmatpush.msra.mxu0 0.0
  %1502 = vmatpush.msra.mxu0 0.0
  %1503 = vmatpush.msra.mxu0 0.0
  %1504 = vmatpush.msra.mxu0 0.0
  %1505 = vmatpush.msra.mxu0 0.0
  %1506 = vmatpush.msra.mxu0 0.0
  %1507 = vmatpush.msra.mxu0 0.0
  %1508 = vmatpush.msra.mxu0 0.0
  %1509 = vmatpush.msra.mxu0 0.0
  %1510 = vmatpush.msra.mxu0 %v1153
  %1511 = vmatmul.f32.gmra.mxu0 %v1375
  %v1512 = vpop.f32.mrf.mxu0
  %v1513 = vadd.f32 %v1367, %v1512
  %1514 = vmatmul.f32.gmra.mxu0 %v1378
  %v1515 = vpop.f32.mrf.mxu0
  %v1516 = vadd.f32 %v1372, %v1515
  %1517 = vdwg.mxu0
  %1518 = vmatpush.msra.mxu0 0.0
  %1519 = vmatpush.msra.mxu0 0.0
  %1520 = vmatpush.msra.mxu0 0.0
  %1521 = vmatpush.msra.mxu0 0.0
  %1522 = vmatpush.msra.mxu0 0.0
  %1523 = vmatpush.msra.mxu0 0.0
  %1524 = vmatpush.msra.mxu0 0.0
  %1525 = vmatpush.msra.mxu0 0.0
  %1526 = vmatpush.msra.mxu0 0.0
  %1527 = vmatpush.msra.mxu0 0.0
  %1528 = vmatpush.msra.mxu0 0.0
  %1529 = vmatpush.msra.mxu0 0.0
  %1530 = vmatpush.msra.mxu0 0.0
  %1531 = vmatpush.msra.mxu0 0.0
  %1532 = vmatpush.msra.mxu0 0.0
  %1533 = vmatpush.msra.mxu0 %v1154
  %1534 = vmatmul.f32.gmra.mxu0 %v1375
  %v1535 = vpop.f32.mrf.mxu0
  %v1536 = vadd.f32 %v1367, %v1535
  %1537 = vmatmul.f32.gmra.mxu0 %v1378
  %v1538 = vpop.f32.mrf.mxu0
  %v1539 = vadd.f32 %v1372, %v1538
  %1540 = vdwg.mxu0
  %1541 = vmatpush.msra.mxu0 0.0
  %1542 = vmatpush.msra.mxu0 0.0
  %1543 = vmatpush.msra.mxu0 0.0
  %1544 = vmatpush.msra.mxu0 0.0
  %1545 = vmatpush.msra.mxu0 0.0
  %1546 = vmatpush.msra.mxu0 0.0
  %1547 = vmatpush.msra.mxu0 0.0
  %1548 = vmatpush.msra.mxu0 0.0
  %1549 = vmatpush.msra.mxu0 0.0
  %1550 = vmatpush.msra.mxu0 0.0
  %1551 = vmatpush.msra.mxu0 0.0
  %1552 = vmatpush.msra.mxu0 0.0
  %1553 = vmatpush.msra.mxu0 0.0
  %1554 = vmatpush.msra.mxu0 0.0
  %1555 = vmatpush.msra.mxu0 0.0
  %1556 = vmatpush.msra.mxu0 %v1155
  %1557 = vmatmul.f32.gmra.mxu0 %v1375
  %v1558 = vpop.f32.mrf.mxu0
  %v1559 = vadd.f32 %v1367, %v1558
  %1560 = vmatmul.f32.gmra.mxu0 %v1378
  %v1561 = vpop.f32.mrf.mxu0
  %v1562 = vadd.f32 %v1372, %v1561
  %1563 = vdwg.mxu0
  %v1564 = vld [vmem:[%s17] sm:$0xff]
  %v1565 = vld [vmem:[%s17 + $0x8] sm:$0xf]
  %v1566 = vld [vmem:[%s18] sm:$0xff]
  %v1567 = vld [vmem:[%s18 + $0x8] sm:$0xf]
  %1569 = vset.pattern.permute.xlu0 0
  %1570 = vperm.xlu0 %1569, %v1564
  %v1571 = vpop.permute.xlu0 %1570
  %1574 = vset.pattern.permute.xlu0 0
  %1575 = vperm.xlu0 %1574, %v1565
  %v1576 = vpop.permute.xlu0 %1575
  %v1578 = vmul.f32 %v1571, %v1398
  %v1579 = vmul.f32 %v1571, %v1421
  %v1580 = vmul.f32 %v1571, %v1444
  %v1581 = vmul.f32 %v1571, %v1467
  %v1582 = vmul.f32 %v1571, %v1490
  %v1583 = vmul.f32 %v1571, %v1513
  %v1584 = vmul.f32 %v1571, %v1536
  %v1585 = vmul.f32 %v1571, %v1559
  %v1586 = vmul.f32 %v1576, %v1401
  %v1587 = vmul.f32 %v1576, %v1424
  %v1588 = vmul.f32 %v1576, %v1447
  %v1589 = vmul.f32 %v1576, %v1470
  %v1590 = vmul.f32 %v1576, %v1493
  %v1591 = vmul.f32 %v1576, %v1516
  %v1592 = vmul.f32 %v1576, %v1539
  %v1593 = vmul.f32 %v1576, %v1562
  %v1594 = vmul.f32 %v1398, 0.70710677
  %v1595 = vmul.f32 %v1421, 0.70710677
  %v1596 = vmul.f32 %v1444, 0.70710677
  %v1597 = vmul.f32 %v1467, 0.70710677
  %v1598 = vmul.f32 %v1490, 0.70710677
  %v1599 = vmul.f32 %v1513, 0.70710677
  %v1600 = vmul.f32 %v1536, 0.70710677
  %v1601 = vmul.f32 %v1559, 0.70710677
  %v1602 = vmul.f32 %v1401, 0.70710677
  %v1603 = vmul.f32 %v1424, 0.70710677
  %v1604 = vmul.f32 %v1447, 0.70710677
  %v1605 = vmul.f32 %v1470, 0.70710677
  %v1606 = vmul.f32 %v1493, 0.70710677
  %v1607 = vmul.f32 %v1516, 0.70710677
  %v1608 = vmul.f32 %v1539, 0.70710677
  %v1609 = vmul.f32 %v1562, 0.70710677
  %vm1610 = vcmp.ge.f32.partialorder %v1594, 0.0
  %vm1611 = vcmp.ge.f32.partialorder %v1595, 0.0
  %vm1612 = vcmp.ge.f32.partialorder %v1596, 0.0
  %vm1613 = vcmp.ge.f32.partialorder %v1597, 0.0
  %vm1614 = vcmp.ge.f32.partialorder %v1598, 0.0
  %vm1615 = vcmp.ge.f32.partialorder %v1599, 0.0
  %vm1616 = vcmp.ge.f32.partialorder %v1600, 0.0
  %vm1617 = vcmp.ge.f32.partialorder %v1601, 0.0
  %vm1618 = vcmp.ge.f32.partialorder %v1602, 0.0
  %vm1619 = vcmp.ge.f32.partialorder %v1603, 0.0
  %vm1620 = vcmp.ge.f32.partialorder %v1604, 0.0
  %vm1621 = vcmp.ge.f32.partialorder %v1605, 0.0
  %vm1622 = vcmp.ge.f32.partialorder %v1606, 0.0
  %vm1623 = vcmp.ge.f32.partialorder %v1607, 0.0
  %vm1624 = vcmp.ge.f32.partialorder %v1608, 0.0
  %vm1625 = vcmp.ge.f32.partialorder %v1609, 0.0
  %v1626 = vsel %vm1610, 1.0, -1.0
  %v1627 = vsel %vm1611, 1.0, -1.0
  %v1628 = vsel %vm1612, 1.0, -1.0
  %v1629 = vsel %vm1613, 1.0, -1.0
  %v1630 = vsel %vm1614, 1.0, -1.0
  %v1631 = vsel %vm1615, 1.0, -1.0
  %v1632 = vsel %vm1616, 1.0, -1.0
  %v1633 = vsel %vm1617, 1.0, -1.0
  %v1634 = vsel %vm1618, 1.0, -1.0
  %v1635 = vsel %vm1619, 1.0, -1.0
  %v1636 = vsel %vm1620, 1.0, -1.0
  %v1637 = vsel %vm1621, 1.0, -1.0
  %v1638 = vsel %vm1622, 1.0, -1.0
  %v1639 = vsel %vm1623, 1.0, -1.0
  %v1640 = vsel %vm1624, 1.0, -1.0
  %v1641 = vsel %vm1625, 1.0, -1.0
  %v1642 = vand.u32 2147483647, %v1594
  %v1643 = vand.u32 2147483647, %v1595
  %v1644 = vand.u32 2147483647, %v1596
  %v1645 = vand.u32 2147483647, %v1597
  %v1646 = vand.u32 2147483647, %v1598
  %v1647 = vand.u32 2147483647, %v1599
  %v1648 = vand.u32 2147483647, %v1600
  %v1649 = vand.u32 2147483647, %v1601
  %v1650 = vand.u32 2147483647, %v1602
  %v1651 = vand.u32 2147483647, %v1603
  %v1652 = vand.u32 2147483647, %v1604
  %v1653 = vand.u32 2147483647, %v1605
  %v1654 = vand.u32 2147483647, %v1606
  %v1655 = vand.u32 2147483647, %v1607
  %v1656 = vand.u32 2147483647, %v1608
  %v1657 = vand.u32 2147483647, %v1609
  %v1658 = vmul.f32 %v1642, 0.3275911
  %v1659 = vmul.f32 %v1643, 0.3275911
  %v1660 = vmul.f32 %v1644, 0.3275911
  %v1661 = vmul.f32 %v1645, 0.3275911
  %v1662 = vmul.f32 %v1646, 0.3275911
  %v1663 = vmul.f32 %v1647, 0.3275911
  %v1664 = vmul.f32 %v1648, 0.3275911
  %v1665 = vmul.f32 %v1649, 0.3275911
  %v1666 = vmul.f32 %v1650, 0.3275911
  %v1667 = vmul.f32 %v1651, 0.3275911
  %v1668 = vmul.f32 %v1652, 0.3275911
  %v1669 = vmul.f32 %v1653, 0.3275911
  %v1670 = vmul.f32 %v1654, 0.3275911
  %v1671 = vmul.f32 %v1655, 0.3275911
  %v1672 = vmul.f32 %v1656, 0.3275911
  %v1673 = vmul.f32 %v1657, 0.3275911
  %v1674 = vadd.f32 %v1658, 1.0
  %v1675 = vadd.f32 %v1659, 1.0
  %v1676 = vadd.f32 %v1660, 1.0
  %v1677 = vadd.f32 %v1661, 1.0
  %v1678 = vadd.f32 %v1662, 1.0
  %v1679 = vadd.f32 %v1663, 1.0
  %v1680 = vadd.f32 %v1664, 1.0
  %v1681 = vadd.f32 %v1665, 1.0
  %v1682 = vadd.f32 %v1666, 1.0
  %v1683 = vadd.f32 %v1667, 1.0
  %v1684 = vadd.f32 %v1668, 1.0
  %v1685 = vadd.f32 %v1669, 1.0
  %v1686 = vadd.f32 %v1670, 1.0
  %v1687 = vadd.f32 %v1671, 1.0
  %v1688 = vadd.f32 %v1672, 1.0
  %v1689 = vadd.f32 %v1673, 1.0
  %v1690 = vrcp.pop %v1674
  %v1691 = vmul.f32 %v1674, %v1690
  %v1692 = vsub.f32 1.0, %v1691
  %v1693 = vmul.f32 %v1690, %v1692
  %v1694 = vadd.f32 %v1690, %v1693
  %vm1695 = vweird.f32 %v1674
  %vm1696 = vweird.f32 %v1690
  %vm1697 = vmor %vm1695, %vm1696
  %v1698 = vsel %vm1697, %v1690, %v1694
  %v1699 = vand.u32 2147483647, %v1674
  %vm1700 = vcmp.eq.f32.partialorder %v1699, 8.507059e+37
  %v1701 = vand.u32 %v1674, 2147483648
  %v1702 = vor.u32 1.1754944e-38, %v1701
  %v1703 = vsel %vm1700, %v1702, %v1698
  %v1704 = vmul.f32 1.0, %v1703
  %v1705 = vrcp.pop %v1675
  %v1706 = vmul.f32 %v1675, %v1705
  %v1707 = vsub.f32 1.0, %v1706
  %v1708 = vmul.f32 %v1705, %v1707
  %v1709 = vadd.f32 %v1705, %v1708
  %vm1710 = vweird.f32 %v1675
  %vm1711 = vweird.f32 %v1705
  %vm1712 = vmor %vm1710, %vm1711
  %v1713 = vsel %vm1712, %v1705, %v1709
  %v1714 = vand.u32 2147483647, %v1675
  %vm1715 = vcmp.eq.f32.partialorder %v1714, 8.507059e+37
  %v1716 = vand.u32 %v1675, 2147483648
  %v1717 = vor.u32 1.1754944e-38, %v1716
  %v1718 = vsel %vm1715, %v1717, %v1713
  %v1719 = vmul.f32 1.0, %v1718
  %v1720 = vrcp.pop %v1676
  %v1721 = vmul.f32 %v1676, %v1720
  %v1722 = vsub.f32 1.0, %v1721
  %v1723 = vmul.f32 %v1720, %v1722
  %v1724 = vadd.f32 %v1720, %v1723
  %vm1725 = vweird.f32 %v1676
  %vm1726 = vweird.f32 %v1720
  %vm1727 = vmor %vm1725, %vm1726
  %v1728 = vsel %vm1727, %v1720, %v1724
  %v1729 = vand.u32 2147483647, %v1676
  %vm1730 = vcmp.eq.f32.partialorder %v1729, 8.507059e+37
  %v1731 = vand.u32 %v1676, 2147483648
  %v1732 = vor.u32 1.1754944e-38, %v1731
  %v1733 = vsel %vm1730, %v1732, %v1728
  %v1734 = vmul.f32 1.0, %v1733
  %v1735 = vrcp.pop %v1677
  %v1736 = vmul.f32 %v1677, %v1735
  %v1737 = vsub.f32 1.0, %v1736
  %v1738 = vmul.f32 %v1735, %v1737
  %v1739 = vadd.f32 %v1735, %v1738
  %vm1740 = vweird.f32 %v1677
  %vm1741 = vweird.f32 %v1735
  %vm1742 = vmor %vm1740, %vm1741
  %v1743 = vsel %vm1742, %v1735, %v1739
  %v1744 = vand.u32 2147483647, %v1677
  %vm1745 = vcmp.eq.f32.partialorder %v1744, 8.507059e+37
  %v1746 = vand.u32 %v1677, 2147483648
  %v1747 = vor.u32 1.1754944e-38, %v1746
  %v1748 = vsel %vm1745, %v1747, %v1743
  %v1749 = vmul.f32 1.0, %v1748
  %v1750 = vrcp.pop %v1678
  %v1751 = vmul.f32 %v1678, %v1750
  %v1752 = vsub.f32 1.0, %v1751
  %v1753 = vmul.f32 %v1750, %v1752
  %v1754 = vadd.f32 %v1750, %v1753
  %vm1755 = vweird.f32 %v1678
  %vm1756 = vweird.f32 %v1750
  %vm1757 = vmor %vm1755, %vm1756
  %v1758 = vsel %vm1757, %v1750, %v1754
  %v1759 = vand.u32 2147483647, %v1678
  %vm1760 = vcmp.eq.f32.partialorder %v1759, 8.507059e+37
  %v1761 = vand.u32 %v1678, 2147483648
  %v1762 = vor.u32 1.1754944e-38, %v1761
  %v1763 = vsel %vm1760, %v1762, %v1758
  %v1764 = vmul.f32 1.0, %v1763
  %v1765 = vrcp.pop %v1679
  %v1766 = vmul.f32 %v1679, %v1765
  %v1767 = vsub.f32 1.0, %v1766
  %v1768 = vmul.f32 %v1765, %v1767
  %v1769 = vadd.f32 %v1765, %v1768
  %vm1770 = vweird.f32 %v1679
  %vm1771 = vweird.f32 %v1765
  %vm1772 = vmor %vm1770, %vm1771
  %v1773 = vsel %vm1772, %v1765, %v1769
  %v1774 = vand.u32 2147483647, %v1679
  %vm1775 = vcmp.eq.f32.partialorder %v1774, 8.507059e+37
  %v1776 = vand.u32 %v1679, 2147483648
  %v1777 = vor.u32 1.1754944e-38, %v1776
  %v1778 = vsel %vm1775, %v1777, %v1773
  %v1779 = vmul.f32 1.0, %v1778
  %v1780 = vrcp.pop %v1680
  %v1781 = vmul.f32 %v1680, %v1780
  %v1782 = vsub.f32 1.0, %v1781
  %v1783 = vmul.f32 %v1780, %v1782
  %v1784 = vadd.f32 %v1780, %v1783
  %vm1785 = vweird.f32 %v1680
  %vm1786 = vweird.f32 %v1780
  %vm1787 = vmor %vm1785, %vm1786
  %v1788 = vsel %vm1787, %v1780, %v1784
  %v1789 = vand.u32 2147483647, %v1680
  %vm1790 = vcmp.eq.f32.partialorder %v1789, 8.507059e+37
  %v1791 = vand.u32 %v1680, 2147483648
  %v1792 = vor.u32 1.1754944e-38, %v1791
  %v1793 = vsel %vm1790, %v1792, %v1788
  %v1794 = vmul.f32 1.0, %v1793
  %v1795 = vrcp.pop %v1681
  %v1796 = vmul.f32 %v1681, %v1795
  %v1797 = vsub.f32 1.0, %v1796
  %v1798 = vmul.f32 %v1795, %v1797
  %v1799 = vadd.f32 %v1795, %v1798
  %vm1800 = vweird.f32 %v1681
  %vm1801 = vweird.f32 %v1795
  %vm1802 = vmor %vm1800, %vm1801
  %v1803 = vsel %vm1802, %v1795, %v1799
  %v1804 = vand.u32 2147483647, %v1681
  %vm1805 = vcmp.eq.f32.partialorder %v1804, 8.507059e+37
  %v1806 = vand.u32 %v1681, 2147483648
  %v1807 = vor.u32 1.1754944e-38, %v1806
  %v1808 = vsel %vm1805, %v1807, %v1803
  %v1809 = vmul.f32 1.0, %v1808
  %v1810 = vrcp.pop %v1682
  %v1811 = vmul.f32 %v1682, %v1810
  %v1812 = vsub.f32 1.0, %v1811
  %v1813 = vmul.f32 %v1810, %v1812
  %v1814 = vadd.f32 %v1810, %v1813
  %vm1815 = vweird.f32 %v1682
  %vm1816 = vweird.f32 %v1810
  %vm1817 = vmor %vm1815, %vm1816
  %v1818 = vsel %vm1817, %v1810, %v1814
  %v1819 = vand.u32 2147483647, %v1682
  %vm1820 = vcmp.eq.f32.partialorder %v1819, 8.507059e+37
  %v1821 = vand.u32 %v1682, 2147483648
  %v1822 = vor.u32 1.1754944e-38, %v1821
  %v1823 = vsel %vm1820, %v1822, %v1818
  %v1824 = vmul.f32 1.0, %v1823
  %v1825 = vrcp.pop %v1683
  %v1826 = vmul.f32 %v1683, %v1825
  %v1827 = vsub.f32 1.0, %v1826
  %v1828 = vmul.f32 %v1825, %v1827
  %v1829 = vadd.f32 %v1825, %v1828
  %vm1830 = vweird.f32 %v1683
  %vm1831 = vweird.f32 %v1825
  %vm1832 = vmor %vm1830, %vm1831
  %v1833 = vsel %vm1832, %v1825, %v1829
  %v1834 = vand.u32 2147483647, %v1683
  %vm1835 = vcmp.eq.f32.partialorder %v1834, 8.507059e+37
  %v1836 = vand.u32 %v1683, 2147483648
  %v1837 = vor.u32 1.1754944e-38, %v1836
  %v1838 = vsel %vm1835, %v1837, %v1833
  %v1839 = vmul.f32 1.0, %v1838
  %v1840 = vrcp.pop %v1684
  %v1841 = vmul.f32 %v1684, %v1840
  %v1842 = vsub.f32 1.0, %v1841
  %v1843 = vmul.f32 %v1840, %v1842
  %v1844 = vadd.f32 %v1840, %v1843
  %vm1845 = vweird.f32 %v1684
  %vm1846 = vweird.f32 %v1840
  %vm1847 = vmor %vm1845, %vm1846
  %v1848 = vsel %vm1847, %v1840, %v1844
  %v1849 = vand.u32 2147483647, %v1684
  %vm1850 = vcmp.eq.f32.partialorder %v1849, 8.507059e+37
  %v1851 = vand.u32 %v1684, 2147483648
  %v1852 = vor.u32 1.1754944e-38, %v1851
  %v1853 = vsel %vm1850, %v1852, %v1848
  %v1854 = vmul.f32 1.0, %v1853
  %v1855 = vrcp.pop %v1685
  %v1856 = vmul.f32 %v1685, %v1855
  %v1857 = vsub.f32 1.0, %v1856
  %v1858 = vmul.f32 %v1855, %v1857
  %v1859 = vadd.f32 %v1855, %v1858
  %vm1860 = vweird.f32 %v1685
  %vm1861 = vweird.f32 %v1855
  %vm1862 = vmor %vm1860, %vm1861
  %v1863 = vsel %vm1862, %v1855, %v1859
  %v1864 = vand.u32 2147483647, %v1685
  %vm1865 = vcmp.eq.f32.partialorder %v1864, 8.507059e+37
  %v1866 = vand.u32 %v1685, 2147483648
  %v1867 = vor.u32 1.1754944e-38, %v1866
  %v1868 = vsel %vm1865, %v1867, %v1863
  %v1869 = vmul.f32 1.0, %v1868
  %v1870 = vrcp.pop %v1686
  %v1871 = vmul.f32 %v1686, %v1870
  %v1872 = vsub.f32 1.0, %v1871
  %v1873 = vmul.f32 %v1870, %v1872
  %v1874 = vadd.f32 %v1870, %v1873
  %vm1875 = vweird.f32 %v1686
  %vm1876 = vweird.f32 %v1870
  %vm1877 = vmor %vm1875, %vm1876
  %v1878 = vsel %vm1877, %v1870, %v1874
  %v1879 = vand.u32 2147483647, %v1686
  %vm1880 = vcmp.eq.f32.partialorder %v1879, 8.507059e+37
  %v1881 = vand.u32 %v1686, 2147483648
  %v1882 = vor.u32 1.1754944e-38, %v1881
  %v1883 = vsel %vm1880, %v1882, %v1878
  %v1884 = vmul.f32 1.0, %v1883
  %v1885 = vrcp.pop %v1687
  %v1886 = vmul.f32 %v1687, %v1885
  %v1887 = vsub.f32 1.0, %v1886
  %v1888 = vmul.f32 %v1885, %v1887
  %v1889 = vadd.f32 %v1885, %v1888
  %vm1890 = vweird.f32 %v1687
  %vm1891 = vweird.f32 %v1885
  %vm1892 = vmor %vm1890, %vm1891
  %v1893 = vsel %vm1892, %v1885, %v1889
  %v1894 = vand.u32 2147483647, %v1687
  %vm1895 = vcmp.eq.f32.partialorder %v1894, 8.507059e+37
  %v1896 = vand.u32 %v1687, 2147483648
  %v1897 = vor.u32 1.1754944e-38, %v1896
  %v1898 = vsel %vm1895, %v1897, %v1893
  %v1899 = vmul.f32 1.0, %v1898
  %v1900 = vrcp.pop %v1688
  %v1901 = vmul.f32 %v1688, %v1900
  %v1902 = vsub.f32 1.0, %v1901
  %v1903 = vmul.f32 %v1900, %v1902
  %v1904 = vadd.f32 %v1900, %v1903
  %vm1905 = vweird.f32 %v1688
  %vm1906 = vweird.f32 %v1900
  %vm1907 = vmor %vm1905, %vm1906
  %v1908 = vsel %vm1907, %v1900, %v1904
  %v1909 = vand.u32 2147483647, %v1688
  %vm1910 = vcmp.eq.f32.partialorder %v1909, 8.507059e+37
  %v1911 = vand.u32 %v1688, 2147483648
  %v1912 = vor.u32 1.1754944e-38, %v1911
  %v1913 = vsel %vm1910, %v1912, %v1908
  %v1914 = vmul.f32 1.0, %v1913
  %v1915 = vrcp.pop %v1689
  %v1916 = vmul.f32 %v1689, %v1915
  %v1917 = vsub.f32 1.0, %v1916
  %v1918 = vmul.f32 %v1915, %v1917
  %v1919 = vadd.f32 %v1915, %v1918
  %vm1920 = vweird.f32 %v1689
  %vm1921 = vweird.f32 %v1915
  %vm1922 = vmor %vm1920, %vm1921
  %v1923 = vsel %vm1922, %v1915, %v1919
  %v1924 = vand.u32 2147483647, %v1689
  %vm1925 = vcmp.eq.f32.partialorder %v1924, 8.507059e+37
  %v1926 = vand.u32 %v1689, 2147483648
  %v1927 = vor.u32 1.1754944e-38, %v1926
  %v1928 = vsel %vm1925, %v1927, %v1923
  %v1929 = vmul.f32 1.0, %v1928
  %v1930 = vmul.f32 %v1704, 1.0614054
  %v1931 = vmul.f32 %v1719, 1.0614054
  %v1932 = vmul.f32 %v1734, 1.0614054
  %v1933 = vmul.f32 %v1749, 1.0614054
  %v1934 = vmul.f32 %v1764, 1.0614054
  %v1935 = vmul.f32 %v1779, 1.0614054
  %v1936 = vmul.f32 %v1794, 1.0614054
  %v1937 = vmul.f32 %v1809, 1.0614054
  %v1938 = vmul.f32 %v1824, 1.0614054
  %v1939 = vmul.f32 %v1839, 1.0614054
  %v1940 = vmul.f32 %v1854, 1.0614054
  %v1941 = vmul.f32 %v1869, 1.0614054
  %v1942 = vmul.f32 %v1884, 1.0614054
  %v1943 = vmul.f32 %v1899, 1.0614054
  %v1944 = vmul.f32 %v1914, 1.0614054
  %v1945 = vmul.f32 %v1929, 1.0614054
  %v1946 = vadd.f32 %v1930, -1.4531521
  %v1947 = vadd.f32 %v1931, -1.4531521
  %v1948 = vadd.f32 %v1932, -1.4531521
  %v1949 = vadd.f32 %v1933, -1.4531521
  %v1950 = vadd.f32 %v1934, -1.4531521
  %v1951 = vadd.f32 %v1935, -1.4531521
  %v1952 = vadd.f32 %v1936, -1.4531521
  %v1953 = vadd.f32 %v1937, -1.4531521
  %v1954 = vadd.f32 %v1938, -1.4531521
  %v1955 = vadd.f32 %v1939, -1.4531521
  %v1956 = vadd.f32 %v1940, -1.4531521
  %v1957 = vadd.f32 %v1941, -1.4531521
  %v1958 = vadd.f32 %v1942, -1.4531521
  %v1959 = vadd.f32 %v1943, -1.4531521
  %v1960 = vadd.f32 %v1944, -1.4531521
  %v1961 = vadd.f32 %v1945, -1.4531521
  %v1962 = vmul.f32 %v1946, %v1704
  %v1963 = vmul.f32 %v1947, %v1719
  %v1964 = vmul.f32 %v1948, %v1734
  %v1965 = vmul.f32 %v1949, %v1749
  %v1966 = vmul.f32 %v1950, %v1764
  %v1967 = vmul.f32 %v1951, %v1779
  %v1968 = vmul.f32 %v1952, %v1794
  %v1969 = vmul.f32 %v1953, %v1809
  %v1970 = vmul.f32 %v1954, %v1824
  %v1971 = vmul.f32 %v1955, %v1839
  %v1972 = vmul.f32 %v1956, %v1854
  %v1973 = vmul.f32 %v1957, %v1869
  %v1974 = vmul.f32 %v1958, %v1884
  %v1975 = vmul.f32 %v1959, %v1899
  %v1976 = vmul.f32 %v1960, %v1914
  %v1977 = vmul.f32 %v1961, %v1929
  %v1978 = vadd.f32 %v1962, 1.4214138
  %v1979 = vadd.f32 %v1963, 1.4214138
  %v1980 = vadd.f32 %v1964, 1.4214138
  %v1981 = vadd.f32 %v1965, 1.4214138
  %v1982 = vadd.f32 %v1966, 1.4214138
  %v1983 = vadd.f32 %v1967, 1.4214138
  %v1984 = vadd.f32 %v1968, 1.4214138
  %v1985 = vadd.f32 %v1969, 1.4214138
  %v1986 = vadd.f32 %v1970, 1.4214138
  %v1987 = vadd.f32 %v1971, 1.4214138
  %v1988 = vadd.f32 %v1972, 1.4214138
  %v1989 = vadd.f32 %v1973, 1.4214138
  %v1990 = vadd.f32 %v1974, 1.4214138
  %v1991 = vadd.f32 %v1975, 1.4214138
  %v1992 = vadd.f32 %v1976, 1.4214138
  %v1993 = vadd.f32 %v1977, 1.4214138
  %v1994 = vmul.f32 %v1978, %v1704
  %v1995 = vmul.f32 %v1979, %v1719
  %v1996 = vmul.f32 %v1980, %v1734
  %v1997 = vmul.f32 %v1981, %v1749
  %v1998 = vmul.f32 %v1982, %v1764
  %v1999 = vmul.f32 %v1983, %v1779
  %v2000 = vmul.f32 %v1984, %v1794
  %v2001 = vmul.f32 %v1985, %v1809
  %v2002 = vmul.f32 %v1986, %v1824
  %v2003 = vmul.f32 %v1987, %v1839
  %v2004 = vmul.f32 %v1988, %v1854
  %v2005 = vmul.f32 %v1989, %v1869
  %v2006 = vmul.f32 %v1990, %v1884
  %v2007 = vmul.f32 %v1991, %v1899
  %v2008 = vmul.f32 %v1992, %v1914
  %v2009 = vmul.f32 %v1993, %v1929
  %v2010 = vadd.f32 %v1994, -0.28449672
  %v2011 = vadd.f32 %v1995, -0.28449672
  %v2012 = vadd.f32 %v1996, -0.28449672
  %v2013 = vadd.f32 %v1997, -0.28449672
  %v2014 = vadd.f32 %v1998, -0.28449672
  %v2015 = vadd.f32 %v1999, -0.28449672
  %v2016 = vadd.f32 %v2000, -0.28449672
  %v2017 = vadd.f32 %v2001, -0.28449672
  %v2018 = vadd.f32 %v2002, -0.28449672
  %v2019 = vadd.f32 %v2003, -0.28449672
  %v2020 = vadd.f32 %v2004, -0.28449672
  %v2021 = vadd.f32 %v2005, -0.28449672
  %v2022 = vadd.f32 %v2006, -0.28449672
  %v2023 = vadd.f32 %v2007, -0.28449672
  %v2024 = vadd.f32 %v2008, -0.28449672
  %v2025 = vadd.f32 %v2009, -0.28449672
  %v2026 = vmul.f32 %v2010, %v1704
  %v2027 = vmul.f32 %v2011, %v1719
  %v2028 = vmul.f32 %v2012, %v1734
  %v2029 = vmul.f32 %v2013, %v1749
  %v2030 = vmul.f32 %v2014, %v1764
  %v2031 = vmul.f32 %v2015, %v1779
  %v2032 = vmul.f32 %v2016, %v1794
  %v2033 = vmul.f32 %v2017, %v1809
  %v2034 = vmul.f32 %v2018, %v1824
  %v2035 = vmul.f32 %v2019, %v1839
  %v2036 = vmul.f32 %v2020, %v1854
  %v2037 = vmul.f32 %v2021, %v1869
  %v2038 = vmul.f32 %v2022, %v1884
  %v2039 = vmul.f32 %v2023, %v1899
  %v2040 = vmul.f32 %v2024, %v1914
  %v2041 = vmul.f32 %v2025, %v1929
  %v2042 = vadd.f32 %v2026, 0.2548296
  %v2043 = vadd.f32 %v2027, 0.2548296
  %v2044 = vadd.f32 %v2028, 0.2548296
  %v2045 = vadd.f32 %v2029, 0.2548296
  %v2046 = vadd.f32 %v2030, 0.2548296
  %v2047 = vadd.f32 %v2031, 0.2548296
  %v2048 = vadd.f32 %v2032, 0.2548296
  %v2049 = vadd.f32 %v2033, 0.2548296
  %v2050 = vadd.f32 %v2034, 0.2548296
  %v2051 = vadd.f32 %v2035, 0.2548296
  %v2052 = vadd.f32 %v2036, 0.2548296
  %v2053 = vadd.f32 %v2037, 0.2548296
  %v2054 = vadd.f32 %v2038, 0.2548296
  %v2055 = vadd.f32 %v2039, 0.2548296
  %v2056 = vadd.f32 %v2040, 0.2548296
  %v2057 = vadd.f32 %v2041, 0.2548296
  %v2058 = vmul.f32 %v2042, %v1704
  %v2059 = vmul.f32 %v2043, %v1719
  %v2060 = vmul.f32 %v2044, %v1734
  %v2061 = vmul.f32 %v2045, %v1749
  %v2062 = vmul.f32 %v2046, %v1764
  %v2063 = vmul.f32 %v2047, %v1779
  %v2064 = vmul.f32 %v2048, %v1794
  %v2065 = vmul.f32 %v2049, %v1809
  %v2066 = vmul.f32 %v2050, %v1824
  %v2067 = vmul.f32 %v2051, %v1839
  %v2068 = vmul.f32 %v2052, %v1854
  %v2069 = vmul.f32 %v2053, %v1869
  %v2070 = vmul.f32 %v2054, %v1884
  %v2071 = vmul.f32 %v2055, %v1899
  %v2072 = vmul.f32 %v2056, %v1914
  %v2073 = vmul.f32 %v2057, %v1929
  %v2074 = vsub.f32 0.0, %v1642
  %v2075 = vsub.f32 0.0, %v1643
  %v2076 = vsub.f32 0.0, %v1644
  %v2077 = vsub.f32 0.0, %v1645
  %v2078 = vsub.f32 0.0, %v1646
  %v2079 = vsub.f32 0.0, %v1647
  %v2080 = vsub.f32 0.0, %v1648
  %v2081 = vsub.f32 0.0, %v1649
  %v2082 = vsub.f32 0.0, %v1650
  %v2083 = vsub.f32 0.0, %v1651
  %v2084 = vsub.f32 0.0, %v1652
  %v2085 = vsub.f32 0.0, %v1653
  %v2086 = vsub.f32 0.0, %v1654
  %v2087 = vsub.f32 0.0, %v1655
  %v2088 = vsub.f32 0.0, %v1656
  %v2089 = vsub.f32 0.0, %v1657
  %v2090 = vmul.f32 %v2074, %v1642
  %v2091 = vmul.f32 %v2075, %v1643
  %v2092 = vmul.f32 %v2076, %v1644
  %v2093 = vmul.f32 %v2077, %v1645
  %v2094 = vmul.f32 %v2078, %v1646
  %v2095 = vmul.f32 %v2079, %v1647
  %v2096 = vmul.f32 %v2080, %v1648
  %v2097 = vmul.f32 %v2081, %v1649
  %v2098 = vmul.f32 %v2082, %v1650
  %v2099 = vmul.f32 %v2083, %v1651
  %v2100 = vmul.f32 %v2084, %v1652
  %v2101 = vmul.f32 %v2085, %v1653
  %v2102 = vmul.f32 %v2086, %v1654
  %v2103 = vmul.f32 %v2087, %v1655
  %v2104 = vmul.f32 %v2088, %v1656
  %v2105 = vmul.f32 %v2089, %v1657
  %v2106 = vmul.f32 %v2090, 1.442695
  %v2107 = vpow.pop %v2106
  %v2108 = vmul.f32 %v2091, 1.442695
  %v2109 = vpow.pop %v2108
  %v2110 = vmul.f32 %v2092, 1.442695
  %v2111 = vpow.pop %v2110
  %v2112 = vmul.f32 %v2093, 1.442695
  %v2113 = vpow.pop %v2112
  %v2114 = vmul.f32 %v2094, 1.442695
  %v2115 = vpow.pop %v2114
  %v2116 = vmul.f32 %v2095, 1.442695
  %v2117 = vpow.pop %v2116
  %v2118 = vmul.f32 %v2096, 1.442695
  %v2119 = vpow.pop %v2118
  %v2120 = vmul.f32 %v2097, 1.442695
  %v2121 = vpow.pop %v2120
  %v2122 = vmul.f32 %v2098, 1.442695
  %v2123 = vpow.pop %v2122
  %v2124 = vmul.f32 %v2099, 1.442695
  %v2125 = vpow.pop %v2124
  %v2126 = vmul.f32 %v2100, 1.442695
  %v2127 = vpow.pop %v2126
  %v2128 = vmul.f32 %v2101, 1.442695
  %v2129 = vpow.pop %v2128
  %v2130 = vmul.f32 %v2102, 1.442695
  %v2131 = vpow.pop %v2130
  %v2132 = vmul.f32 %v2103, 1.442695
  %v2133 = vpow.pop %v2132
  %v2134 = vmul.f32 %v2104, 1.442695
  %v2135 = vpow.pop %v2134
  %v2136 = vmul.f32 %v2105, 1.442695
  %v2137 = vpow.pop %v2136
  %v2138 = vmul.f32 %v2058, %v2107
  %v2139 = vmul.f32 %v2059, %v2109
  %v2140 = vmul.f32 %v2060, %v2111
  %v2141 = vmul.f32 %v2061, %v2113
  %v2142 = vmul.f32 %v2062, %v2115
  %v2143 = vmul.f32 %v2063, %v2117
  %v2144 = vmul.f32 %v2064, %v2119
  %v2145 = vmul.f32 %v2065, %v2121
  %v2146 = vmul.f32 %v2066, %v2123
  %v2147 = vmul.f32 %v2067, %v2125
  %v2148 = vmul.f32 %v2068, %v2127
  %v2149 = vmul.f32 %v2069, %v2129
  %v2150 = vmul.f32 %v2070, %v2131
  %v2151 = vmul.f32 %v2071, %v2133
  %v2152 = vmul.f32 %v2072, %v2135
  %v2153 = vmul.f32 %v2073, %v2137
  %v2154 = vsub.f32 1.0, %v2138
  %v2155 = vsub.f32 1.0, %v2139
  %v2156 = vsub.f32 1.0, %v2140
  %v2157 = vsub.f32 1.0, %v2141
  %v2158 = vsub.f32 1.0, %v2142
  %v2159 = vsub.f32 1.0, %v2143
  %v2160 = vsub.f32 1.0, %v2144
  %v2161 = vsub.f32 1.0, %v2145
  %v2162 = vsub.f32 1.0, %v2146
  %v2163 = vsub.f32 1.0, %v2147
  %v2164 = vsub.f32 1.0, %v2148
  %v2165 = vsub.f32 1.0, %v2149
  %v2166 = vsub.f32 1.0, %v2150
  %v2167 = vsub.f32 1.0, %v2151
  %v2168 = vsub.f32 1.0, %v2152
  %v2169 = vsub.f32 1.0, %v2153
  %v2170 = vmul.f32 %v1626, %v2154
  %v2171 = vmul.f32 %v1627, %v2155
  %v2172 = vmul.f32 %v1628, %v2156
  %v2173 = vmul.f32 %v1629, %v2157
  %v2174 = vmul.f32 %v1630, %v2158
  %v2175 = vmul.f32 %v1631, %v2159
  %v2176 = vmul.f32 %v1632, %v2160
  %v2177 = vmul.f32 %v1633, %v2161
  %v2178 = vmul.f32 %v1634, %v2162
  %v2179 = vmul.f32 %v1635, %v2163
  %v2180 = vmul.f32 %v1636, %v2164
  %v2181 = vmul.f32 %v1637, %v2165
  %v2182 = vmul.f32 %v1638, %v2166
  %v2183 = vmul.f32 %v1639, %v2167
  %v2184 = vmul.f32 %v1640, %v2168
  %v2185 = vmul.f32 %v1641, %v2169
  %v2186 = vadd.f32 %v2170, 1.0
  %v2187 = vadd.f32 %v2171, 1.0
  %v2188 = vadd.f32 %v2172, 1.0
  %v2189 = vadd.f32 %v2173, 1.0
  %v2190 = vadd.f32 %v2174, 1.0
  %v2191 = vadd.f32 %v2175, 1.0
  %v2192 = vadd.f32 %v2176, 1.0
  %v2193 = vadd.f32 %v2177, 1.0
  %v2194 = vadd.f32 %v2178, 1.0
  %v2195 = vadd.f32 %v2179, 1.0
  %v2196 = vadd.f32 %v2180, 1.0
  %v2197 = vadd.f32 %v2181, 1.0
  %v2198 = vadd.f32 %v2182, 1.0
  %v2199 = vadd.f32 %v2183, 1.0
  %v2200 = vadd.f32 %v2184, 1.0
  %v2201 = vadd.f32 %v2185, 1.0
  %v2202 = vmul.f32 %v1578, %v2186
  %v2203 = vmul.f32 %v1579, %v2187
  %v2204 = vmul.f32 %v1580, %v2188
  %v2205 = vmul.f32 %v1581, %v2189
  %v2206 = vmul.f32 %v1582, %v2190
  %v2207 = vmul.f32 %v1583, %v2191
  %v2208 = vmul.f32 %v1584, %v2192
  %v2209 = vmul.f32 %v1585, %v2193
  %v2210 = vmul.f32 %v1586, %v2194
  %v2211 = vmul.f32 %v1587, %v2195
  %v2212 = vmul.f32 %v1588, %v2196
  %v2213 = vmul.f32 %v1589, %v2197
  %v2214 = vmul.f32 %v1590, %v2198
  %v2215 = vmul.f32 %v1591, %v2199
  %v2216 = vmul.f32 %v1592, %v2200
  %v2217 = vmul.f32 %v1593, %v2201
  %2219 = vset.pattern.permute.xlu0 0
  %2220 = vperm.xlu0 %2219, %v1566
  %v2221 = vpop.permute.xlu0 %2220
  %2224 = vset.pattern.permute.xlu0 0
  %2225 = vperm.xlu0 %2224, %v1567
  %v2226 = vpop.permute.xlu0 %2225
  %v2228 = vadd.f32 %v2202, %v2221
  %v2229 = vadd.f32 %v2203, %v2221
  %v2230 = vadd.f32 %v2204, %v2221
  %v2231 = vadd.f32 %v2205, %v2221
  %v2232 = vadd.f32 %v2206, %v2221
  %v2233 = vadd.f32 %v2207, %v2221
  %v2234 = vadd.f32 %v2208, %v2221
  %v2235 = vadd.f32 %v2209, %v2221
  %v2236 = vadd.f32 %v2210, %v2226
  %v2237 = vadd.f32 %v2211, %v2226
  %v2238 = vadd.f32 %v2212, %v2226
  %v2239 = vadd.f32 %v2213, %v2226
  %v2240 = vadd.f32 %v2214, %v2226
  %v2241 = vadd.f32 %v2215, %v2226
  %v2242 = vadd.f32 %v2216, %v2226
  %v2243 = vadd.f32 %v2217, %v2226
  %v2244 = vld [vmem:[%s3] sm:$0xff]
  %v2245 = vadd.f32 %v1194, %v2228
  %v2246 = vadd.f32 %v1217, %v2229
  %v2247 = vadd.f32 %v1240, %v2230
  %v2248 = vadd.f32 %v1263, %v2231
  %v2249 = vadd.f32 %v1286, %v2232
  %v2250 = vadd.f32 %v1309, %v2233
  %v2251 = vadd.f32 %v1332, %v2234
  %v2252 = vadd.f32 %v1355, %v2235
  %v2253 = vadd.f32 %v1197, %v2236
  %v2254 = vadd.f32 %v1220, %v2237
  %v2255 = vadd.f32 %v1243, %v2238
  %v2256 = vadd.f32 %v1266, %v2239
  %v2257 = vadd.f32 %v1289, %v2240
  %v2258 = vadd.f32 %v1312, %v2241
  %v2259 = vadd.f32 %v1335, %v2242
  %v2260 = vadd.f32 %v1358, %v2243
  %v2262 = vperm.slane %v2244, 0
  %v2263 = vperm.slane %v2244, 1
  %v2264 = vperm.slane %v2244, 2
  %v2265 = vperm.slane %v2244, 3
  %v2266 = vperm.slane %v2244, 4
  %v2267 = vperm.slane %v2244, 5
  %v2268 = vperm.slane %v2244, 6
  %v2269 = vperm.slane %v2244, 7
  %v2278 = vmul.f32 %v2262, %v2245
  %v2279 = vmul.f32 %v2263, %v2246
  %v2280 = vmul.f32 %v2264, %v2247
  %v2281 = vmul.f32 %v2265, %v2248
  %v2282 = vmul.f32 %v2266, %v2249
  %v2283 = vmul.f32 %v2267, %v2250
  %v2284 = vmul.f32 %v2268, %v2251
  %v2285 = vmul.f32 %v2269, %v2252
  %v2286 = vmul.f32 %v2262, %v2253
  %v2287 = vmul.f32 %v2263, %v2254
  %v2288 = vmul.f32 %v2264, %v2255
  %v2289 = vmul.f32 %v2265, %v2256
  %v2290 = vmul.f32 %v2266, %v2257
  %v2291 = vmul.f32 %v2267, %v2258
  %v2292 = vmul.f32 %v2268, %v2259
  %v2293 = vmul.f32 %v2269, %v2260
  %v2294 = vld [vmem:[%s4] sm:$0xff]
  %v2295 = vld [vmem:[%s19] sm:$0xff]
  %v2296 = vld [vmem:[%s19 + $0x8] sm:$0xff]
  %v2297 = vld [vmem:[%s20] sm:$0xff]
  %v2298 = vld [vmem:[%s20 + $0x8] sm:$0xff]
  %2300 = vset.pattern.permute.xlu0 0
  %2301 = vperm.xlu0 %2300, %v2297
  %v2302 = vpop.permute.xlu0 %2301
  %2305 = vset.pattern.permute.xlu0 0
  %2306 = vperm.xlu0 %2305, %v2298
  %v2307 = vpop.permute.xlu0 %2306
  %vm2309 = vcmask 97280
  %v2311 = vsel %vm2309, %v2295, 0
  %v2314 = vsel %vm2309, %v2296, 0
  %v2317 = vsel %vm163, %v2286, 0
  %v2320 = vsel %vm163, %v2287, 0
  %v2323 = vsel %vm163, %v2288, 0
  %v2326 = vsel %vm163, %v2289, 0
  %v2329 = vsel %vm163, %v2290, 0
  %v2332 = vsel %vm163, %v2291, 0
  %v2335 = vsel %vm163, %v2292, 0
  %v2338 = vsel %vm163, %v2293, 0
  %2340 = vmatpush.msra.mxu0 0.0
  %2341 = vmatpush.msra.mxu0 0.0
  %2342 = vmatpush.msra.mxu0 0.0
  %2343 = vmatpush.msra.mxu0 0.0
  %2344 = vmatpush.msra.mxu0 0.0
  %2345 = vmatpush.msra.mxu0 0.0
  %2346 = vmatpush.msra.mxu0 0.0
  %2347 = vmatpush.msra.mxu0 0.0
  %2348 = vmatpush.msra.mxu0 0.0
  %2349 = vmatpush.msra.mxu0 0.0
  %2350 = vmatpush.msra.mxu0 0.0
  %2351 = vmatpush.msra.mxu0 0.0
  %2352 = vmatpush.msra.mxu0 0.0
  %2353 = vmatpush.msra.mxu0 0.0
  %2354 = vmatpush.msra.mxu0 %v2317
  %2355 = vmatpush.msra.mxu0 %v2278
  %2356 = vmatmul.f32.gmra.mxu0 %v2311
  %v2357 = vpop.f32.mrf.mxu0
  %v2358 = vadd.f32 %v2302, %v2357
  %2359 = vmatmul.f32.gmra.mxu0 %v2314
  %v2360 = vpop.f32.mrf.mxu0
  %v2361 = vadd.f32 %v2307, %v2360
  %2362 = vdwg.mxu0
  %2363 = vmatpush.msra.mxu0 0.0
  %2364 = vmatpush.msra.mxu0 0.0
  %2365 = vmatpush.msra.mxu0 0.0
  %2366 = vmatpush.msra.mxu0 0.0
  %2367 = vmatpush.msra.mxu0 0.0
  %2368 = vmatpush.msra.mxu0 0.0
  %2369 = vmatpush.msra.mxu0 0.0
  %2370 = vmatpush.msra.mxu0 0.0
  %2371 = vmatpush.msra.mxu0 0.0
  %2372 = vmatpush.msra.mxu0 0.0
  %2373 = vmatpush.msra.mxu0 0.0
  %2374 = vmatpush.msra.mxu0 0.0
  %2375 = vmatpush.msra.mxu0 0.0
  %2376 = vmatpush.msra.mxu0 0.0
  %2377 = vmatpush.msra.mxu0 %v2320
  %2378 = vmatpush.msra.mxu0 %v2279
  %2379 = vmatmul.f32.gmra.mxu0 %v2311
  %v2380 = vpop.f32.mrf.mxu0
  %v2381 = vadd.f32 %v2302, %v2380
  %2382 = vmatmul.f32.gmra.mxu0 %v2314
  %v2383 = vpop.f32.mrf.mxu0
  %v2384 = vadd.f32 %v2307, %v2383
  %2385 = vdwg.mxu0
  %2386 = vmatpush.msra.mxu0 0.0
  %2387 = vmatpush.msra.mxu0 0.0
  %2388 = vmatpush.msra.mxu0 0.0
  %2389 = vmatpush.msra.mxu0 0.0
  %2390 = vmatpush.msra.mxu0 0.0
  %2391 = vmatpush.msra.mxu0 0.0
  %2392 = vmatpush.msra.mxu0 0.0
  %2393 = vmatpush.msra.mxu0 0.0
  %2394 = vmatpush.msra.mxu0 0.0
  %2395 = vmatpush.msra.mxu0 0.0
  %2396 = vmatpush.msra.mxu0 0.0
  %2397 = vmatpush.msra.mxu0 0.0
  %2398 = vmatpush.msra.mxu0 0.0
  %2399 = vmatpush.msra.mxu0 0.0
  %2400 = vmatpush.msra.mxu0 %v2323
  %2401 = vmatpush.msra.mxu0 %v2280
  %2402 = vmatmul.f32.gmra.mxu0 %v2311
  %v2403 = vpop.f32.mrf.mxu0
  %v2404 = vadd.f32 %v2302, %v2403
  %2405 = vmatmul.f32.gmra.mxu0 %v2314
  %v2406 = vpop.f32.mrf.mxu0
  %v2407 = vadd.f32 %v2307, %v2406
  %2408 = vdwg.mxu0
  %2409 = vmatpush.msra.mxu0 0.0
  %2410 = vmatpush.msra.mxu0 0.0
  %2411 = vmatpush.msra.mxu0 0.0
  %2412 = vmatpush.msra.mxu0 0.0
  %2413 = vmatpush.msra.mxu0 0.0
  %2414 = vmatpush.msra.mxu0 0.0
  %2415 = vmatpush.msra.mxu0 0.0
  %2416 = vmatpush.msra.mxu0 0.0
  %2417 = vmatpush.msra.mxu0 0.0
  %2418 = vmatpush.msra.mxu0 0.0
  %2419 = vmatpush.msra.mxu0 0.0
  %2420 = vmatpush.msra.mxu0 0.0
  %2421 = vmatpush.msra.mxu0 0.0
  %2422 = vmatpush.msra.mxu0 0.0
  %2423 = vmatpush.msra.mxu0 %v2326
  %2424 = vmatpush.msra.mxu0 %v2281
  %2425 = vmatmul.f32.gmra.mxu0 %v2311
  %v2426 = vpop.f32.mrf.mxu0
  %v2427 = vadd.f32 %v2302, %v2426
  %2428 = vmatmul.f32.gmra.mxu0 %v2314
  %v2429 = vpop.f32.mrf.mxu0
  %v2430 = vadd.f32 %v2307, %v2429
  %2431 = vdwg.mxu0
  %2432 = vmatpush.msra.mxu0 0.0
  %2433 = vmatpush.msra.mxu0 0.0
  %2434 = vmatpush.msra.mxu0 0.0
  %2435 = vmatpush.msra.mxu0 0.0
  %2436 = vmatpush.msra.mxu0 0.0
  %2437 = vmatpush.msra.mxu0 0.0
  %2438 = vmatpush.msra.mxu0 0.0
  %2439 = vmatpush.msra.mxu0 0.0
  %2440 = vmatpush.msra.mxu0 0.0
  %2441 = vmatpush.msra.mxu0 0.0
  %2442 = vmatpush.msra.mxu0 0.0
  %2443 = vmatpush.msra.mxu0 0.0
  %2444 = vmatpush.msra.mxu0 0.0
  %2445 = vmatpush.msra.mxu0 0.0
  %2446 = vmatpush.msra.mxu0 %v2329
  %2447 = vmatpush.msra.mxu0 %v2282
  %2448 = vmatmul.f32.gmra.mxu0 %v2311
  %v2449 = vpop.f32.mrf.mxu0
  %v2450 = vadd.f32 %v2302, %v2449
  %2451 = vmatmul.f32.gmra.mxu0 %v2314
  %v2452 = vpop.f32.mrf.mxu0
  %v2453 = vadd.f32 %v2307, %v2452
  %2454 = vdwg.mxu0
  %2455 = vmatpush.msra.mxu0 0.0
  %2456 = vmatpush.msra.mxu0 0.0
  %2457 = vmatpush.msra.mxu0 0.0
  %2458 = vmatpush.msra.mxu0 0.0
  %2459 = vmatpush.msra.mxu0 0.0
  %2460 = vmatpush.msra.mxu0 0.0
  %2461 = vmatpush.msra.mxu0 0.0
  %2462 = vmatpush.msra.mxu0 0.0
  %2463 = vmatpush.msra.mxu0 0.0
  %2464 = vmatpush.msra.mxu0 0.0
  %2465 = vmatpush.msra.mxu0 0.0
  %2466 = vmatpush.msra.mxu0 0.0
  %2467 = vmatpush.msra.mxu0 0.0
  %2468 = vmatpush.msra.mxu0 0.0
  %2469 = vmatpush.msra.mxu0 %v2332
  %2470 = vmatpush.msra.mxu0 %v2283
  %2471 = vmatmul.f32.gmra.mxu0 %v2311
  %v2472 = vpop.f32.mrf.mxu0
  %v2473 = vadd.f32 %v2302, %v2472
  %2474 = vmatmul.f32.gmra.mxu0 %v2314
  %v2475 = vpop.f32.mrf.mxu0
  %v2476 = vadd.f32 %v2307, %v2475
  %2477 = vdwg.mxu0
  %2478 = vmatpush.msra.mxu0 0.0
  %2479 = vmatpush.msra.mxu0 0.0
  %2480 = vmatpush.msra.mxu0 0.0
  %2481 = vmatpush.msra.mxu0 0.0
  %2482 = vmatpush.msra.mxu0 0.0
  %2483 = vmatpush.msra.mxu0 0.0
  %2484 = vmatpush.msra.mxu0 0.0
  %2485 = vmatpush.msra.mxu0 0.0
  %2486 = vmatpush.msra.mxu0 0.0
  %2487 = vmatpush.msra.mxu0 0.0
  %2488 = vmatpush.msra.mxu0 0.0
  %2489 = vmatpush.msra.mxu0 0.0
  %2490 = vmatpush.msra.mxu0 0.0
  %2491 = vmatpush.msra.mxu0 0.0
  %2492 = vmatpush.msra.mxu0 %v2335
  %2493 = vmatpush.msra.mxu0 %v2284
  %2494 = vmatmul.f32.gmra.mxu0 %v2311
  %v2495 = vpop.f32.mrf.mxu0
  %v2496 = vadd.f32 %v2302, %v2495
  %2497 = vmatmul.f32.gmra.mxu0 %v2314
  %v2498 = vpop.f32.mrf.mxu0
  %v2499 = vadd.f32 %v2307, %v2498
  %2500 = vdwg.mxu0
  %2501 = vmatpush.msra.mxu0 0.0
  %2502 = vmatpush.msra.mxu0 0.0
  %2503 = vmatpush.msra.mxu0 0.0
  %2504 = vmatpush.msra.mxu0 0.0
  %2505 = vmatpush.msra.mxu0 0.0
  %2506 = vmatpush.msra.mxu0 0.0
  %2507 = vmatpush.msra.mxu0 0.0
  %2508 = vmatpush.msra.mxu0 0.0
  %2509 = vmatpush.msra.mxu0 0.0
  %2510 = vmatpush.msra.mxu0 0.0
  %2511 = vmatpush.msra.mxu0 0.0
  %2512 = vmatpush.msra.mxu0 0.0
  %2513 = vmatpush.msra.mxu0 0.0
  %2514 = vmatpush.msra.mxu0 0.0
  %2515 = vmatpush.msra.mxu0 %v2338
  %2516 = vmatpush.msra.mxu0 %v2285
  %2517 = vmatmul.f32.gmra.mxu0 %v2311
  %v2518 = vpop.f32.mrf.mxu0
  %v2519 = vadd.f32 %v2302, %v2518
  %2520 = vmatmul.f32.gmra.mxu0 %v2314
  %v2521 = vpop.f32.mrf.mxu0
  %v2522 = vadd.f32 %v2307, %v2521
  %2523 = vdwg.mxu0
  %v2524 = vld [vmem:[%s21] sm:$0xff]
  %v2525 = vld [vmem:[%s21 + $0x8] sm:$0xff]
  %v2526 = vld [vmem:[%s22] sm:$0xff]
  %v2527 = vld [vmem:[%s22 + $0x8] sm:$0xff]
  %2529 = vset.pattern.permute.xlu0 0
  %2530 = vperm.xlu0 %2529, %v2524
  %v2531 = vpop.permute.xlu0 %2530
  %2534 = vset.pattern.permute.xlu0 0
  %2535 = vperm.xlu0 %2534, %v2525
  %v2536 = vpop.permute.xlu0 %2535
  %v2538 = vmul.f32 %v2531, %v2358
  %v2539 = vmul.f32 %v2531, %v2381
  %v2540 = vmul.f32 %v2531, %v2404
  %v2541 = vmul.f32 %v2531, %v2427
  %v2542 = vmul.f32 %v2531, %v2450
  %v2543 = vmul.f32 %v2531, %v2473
  %v2544 = vmul.f32 %v2531, %v2496
  %v2545 = vmul.f32 %v2531, %v2519
  %v2546 = vmul.f32 %v2536, %v2361
  %v2547 = vmul.f32 %v2536, %v2384
  %v2548 = vmul.f32 %v2536, %v2407
  %v2549 = vmul.f32 %v2536, %v2430
  %v2550 = vmul.f32 %v2536, %v2453
  %v2551 = vmul.f32 %v2536, %v2476
  %v2552 = vmul.f32 %v2536, %v2499
  %v2553 = vmul.f32 %v2536, %v2522
  %v2554 = vmul.f32 %v2358, 0.70710677
  %v2555 = vmul.f32 %v2381, 0.70710677
  %v2556 = vmul.f32 %v2404, 0.70710677
  %v2557 = vmul.f32 %v2427, 0.70710677
  %v2558 = vmul.f32 %v2450, 0.70710677
  %v2559 = vmul.f32 %v2473, 0.70710677
  %v2560 = vmul.f32 %v2496, 0.70710677
  %v2561 = vmul.f32 %v2519, 0.70710677
  %v2562 = vmul.f32 %v2361, 0.70710677
  %v2563 = vmul.f32 %v2384, 0.70710677
  %v2564 = vmul.f32 %v2407, 0.70710677
  %v2565 = vmul.f32 %v2430, 0.70710677
  %v2566 = vmul.f32 %v2453, 0.70710677
  %v2567 = vmul.f32 %v2476, 0.70710677
  %v2568 = vmul.f32 %v2499, 0.70710677
  %v2569 = vmul.f32 %v2522, 0.70710677
  %vm2570 = vcmp.ge.f32.partialorder %v2554, 0.0
  %vm2571 = vcmp.ge.f32.partialorder %v2555, 0.0
  %vm2572 = vcmp.ge.f32.partialorder %v2556, 0.0
  %vm2573 = vcmp.ge.f32.partialorder %v2557, 0.0
  %vm2574 = vcmp.ge.f32.partialorder %v2558, 0.0
  %vm2575 = vcmp.ge.f32.partialorder %v2559, 0.0
  %vm2576 = vcmp.ge.f32.partialorder %v2560, 0.0
  %vm2577 = vcmp.ge.f32.partialorder %v2561, 0.0
  %vm2578 = vcmp.ge.f32.partialorder %v2562, 0.0
  %vm2579 = vcmp.ge.f32.partialorder %v2563, 0.0
  %vm2580 = vcmp.ge.f32.partialorder %v2564, 0.0
  %vm2581 = vcmp.ge.f32.partialorder %v2565, 0.0
  %vm2582 = vcmp.ge.f32.partialorder %v2566, 0.0
  %vm2583 = vcmp.ge.f32.partialorder %v2567, 0.0
  %vm2584 = vcmp.ge.f32.partialorder %v2568, 0.0
  %vm2585 = vcmp.ge.f32.partialorder %v2569, 0.0
  %v2586 = vsel %vm2570, 1.0, -1.0
  %v2587 = vsel %vm2571, 1.0, -1.0
  %v2588 = vsel %vm2572, 1.0, -1.0
  %v2589 = vsel %vm2573, 1.0, -1.0
  %v2590 = vsel %vm2574, 1.0, -1.0
  %v2591 = vsel %vm2575, 1.0, -1.0
  %v2592 = vsel %vm2576, 1.0, -1.0
  %v2593 = vsel %vm2577, 1.0, -1.0
  %v2594 = vsel %vm2578, 1.0, -1.0
  %v2595 = vsel %vm2579, 1.0, -1.0
  %v2596 = vsel %vm2580, 1.0, -1.0
  %v2597 = vsel %vm2581, 1.0, -1.0
  %v2598 = vsel %vm2582, 1.0, -1.0
  %v2599 = vsel %vm2583, 1.0, -1.0
  %v2600 = vsel %vm2584, 1.0, -1.0
  %v2601 = vsel %vm2585, 1.0, -1.0
  %v2602 = vand.u32 2147483647, %v2554
  %v2603 = vand.u32 2147483647, %v2555
  %v2604 = vand.u32 2147483647, %v2556
  %v2605 = vand.u32 2147483647, %v2557
  %v2606 = vand.u32 2147483647, %v2558
  %v2607 = vand.u32 2147483647, %v2559
  %v2608 = vand.u32 2147483647, %v2560
  %v2609 = vand.u32 2147483647, %v2561
  %v2610 = vand.u32 2147483647, %v2562
  %v2611 = vand.u32 2147483647, %v2563
  %v2612 = vand.u32 2147483647, %v2564
  %v2613 = vand.u32 2147483647, %v2565
  %v2614 = vand.u32 2147483647, %v2566
  %v2615 = vand.u32 2147483647, %v2567
  %v2616 = vand.u32 2147483647, %v2568
  %v2617 = vand.u32 2147483647, %v2569
  %v2618 = vmul.f32 %v2602, 0.3275911
  %v2619 = vmul.f32 %v2603, 0.3275911
  %v2620 = vmul.f32 %v2604, 0.3275911
  %v2621 = vmul.f32 %v2605, 0.3275911
  %v2622 = vmul.f32 %v2606, 0.3275911
  %v2623 = vmul.f32 %v2607, 0.3275911
  %v2624 = vmul.f32 %v2608, 0.3275911
  %v2625 = vmul.f32 %v2609, 0.3275911
  %v2626 = vmul.f32 %v2610, 0.3275911
  %v2627 = vmul.f32 %v2611, 0.3275911
  %v2628 = vmul.f32 %v2612, 0.3275911
  %v2629 = vmul.f32 %v2613, 0.3275911
  %v2630 = vmul.f32 %v2614, 0.3275911
  %v2631 = vmul.f32 %v2615, 0.3275911
  %v2632 = vmul.f32 %v2616, 0.3275911
  %v2633 = vmul.f32 %v2617, 0.3275911
  %v2634 = vadd.f32 %v2618, 1.0
  %v2635 = vadd.f32 %v2619, 1.0
  %v2636 = vadd.f32 %v2620, 1.0
  %v2637 = vadd.f32 %v2621, 1.0
  %v2638 = vadd.f32 %v2622, 1.0
  %v2639 = vadd.f32 %v2623, 1.0
  %v2640 = vadd.f32 %v2624, 1.0
  %v2641 = vadd.f32 %v2625, 1.0
  %v2642 = vadd.f32 %v2626, 1.0
  %v2643 = vadd.f32 %v2627, 1.0
  %v2644 = vadd.f32 %v2628, 1.0
  %v2645 = vadd.f32 %v2629, 1.0
  %v2646 = vadd.f32 %v2630, 1.0
  %v2647 = vadd.f32 %v2631, 1.0
  %v2648 = vadd.f32 %v2632, 1.0
  %v2649 = vadd.f32 %v2633, 1.0
  %v2650 = vrcp.pop %v2634
  %v2651 = vmul.f32 %v2634, %v2650
  %v2652 = vsub.f32 1.0, %v2651
  %v2653 = vmul.f32 %v2650, %v2652
  %v2654 = vadd.f32 %v2650, %v2653
  %vm2655 = vweird.f32 %v2634
  %vm2656 = vweird.f32 %v2650
  %vm2657 = vmor %vm2655, %vm2656
  %v2658 = vsel %vm2657, %v2650, %v2654
  %v2659 = vand.u32 2147483647, %v2634
  %vm2660 = vcmp.eq.f32.partialorder %v2659, 8.507059e+37
  %v2661 = vand.u32 %v2634, 2147483648
  %v2662 = vor.u32 1.1754944e-38, %v2661
  %v2663 = vsel %vm2660, %v2662, %v2658
  %v2664 = vmul.f32 1.0, %v2663
  %v2665 = vrcp.pop %v2635
  %v2666 = vmul.f32 %v2635, %v2665
  %v2667 = vsub.f32 1.0, %v2666
  %v2668 = vmul.f32 %v2665, %v2667
  %v2669 = vadd.f32 %v2665, %v2668
  %vm2670 = vweird.f32 %v2635
  %vm2671 = vweird.f32 %v2665
  %vm2672 = vmor %vm2670, %vm2671
  %v2673 = vsel %vm2672, %v2665, %v2669
  %v2674 = vand.u32 2147483647, %v2635
  %vm2675 = vcmp.eq.f32.partialorder %v2674, 8.507059e+37
  %v2676 = vand.u32 %v2635, 2147483648
  %v2677 = vor.u32 1.1754944e-38, %v2676
  %v2678 = vsel %vm2675, %v2677, %v2673
  %v2679 = vmul.f32 1.0, %v2678
  %v2680 = vrcp.pop %v2636
  %v2681 = vmul.f32 %v2636, %v2680
  %v2682 = vsub.f32 1.0, %v2681
  %v2683 = vmul.f32 %v2680, %v2682
  %v2684 = vadd.f32 %v2680, %v2683
  %vm2685 = vweird.f32 %v2636
  %vm2686 = vweird.f32 %v2680
  %vm2687 = vmor %vm2685, %vm2686
  %v2688 = vsel %vm2687, %v2680, %v2684
  %v2689 = vand.u32 2147483647, %v2636
  %vm2690 = vcmp.eq.f32.partialorder %v2689, 8.507059e+37
  %v2691 = vand.u32 %v2636, 2147483648
  %v2692 = vor.u32 1.1754944e-38, %v2691
  %v2693 = vsel %vm2690, %v2692, %v2688
  %v2694 = vmul.f32 1.0, %v2693
  %v2695 = vrcp.pop %v2637
  %v2696 = vmul.f32 %v2637, %v2695
  %v2697 = vsub.f32 1.0, %v2696
  %v2698 = vmul.f32 %v2695, %v2697
  %v2699 = vadd.f32 %v2695, %v2698
  %vm2700 = vweird.f32 %v2637
  %vm2701 = vweird.f32 %v2695
  %vm2702 = vmor %vm2700, %vm2701
  %v2703 = vsel %vm2702, %v2695, %v2699
  %v2704 = vand.u32 2147483647, %v2637
  %vm2705 = vcmp.eq.f32.partialorder %v2704, 8.507059e+37
  %v2706 = vand.u32 %v2637, 2147483648
  %v2707 = vor.u32 1.1754944e-38, %v2706
  %v2708 = vsel %vm2705, %v2707, %v2703
  %v2709 = vmul.f32 1.0, %v2708
  %v2710 = vrcp.pop %v2638
  %v2711 = vmul.f32 %v2638, %v2710
  %v2712 = vsub.f32 1.0, %v2711
  %v2713 = vmul.f32 %v2710, %v2712
  %v2714 = vadd.f32 %v2710, %v2713
  %vm2715 = vweird.f32 %v2638
  %vm2716 = vweird.f32 %v2710
  %vm2717 = vmor %vm2715, %vm2716
  %v2718 = vsel %vm2717, %v2710, %v2714
  %v2719 = vand.u32 2147483647, %v2638
  %vm2720 = vcmp.eq.f32.partialorder %v2719, 8.507059e+37
  %v2721 = vand.u32 %v2638, 2147483648
  %v2722 = vor.u32 1.1754944e-38, %v2721
  %v2723 = vsel %vm2720, %v2722, %v2718
  %v2724 = vmul.f32 1.0, %v2723
  %v2725 = vrcp.pop %v2639
  %v2726 = vmul.f32 %v2639, %v2725
  %v2727 = vsub.f32 1.0, %v2726
  %v2728 = vmul.f32 %v2725, %v2727
  %v2729 = vadd.f32 %v2725, %v2728
  %vm2730 = vweird.f32 %v2639
  %vm2731 = vweird.f32 %v2725
  %vm2732 = vmor %vm2730, %vm2731
  %v2733 = vsel %vm2732, %v2725, %v2729
  %v2734 = vand.u32 2147483647, %v2639
  %vm2735 = vcmp.eq.f32.partialorder %v2734, 8.507059e+37
  %v2736 = vand.u32 %v2639, 2147483648
  %v2737 = vor.u32 1.1754944e-38, %v2736
  %v2738 = vsel %vm2735, %v2737, %v2733
  %v2739 = vmul.f32 1.0, %v2738
  %v2740 = vrcp.pop %v2640
  %v2741 = vmul.f32 %v2640, %v2740
  %v2742 = vsub.f32 1.0, %v2741
  %v2743 = vmul.f32 %v2740, %v2742
  %v2744 = vadd.f32 %v2740, %v2743
  %vm2745 = vweird.f32 %v2640
  %vm2746 = vweird.f32 %v2740
  %vm2747 = vmor %vm2745, %vm2746
  %v2748 = vsel %vm2747, %v2740, %v2744
  %v2749 = vand.u32 2147483647, %v2640
  %vm2750 = vcmp.eq.f32.partialorder %v2749, 8.507059e+37
  %v2751 = vand.u32 %v2640, 2147483648
  %v2752 = vor.u32 1.1754944e-38, %v2751
  %v2753 = vsel %vm2750, %v2752, %v2748
  %v2754 = vmul.f32 1.0, %v2753
  %v2755 = vrcp.pop %v2641
  %v2756 = vmul.f32 %v2641, %v2755
  %v2757 = vsub.f32 1.0, %v2756
  %v2758 = vmul.f32 %v2755, %v2757
  %v2759 = vadd.f32 %v2755, %v2758
  %vm2760 = vweird.f32 %v2641
  %vm2761 = vweird.f32 %v2755
  %vm2762 = vmor %vm2760, %vm2761
  %v2763 = vsel %vm2762, %v2755, %v2759
  %v2764 = vand.u32 2147483647, %v2641
  %vm2765 = vcmp.eq.f32.partialorder %v2764, 8.507059e+37
  %v2766 = vand.u32 %v2641, 2147483648
  %v2767 = vor.u32 1.1754944e-38, %v2766
  %v2768 = vsel %vm2765, %v2767, %v2763
  %v2769 = vmul.f32 1.0, %v2768
  %v2770 = vrcp.pop %v2642
  %v2771 = vmul.f32 %v2642, %v2770
  %v2772 = vsub.f32 1.0, %v2771
  %v2773 = vmul.f32 %v2770, %v2772
  %v2774 = vadd.f32 %v2770, %v2773
  %vm2775 = vweird.f32 %v2642
  %vm2776 = vweird.f32 %v2770
  %vm2777 = vmor %vm2775, %vm2776
  %v2778 = vsel %vm2777, %v2770, %v2774
  %v2779 = vand.u32 2147483647, %v2642
  %vm2780 = vcmp.eq.f32.partialorder %v2779, 8.507059e+37
  %v2781 = vand.u32 %v2642, 2147483648
  %v2782 = vor.u32 1.1754944e-38, %v2781
  %v2783 = vsel %vm2780, %v2782, %v2778
  %v2784 = vmul.f32 1.0, %v2783
  %v2785 = vrcp.pop %v2643
  %v2786 = vmul.f32 %v2643, %v2785
  %v2787 = vsub.f32 1.0, %v2786
  %v2788 = vmul.f32 %v2785, %v2787
  %v2789 = vadd.f32 %v2785, %v2788
  %vm2790 = vweird.f32 %v2643
  %vm2791 = vweird.f32 %v2785
  %vm2792 = vmor %vm2790, %vm2791
  %v2793 = vsel %vm2792, %v2785, %v2789
  %v2794 = vand.u32 2147483647, %v2643
  %vm2795 = vcmp.eq.f32.partialorder %v2794, 8.507059e+37
  %v2796 = vand.u32 %v2643, 2147483648
  %v2797 = vor.u32 1.1754944e-38, %v2796
  %v2798 = vsel %vm2795, %v2797, %v2793
  %v2799 = vmul.f32 1.0, %v2798
  %v2800 = vrcp.pop %v2644
  %v2801 = vmul.f32 %v2644, %v2800
  %v2802 = vsub.f32 1.0, %v2801
  %v2803 = vmul.f32 %v2800, %v2802
  %v2804 = vadd.f32 %v2800, %v2803
  %vm2805 = vweird.f32 %v2644
  %vm2806 = vweird.f32 %v2800
  %vm2807 = vmor %vm2805, %vm2806
  %v2808 = vsel %vm2807, %v2800, %v2804
  %v2809 = vand.u32 2147483647, %v2644
  %vm2810 = vcmp.eq.f32.partialorder %v2809, 8.507059e+37
  %v2811 = vand.u32 %v2644, 2147483648
  %v2812 = vor.u32 1.1754944e-38, %v2811
  %v2813 = vsel %vm2810, %v2812, %v2808
  %v2814 = vmul.f32 1.0, %v2813
  %v2815 = vrcp.pop %v2645
  %v2816 = vmul.f32 %v2645, %v2815
  %v2817 = vsub.f32 1.0, %v2816
  %v2818 = vmul.f32 %v2815, %v2817
  %v2819 = vadd.f32 %v2815, %v2818
  %vm2820 = vweird.f32 %v2645
  %vm2821 = vweird.f32 %v2815
  %vm2822 = vmor %vm2820, %vm2821
  %v2823 = vsel %vm2822, %v2815, %v2819
  %v2824 = vand.u32 2147483647, %v2645
  %vm2825 = vcmp.eq.f32.partialorder %v2824, 8.507059e+37
  %v2826 = vand.u32 %v2645, 2147483648
  %v2827 = vor.u32 1.1754944e-38, %v2826
  %v2828 = vsel %vm2825, %v2827, %v2823
  %v2829 = vmul.f32 1.0, %v2828
  %v2830 = vrcp.pop %v2646
  %v2831 = vmul.f32 %v2646, %v2830
  %v2832 = vsub.f32 1.0, %v2831
  %v2833 = vmul.f32 %v2830, %v2832
  %v2834 = vadd.f32 %v2830, %v2833
  %vm2835 = vweird.f32 %v2646
  %vm2836 = vweird.f32 %v2830
  %vm2837 = vmor %vm2835, %vm2836
  %v2838 = vsel %vm2837, %v2830, %v2834
  %v2839 = vand.u32 2147483647, %v2646
  %vm2840 = vcmp.eq.f32.partialorder %v2839, 8.507059e+37
  %v2841 = vand.u32 %v2646, 2147483648
  %v2842 = vor.u32 1.1754944e-38, %v2841
  %v2843 = vsel %vm2840, %v2842, %v2838
  %v2844 = vmul.f32 1.0, %v2843
  %v2845 = vrcp.pop %v2647
  %v2846 = vmul.f32 %v2647, %v2845
  %v2847 = vsub.f32 1.0, %v2846
  %v2848 = vmul.f32 %v2845, %v2847
  %v2849 = vadd.f32 %v2845, %v2848
  %vm2850 = vweird.f32 %v2647
  %vm2851 = vweird.f32 %v2845
  %vm2852 = vmor %vm2850, %vm2851
  %v2853 = vsel %vm2852, %v2845, %v2849
  %v2854 = vand.u32 2147483647, %v2647
  %vm2855 = vcmp.eq.f32.partialorder %v2854, 8.507059e+37
  %v2856 = vand.u32 %v2647, 2147483648
  %v2857 = vor.u32 1.1754944e-38, %v2856
  %v2858 = vsel %vm2855, %v2857, %v2853
  %v2859 = vmul.f32 1.0, %v2858
  %v2860 = vrcp.pop %v2648
  %v2861 = vmul.f32 %v2648, %v2860
  %v2862 = vsub.f32 1.0, %v2861
  %v2863 = vmul.f32 %v2860, %v2862
  %v2864 = vadd.f32 %v2860, %v2863
  %vm2865 = vweird.f32 %v2648
  %vm2866 = vweird.f32 %v2860
  %vm2867 = vmor %vm2865, %vm2866
  %v2868 = vsel %vm2867, %v2860, %v2864
  %v2869 = vand.u32 2147483647, %v2648
  %vm2870 = vcmp.eq.f32.partialorder %v2869, 8.507059e+37
  %v2871 = vand.u32 %v2648, 2147483648
  %v2872 = vor.u32 1.1754944e-38, %v2871
  %v2873 = vsel %vm2870, %v2872, %v2868
  %v2874 = vmul.f32 1.0, %v2873
  %v2875 = vrcp.pop %v2649
  %v2876 = vmul.f32 %v2649, %v2875
  %v2877 = vsub.f32 1.0, %v2876
  %v2878 = vmul.f32 %v2875, %v2877
  %v2879 = vadd.f32 %v2875, %v2878
  %vm2880 = vweird.f32 %v2649
  %vm2881 = vweird.f32 %v2875
  %vm2882 = vmor %vm2880, %vm2881
  %v2883 = vsel %vm2882, %v2875, %v2879
  %v2884 = vand.u32 2147483647, %v2649
  %vm2885 = vcmp.eq.f32.partialorder %v2884, 8.507059e+37
  %v2886 = vand.u32 %v2649, 2147483648
  %v2887 = vor.u32 1.1754944e-38, %v2886
  %v2888 = vsel %vm2885, %v2887, %v2883
  %v2889 = vmul.f32 1.0, %v2888
  %v2890 = vmul.f32 %v2664, 1.0614054
  %v2891 = vmul.f32 %v2679, 1.0614054
  %v2892 = vmul.f32 %v2694, 1.0614054
  %v2893 = vmul.f32 %v2709, 1.0614054
  %v2894 = vmul.f32 %v2724, 1.0614054
  %v2895 = vmul.f32 %v2739, 1.0614054
  %v2896 = vmul.f32 %v2754, 1.0614054
  %v2897 = vmul.f32 %v2769, 1.0614054
  %v2898 = vmul.f32 %v2784, 1.0614054
  %v2899 = vmul.f32 %v2799, 1.0614054
  %v2900 = vmul.f32 %v2814, 1.0614054
  %v2901 = vmul.f32 %v2829, 1.0614054
  %v2902 = vmul.f32 %v2844, 1.0614054
  %v2903 = vmul.f32 %v2859, 1.0614054
  %v2904 = vmul.f32 %v2874, 1.0614054
  %v2905 = vmul.f32 %v2889, 1.0614054
  %v2906 = vadd.f32 %v2890, -1.4531521
  %v2907 = vadd.f32 %v2891, -1.4531521
  %v2908 = vadd.f32 %v2892, -1.4531521
  %v2909 = vadd.f32 %v2893, -1.4531521
  %v2910 = vadd.f32 %v2894, -1.4531521
  %v2911 = vadd.f32 %v2895, -1.4531521
  %v2912 = vadd.f32 %v2896, -1.4531521
  %v2913 = vadd.f32 %v2897, -1.4531521
  %v2914 = vadd.f32 %v2898, -1.4531521
  %v2915 = vadd.f32 %v2899, -1.4531521
  %v2916 = vadd.f32 %v2900, -1.4531521
  %v2917 = vadd.f32 %v2901, -1.4531521
  %v2918 = vadd.f32 %v2902, -1.4531521
  %v2919 = vadd.f32 %v2903, -1.4531521
  %v2920 = vadd.f32 %v2904, -1.4531521
  %v2921 = vadd.f32 %v2905, -1.4531521
  %v2922 = vmul.f32 %v2906, %v2664
  %v2923 = vmul.f32 %v2907, %v2679
  %v2924 = vmul.f32 %v2908, %v2694
  %v2925 = vmul.f32 %v2909, %v2709
  %v2926 = vmul.f32 %v2910, %v2724
  %v2927 = vmul.f32 %v2911, %v2739
  %v2928 = vmul.f32 %v2912, %v2754
  %v2929 = vmul.f32 %v2913, %v2769
  %v2930 = vmul.f32 %v2914, %v2784
  %v2931 = vmul.f32 %v2915, %v2799
  %v2932 = vmul.f32 %v2916, %v2814
  %v2933 = vmul.f32 %v2917, %v2829
  %v2934 = vmul.f32 %v2918, %v2844
  %v2935 = vmul.f32 %v2919, %v2859
  %v2936 = vmul.f32 %v2920, %v2874
  %v2937 = vmul.f32 %v2921, %v2889
  %v2938 = vadd.f32 %v2922, 1.4214138
  %v2939 = vadd.f32 %v2923, 1.4214138
  %v2940 = vadd.f32 %v2924, 1.4214138
  %v2941 = vadd.f32 %v2925, 1.4214138
  %v2942 = vadd.f32 %v2926, 1.4214138
  %v2943 = vadd.f32 %v2927, 1.4214138
  %v2944 = vadd.f32 %v2928, 1.4214138
  %v2945 = vadd.f32 %v2929, 1.4214138
  %v2946 = vadd.f32 %v2930, 1.4214138
  %v2947 = vadd.f32 %v2931, 1.4214138
  %v2948 = vadd.f32 %v2932, 1.4214138
  %v2949 = vadd.f32 %v2933, 1.4214138
  %v2950 = vadd.f32 %v2934, 1.4214138
  %v2951 = vadd.f32 %v2935, 1.4214138
  %v2952 = vadd.f32 %v2936, 1.4214138
  %v2953 = vadd.f32 %v2937, 1.4214138
  %v2954 = vmul.f32 %v2938, %v2664
  %v2955 = vmul.f32 %v2939, %v2679
  %v2956 = vmul.f32 %v2940, %v2694
  %v2957 = vmul.f32 %v2941, %v2709
  %v2958 = vmul.f32 %v2942, %v2724
  %v2959 = vmul.f32 %v2943, %v2739
  %v2960 = vmul.f32 %v2944, %v2754
  %v2961 = vmul.f32 %v2945, %v2769
  %v2962 = vmul.f32 %v2946, %v2784
  %v2963 = vmul.f32 %v2947, %v2799
  %v2964 = vmul.f32 %v2948, %v2814
  %v2965 = vmul.f32 %v2949, %v2829
  %v2966 = vmul.f32 %v2950, %v2844
  %v2967 = vmul.f32 %v2951, %v2859
  %v2968 = vmul.f32 %v2952, %v2874
  %v2969 = vmul.f32 %v2953, %v2889
  %v2970 = vadd.f32 %v2954, -0.28449672
  %v2971 = vadd.f32 %v2955, -0.28449672
  %v2972 = vadd.f32 %v2956, -0.28449672
  %v2973 = vadd.f32 %v2957, -0.28449672
  %v2974 = vadd.f32 %v2958, -0.28449672
  %v2975 = vadd.f32 %v2959, -0.28449672
  %v2976 = vadd.f32 %v2960, -0.28449672
  %v2977 = vadd.f32 %v2961, -0.28449672
  %v2978 = vadd.f32 %v2962, -0.28449672
  %v2979 = vadd.f32 %v2963, -0.28449672
  %v2980 = vadd.f32 %v2964, -0.28449672
  %v2981 = vadd.f32 %v2965, -0.28449672
  %v2982 = vadd.f32 %v2966, -0.28449672
  %v2983 = vadd.f32 %v2967, -0.28449672
  %v2984 = vadd.f32 %v2968, -0.28449672
  %v2985 = vadd.f32 %v2969, -0.28449672
  %v2986 = vmul.f32 %v2970, %v2664
  %v2987 = vmul.f32 %v2971, %v2679
  %v2988 = vmul.f32 %v2972, %v2694
  %v2989 = vmul.f32 %v2973, %v2709
  %v2990 = vmul.f32 %v2974, %v2724
  %v2991 = vmul.f32 %v2975, %v2739
  %v2992 = vmul.f32 %v2976, %v2754
  %v2993 = vmul.f32 %v2977, %v2769
  %v2994 = vmul.f32 %v2978, %v2784
  %v2995 = vmul.f32 %v2979, %v2799
  %v2996 = vmul.f32 %v2980, %v2814
  %v2997 = vmul.f32 %v2981, %v2829
  %v2998 = vmul.f32 %v2982, %v2844
  %v2999 = vmul.f32 %v2983, %v2859
  %v3000 = vmul.f32 %v2984, %v2874
  %v3001 = vmul.f32 %v2985, %v2889
  %v3002 = vadd.f32 %v2986, 0.2548296
  %v3003 = vadd.f32 %v2987, 0.2548296
  %v3004 = vadd.f32 %v2988, 0.2548296
  %v3005 = vadd.f32 %v2989, 0.2548296
  %v3006 = vadd.f32 %v2990, 0.2548296
  %v3007 = vadd.f32 %v2991, 0.2548296
  %v3008 = vadd.f32 %v2992, 0.2548296
  %v3009 = vadd.f32 %v2993, 0.2548296
  %v3010 = vadd.f32 %v2994, 0.2548296
  %v3011 = vadd.f32 %v2995, 0.2548296
  %v3012 = vadd.f32 %v2996, 0.2548296
  %v3013 = vadd.f32 %v2997, 0.2548296
  %v3014 = vadd.f32 %v2998, 0.2548296
  %v3015 = vadd.f32 %v2999, 0.2548296
  %v3016 = vadd.f32 %v3000, 0.2548296
  %v3017 = vadd.f32 %v3001, 0.2548296
  %v3018 = vmul.f32 %v3002, %v2664
  %v3019 = vmul.f32 %v3003, %v2679
  %v3020 = vmul.f32 %v3004, %v2694
  %v3021 = vmul.f32 %v3005, %v2709
  %v3022 = vmul.f32 %v3006, %v2724
  %v3023 = vmul.f32 %v3007, %v2739
  %v3024 = vmul.f32 %v3008, %v2754
  %v3025 = vmul.f32 %v3009, %v2769
  %v3026 = vmul.f32 %v3010, %v2784
  %v3027 = vmul.f32 %v3011, %v2799
  %v3028 = vmul.f32 %v3012, %v2814
  %v3029 = vmul.f32 %v3013, %v2829
  %v3030 = vmul.f32 %v3014, %v2844
  %v3031 = vmul.f32 %v3015, %v2859
  %v3032 = vmul.f32 %v3016, %v2874
  %v3033 = vmul.f32 %v3017, %v2889
  %v3034 = vsub.f32 0.0, %v2602
  %v3035 = vsub.f32 0.0, %v2603
  %v3036 = vsub.f32 0.0, %v2604
  %v3037 = vsub.f32 0.0, %v2605
  %v3038 = vsub.f32 0.0, %v2606
  %v3039 = vsub.f32 0.0, %v2607
  %v3040 = vsub.f32 0.0, %v2608
  %v3041 = vsub.f32 0.0, %v2609
  %v3042 = vsub.f32 0.0, %v2610
  %v3043 = vsub.f32 0.0, %v2611
  %v3044 = vsub.f32 0.0, %v2612
  %v3045 = vsub.f32 0.0, %v2613
  %v3046 = vsub.f32 0.0, %v2614
  %v3047 = vsub.f32 0.0, %v2615
  %v3048 = vsub.f32 0.0, %v2616
  %v3049 = vsub.f32 0.0, %v2617
  %v3050 = vmul.f32 %v3034, %v2602
  %v3051 = vmul.f32 %v3035, %v2603
  %v3052 = vmul.f32 %v3036, %v2604
  %v3053 = vmul.f32 %v3037, %v2605
  %v3054 = vmul.f32 %v3038, %v2606
  %v3055 = vmul.f32 %v3039, %v2607
  %v3056 = vmul.f32 %v3040, %v2608
  %v3057 = vmul.f32 %v3041, %v2609
  %v3058 = vmul.f32 %v3042, %v2610
  %v3059 = vmul.f32 %v3043, %v2611
  %v3060 = vmul.f32 %v3044, %v2612
  %v3061 = vmul.f32 %v3045, %v2613
  %v3062 = vmul.f32 %v3046, %v2614
  %v3063 = vmul.f32 %v3047, %v2615
  %v3064 = vmul.f32 %v3048, %v2616
  %v3065 = vmul.f32 %v3049, %v2617
  %v3066 = vmul.f32 %v3050, 1.442695
  %v3067 = vpow.pop %v3066
  %v3068 = vmul.f32 %v3051, 1.442695
  %v3069 = vpow.pop %v3068
  %v3070 = vmul.f32 %v3052, 1.442695
  %v3071 = vpow.pop %v3070
  %v3072 = vmul.f32 %v3053, 1.442695
  %v3073 = vpow.pop %v3072
  %v3074 = vmul.f32 %v3054, 1.442695
  %v3075 = vpow.pop %v3074
  %v3076 = vmul.f32 %v3055, 1.442695
  %v3077 = vpow.pop %v3076
  %v3078 = vmul.f32 %v3056, 1.442695
  %v3079 = vpow.pop %v3078
  %v3080 = vmul.f32 %v3057, 1.442695
  %v3081 = vpow.pop %v3080
  %v3082 = vmul.f32 %v3058, 1.442695
  %v3083 = vpow.pop %v3082
  %v3084 = vmul.f32 %v3059, 1.442695
  %v3085 = vpow.pop %v3084
  %v3086 = vmul.f32 %v3060, 1.442695
  %v3087 = vpow.pop %v3086
  %v3088 = vmul.f32 %v3061, 1.442695
  %v3089 = vpow.pop %v3088
  %v3090 = vmul.f32 %v3062, 1.442695
  %v3091 = vpow.pop %v3090
  %v3092 = vmul.f32 %v3063, 1.442695
  %v3093 = vpow.pop %v3092
  %v3094 = vmul.f32 %v3064, 1.442695
  %v3095 = vpow.pop %v3094
  %v3096 = vmul.f32 %v3065, 1.442695
  %v3097 = vpow.pop %v3096
  %v3098 = vmul.f32 %v3018, %v3067
  %v3099 = vmul.f32 %v3019, %v3069
  %v3100 = vmul.f32 %v3020, %v3071
  %v3101 = vmul.f32 %v3021, %v3073
  %v3102 = vmul.f32 %v3022, %v3075
  %v3103 = vmul.f32 %v3023, %v3077
  %v3104 = vmul.f32 %v3024, %v3079
  %v3105 = vmul.f32 %v3025, %v3081
  %v3106 = vmul.f32 %v3026, %v3083
  %v3107 = vmul.f32 %v3027, %v3085
  %v3108 = vmul.f32 %v3028, %v3087
  %v3109 = vmul.f32 %v3029, %v3089
  %v3110 = vmul.f32 %v3030, %v3091
  %v3111 = vmul.f32 %v3031, %v3093
  %v3112 = vmul.f32 %v3032, %v3095
  %v3113 = vmul.f32 %v3033, %v3097
  %v3114 = vsub.f32 1.0, %v3098
  %v3115 = vsub.f32 1.0, %v3099
  %v3116 = vsub.f32 1.0, %v3100
  %v3117 = vsub.f32 1.0, %v3101
  %v3118 = vsub.f32 1.0, %v3102
  %v3119 = vsub.f32 1.0, %v3103
  %v3120 = vsub.f32 1.0, %v3104
  %v3121 = vsub.f32 1.0, %v3105
  %v3122 = vsub.f32 1.0, %v3106
  %v3123 = vsub.f32 1.0, %v3107
  %v3124 = vsub.f32 1.0, %v3108
  %v3125 = vsub.f32 1.0, %v3109
  %v3126 = vsub.f32 1.0, %v3110
  %v3127 = vsub.f32 1.0, %v3111
  %v3128 = vsub.f32 1.0, %v3112
  %v3129 = vsub.f32 1.0, %v3113
  %v3130 = vmul.f32 %v2586, %v3114
  %v3131 = vmul.f32 %v2587, %v3115
  %v3132 = vmul.f32 %v2588, %v3116
  %v3133 = vmul.f32 %v2589, %v3117
  %v3134 = vmul.f32 %v2590, %v3118
  %v3135 = vmul.f32 %v2591, %v3119
  %v3136 = vmul.f32 %v2592, %v3120
  %v3137 = vmul.f32 %v2593, %v3121
  %v3138 = vmul.f32 %v2594, %v3122
  %v3139 = vmul.f32 %v2595, %v3123
  %v3140 = vmul.f32 %v2596, %v3124
  %v3141 = vmul.f32 %v2597, %v3125
  %v3142 = vmul.f32 %v2598, %v3126
  %v3143 = vmul.f32 %v2599, %v3127
  %v3144 = vmul.f32 %v2600, %v3128
  %v3145 = vmul.f32 %v2601, %v3129
  %v3146 = vadd.f32 %v3130, 1.0
  %v3147 = vadd.f32 %v3131, 1.0
  %v3148 = vadd.f32 %v3132, 1.0
  %v3149 = vadd.f32 %v3133, 1.0
  %v3150 = vadd.f32 %v3134, 1.0
  %v3151 = vadd.f32 %v3135, 1.0
  %v3152 = vadd.f32 %v3136, 1.0
  %v3153 = vadd.f32 %v3137, 1.0
  %v3154 = vadd.f32 %v3138, 1.0
  %v3155 = vadd.f32 %v3139, 1.0
  %v3156 = vadd.f32 %v3140, 1.0
  %v3157 = vadd.f32 %v3141, 1.0
  %v3158 = vadd.f32 %v3142, 1.0
  %v3159 = vadd.f32 %v3143, 1.0
  %v3160 = vadd.f32 %v3144, 1.0
  %v3161 = vadd.f32 %v3145, 1.0
  %v3162 = vmul.f32 %v2538, %v3146
  %v3163 = vmul.f32 %v2539, %v3147
  %v3164 = vmul.f32 %v2540, %v3148
  %v3165 = vmul.f32 %v2541, %v3149
  %v3166 = vmul.f32 %v2542, %v3150
  %v3167 = vmul.f32 %v2543, %v3151
  %v3168 = vmul.f32 %v2544, %v3152
  %v3169 = vmul.f32 %v2545, %v3153
  %v3170 = vmul.f32 %v2546, %v3154
  %v3171 = vmul.f32 %v2547, %v3155
  %v3172 = vmul.f32 %v2548, %v3156
  %v3173 = vmul.f32 %v2549, %v3157
  %v3174 = vmul.f32 %v2550, %v3158
  %v3175 = vmul.f32 %v2551, %v3159
  %v3176 = vmul.f32 %v2552, %v3160
  %v3177 = vmul.f32 %v2553, %v3161
  %3179 = vset.pattern.permute.xlu0 0
  %3180 = vperm.xlu0 %3179, %v2526
  %v3181 = vpop.permute.xlu0 %3180
  %3184 = vset.pattern.permute.xlu0 0
  %3185 = vperm.xlu0 %3184, %v2527
  %v3186 = vpop.permute.xlu0 %3185
  %v3188 = vadd.f32 %v3162, %v3181
  %v3189 = vadd.f32 %v3163, %v3181
  %v3190 = vadd.f32 %v3164, %v3181
  %v3191 = vadd.f32 %v3165, %v3181
  %v3192 = vadd.f32 %v3166, %v3181
  %v3193 = vadd.f32 %v3167, %v3181
  %v3194 = vadd.f32 %v3168, %v3181
  %v3195 = vadd.f32 %v3169, %v3181
  %v3196 = vadd.f32 %v3170, %v3186
  %v3197 = vadd.f32 %v3171, %v3186
  %v3198 = vadd.f32 %v3172, %v3186
  %v3199 = vadd.f32 %v3173, %v3186
  %v3200 = vadd.f32 %v3174, %v3186
  %v3201 = vadd.f32 %v3175, %v3186
  %v3202 = vadd.f32 %v3176, %v3186
  %v3203 = vadd.f32 %v3177, %v3186
  %v3205 = vperm.slane %v2294, 0
  %v3206 = vperm.slane %v2294, 1
  %v3207 = vperm.slane %v2294, 2
  %v3208 = vperm.slane %v2294, 3
  %v3209 = vperm.slane %v2294, 4
  %v3210 = vperm.slane %v2294, 5
  %v3211 = vperm.slane %v2294, 6
  %v3212 = vperm.slane %v2294, 7
  %v3221 = vmul.f32 %v3205, %v3188
  %v3222 = vmul.f32 %v3206, %v3189
  %v3223 = vmul.f32 %v3207, %v3190
  %v3224 = vmul.f32 %v3208, %v3191
  %v3225 = vmul.f32 %v3209, %v3192
  %v3226 = vmul.f32 %v3210, %v3193
  %v3227 = vmul.f32 %v3211, %v3194
  %v3228 = vmul.f32 %v3212, %v3195
  %v3229 = vmul.f32 %v3205, %v3196
  %v3230 = vmul.f32 %v3206, %v3197
  %v3231 = vmul.f32 %v3207, %v3198
  %v3232 = vmul.f32 %v3208, %v3199
  %v3233 = vmul.f32 %v3209, %v3200
  %v3234 = vmul.f32 %v3210, %v3201
  %v3235 = vmul.f32 %v3211, %v3202
  %v3236 = vmul.f32 %v3212, %v3203
  %3237 = vrot.lane.b32.xlu0 %v3221, 23
  %v3238 = vpop.permute.xlu0 %3237
  %3239 = vrot.lane.b32.xlu0 %v3229, 23
  %v3240 = vpop.permute.xlu0 %3239
  %3241 = vrot.lane.b32.xlu0 %v3222, 23
  %v3242 = vpop.permute.xlu0 %3241
  %3243 = vrot.lane.b32.xlu0 %v3230, 23
  %v3244 = vpop.permute.xlu0 %3243
  %3245 = vrot.lane.b32.xlu0 %v3223, 23
  %v3246 = vpop.permute.xlu0 %3245
  %3247 = vrot.lane.b32.xlu0 %v3231, 23
  %v3248 = vpop.permute.xlu0 %3247
  %3249 = vrot.lane.b32.xlu0 %v3224, 23
  %v3250 = vpop.permute.xlu0 %3249
  %3251 = vrot.lane.b32.xlu0 %v3232, 23
  %v3252 = vpop.permute.xlu0 %3251
  %3253 = vrot.lane.b32.xlu0 %v3225, 23
  %v3254 = vpop.permute.xlu0 %3253
  %3255 = vrot.lane.b32.xlu0 %v3233, 23
  %v3256 = vpop.permute.xlu0 %3255
  %3257 = vrot.lane.b32.xlu0 %v3226, 23
  %v3258 = vpop.permute.xlu0 %3257
  %3259 = vrot.lane.b32.xlu0 %v3234, 23
  %v3260 = vpop.permute.xlu0 %3259
  %3261 = vrot.lane.b32.xlu0 %v3227, 23
  %v3262 = vpop.permute.xlu0 %3261
  %3263 = vrot.lane.b32.xlu0 %v3235, 23
  %v3264 = vpop.permute.xlu0 %3263
  %3265 = vrot.lane.b32.xlu0 %v3228, 23
  %v3266 = vpop.permute.xlu0 %3265
  %3267 = vrot.lane.b32.xlu0 %v3236, 23
  %v3268 = vpop.permute.xlu0 %3267
  %v3269 = vsel %vm386, %v3262, %v3266
  %v3270 = vsel %vm386, %v3264, %v3268
  %v3271 = vsel %vm386, %v3258, %v3262
  %v3272 = vsel %vm386, %v3260, %v3264
  %v3273 = vsel %vm386, %v3254, %v3258
  %v3274 = vsel %vm386, %v3256, %v3260
  %v3275 = vsel %vm386, %v3250, %v3254
  %v3276 = vsel %vm386, %v3252, %v3256
  %v3277 = vsel %vm386, %v3246, %v3250
  %v3278 = vsel %vm386, %v3248, %v3252
  %v3279 = vsel %vm386, %v3242, %v3246
  %v3280 = vsel %vm386, %v3244, %v3248
  %v3281 = vsel %vm386, %v3238, %v3242
  %v3282 = vsel %vm386, %v3240, %v3244
  %v3283 = vsel %vm386, %v3266, %v3238
  %v3284 = vsel %vm386, %v3268, %v3240
  %3285 = vrot.lane.b32.xlu0 %v3221, 22
  %v3286 = vpop.permute.xlu0 %3285
  %3287 = vrot.lane.b32.xlu0 %v3229, 22
  %v3288 = vpop.permute.xlu0 %3287
  %3289 = vrot.lane.b32.xlu0 %v3222, 22
  %v3290 = vpop.permute.xlu0 %3289
  %3291 = vrot.lane.b32.xlu0 %v3230, 22
  %v3292 = vpop.permute.xlu0 %3291
  %3293 = vrot.lane.b32.xlu0 %v3223, 22
  %v3294 = vpop.permute.xlu0 %3293
  %3295 = vrot.lane.b32.xlu0 %v3231, 22
  %v3296 = vpop.permute.xlu0 %3295
  %3297 = vrot.lane.b32.xlu0 %v3224, 22
  %v3298 = vpop.permute.xlu0 %3297
  %3299 = vrot.lane.b32.xlu0 %v3232, 22
  %v3300 = vpop.permute.xlu0 %3299
  %3301 = vrot.lane.b32.xlu0 %v3225, 22
  %v3302 = vpop.permute.xlu0 %3301
  %3303 = vrot.lane.b32.xlu0 %v3233, 22
  %v3304 = vpop.permute.xlu0 %3303
  %3305 = vrot.lane.b32.xlu0 %v3226, 22
  %v3306 = vpop.permute.xlu0 %3305
  %3307 = vrot.lane.b32.xlu0 %v3234, 22
  %v3308 = vpop.permute.xlu0 %3307
  %3309 = vrot.lane.b32.xlu0 %v3227, 22
  %v3310 = vpop.permute.xlu0 %3309
  %3311 = vrot.lane.b32.xlu0 %v3235, 22
  %v3312 = vpop.permute.xlu0 %3311
  %3313 = vrot.lane.b32.xlu0 %v3228, 22
  %v3314 = vpop.permute.xlu0 %3313
  %3315 = vrot.lane.b32.xlu0 %v3236, 22
  %v3316 = vpop.permute.xlu0 %3315
  %v3317 = vsel %vm433, %v3310, %v3314
  %v3318 = vsel %vm433, %v3312, %v3316
  %v3319 = vsel %vm433, %v3306, %v3310
  %v3320 = vsel %vm433, %v3308, %v3312
  %v3321 = vsel %vm433, %v3302, %v3306
  %v3322 = vsel %vm433, %v3304, %v3308
  %v3323 = vsel %vm433, %v3298, %v3302
  %v3324 = vsel %vm433, %v3300, %v3304
  %v3325 = vsel %vm433, %v3294, %v3298
  %v3326 = vsel %vm433, %v3296, %v3300
  %v3327 = vsel %vm433, %v3290, %v3294
  %v3328 = vsel %vm433, %v3292, %v3296
  %v3329 = vsel %vm433, %v3286, %v3290
  %v3330 = vsel %vm433, %v3288, %v3292
  %v3331 = vsel %vm433, %v3314, %v3286
  %v3332 = vsel %vm433, %v3316, %v3288
  %3333 = vrot.lane.b32.xlu0 %v3221, 21
  %v3334 = vpop.permute.xlu0 %3333
  %3335 = vrot.lane.b32.xlu0 %v3229, 21
  %v3336 = vpop.permute.xlu0 %3335
  %3337 = vrot.lane.b32.xlu0 %v3222, 21
  %v3338 = vpop.permute.xlu0 %3337
  %3339 = vrot.lane.b32.xlu0 %v3230, 21
  %v3340 = vpop.permute.xlu0 %3339
  %3341 = vrot.lane.b32.xlu0 %v3223, 21
  %v3342 = vpop.permute.xlu0 %3341
  %3343 = vrot.lane.b32.xlu0 %v3231, 21
  %v3344 = vpop.permute.xlu0 %3343
  %3345 = vrot.lane.b32.xlu0 %v3224, 21
  %v3346 = vpop.permute.xlu0 %3345
  %3347 = vrot.lane.b32.xlu0 %v3232, 21
  %v3348 = vpop.permute.xlu0 %3347
  %3349 = vrot.lane.b32.xlu0 %v3225, 21
  %v3350 = vpop.permute.xlu0 %3349
  %3351 = vrot.lane.b32.xlu0 %v3233, 21
  %v3352 = vpop.permute.xlu0 %3351
  %3353 = vrot.lane.b32.xlu0 %v3226, 21
  %v3354 = vpop.permute.xlu0 %3353
  %3355 = vrot.lane.b32.xlu0 %v3234, 21
  %v3356 = vpop.permute.xlu0 %3355
  %3357 = vrot.lane.b32.xlu0 %v3227, 21
  %v3358 = vpop.permute.xlu0 %3357
  %3359 = vrot.lane.b32.xlu0 %v3235, 21
  %v3360 = vpop.permute.xlu0 %3359
  %3361 = vrot.lane.b32.xlu0 %v3228, 21
  %v3362 = vpop.permute.xlu0 %3361
  %3363 = vrot.lane.b32.xlu0 %v3236, 21
  %v3364 = vpop.permute.xlu0 %3363
  %v3365 = vsel %vm481, %v3358, %v3362
  %v3366 = vsel %vm481, %v3360, %v3364
  %v3367 = vsel %vm481, %v3354, %v3358
  %v3368 = vsel %vm481, %v3356, %v3360
  %v3369 = vsel %vm481, %v3350, %v3354
  %v3370 = vsel %vm481, %v3352, %v3356
  %v3371 = vsel %vm481, %v3346, %v3350
  %v3372 = vsel %vm481, %v3348, %v3352
  %v3373 = vsel %vm481, %v3342, %v3346
  %v3374 = vsel %vm481, %v3344, %v3348
  %v3375 = vsel %vm481, %v3338, %v3342
  %v3376 = vsel %vm481, %v3340, %v3344
  %v3377 = vsel %vm481, %v3334, %v3338
  %v3378 = vsel %vm481, %v3336, %v3340
  %v3379 = vsel %vm481, %v3362, %v3334
  %v3380 = vsel %vm481, %v3364, %v3336
  %3381 = vrot.lane.b32.xlu0 %v3221, 1
  %v3382 = vpop.permute.xlu0 %3381
  %3383 = vrot.lane.b32.xlu0 %v3229, 1
  %v3384 = vpop.permute.xlu0 %3383
  %3385 = vrot.lane.b32.xlu0 %v3222, 1
  %v3386 = vpop.permute.xlu0 %3385
  %3387 = vrot.lane.b32.xlu0 %v3230, 1
  %v3388 = vpop.permute.xlu0 %3387
  %3389 = vrot.lane.b32.xlu0 %v3223, 1
  %v3390 = vpop.permute.xlu0 %3389
  %3391 = vrot.lane.b32.xlu0 %v3231, 1
  %v3392 = vpop.permute.xlu0 %3391
  %3393 = vrot.lane.b32.xlu0 %v3224, 1
  %v3394 = vpop.permute.xlu0 %3393
  %3395 = vrot.lane.b32.xlu0 %v3232, 1
  %v3396 = vpop.permute.xlu0 %3395
  %3397 = vrot.lane.b32.xlu0 %v3225, 1
  %v3398 = vpop.permute.xlu0 %3397
  %3399 = vrot.lane.b32.xlu0 %v3233, 1
  %v3400 = vpop.permute.xlu0 %3399
  %3401 = vrot.lane.b32.xlu0 %v3226, 1
  %v3402 = vpop.permute.xlu0 %3401
  %3403 = vrot.lane.b32.xlu0 %v3234, 1
  %v3404 = vpop.permute.xlu0 %3403
  %3405 = vrot.lane.b32.xlu0 %v3227, 1
  %v3406 = vpop.permute.xlu0 %3405
  %3407 = vrot.lane.b32.xlu0 %v3235, 1
  %v3408 = vpop.permute.xlu0 %3407
  %3409 = vrot.lane.b32.xlu0 %v3228, 1
  %v3410 = vpop.permute.xlu0 %3409
  %3411 = vrot.lane.b32.xlu0 %v3236, 1
  %v3412 = vpop.permute.xlu0 %3411
  %v3413 = vsel %vm529, %v3406, %v3410
  %v3414 = vsel %vm529, %v3408, %v3412
  %v3415 = vsel %vm529, %v3402, %v3406
  %v3416 = vsel %vm529, %v3404, %v3408
  %v3417 = vsel %vm529, %v3398, %v3402
  %v3418 = vsel %vm529, %v3400, %v3404
  %v3419 = vsel %vm529, %v3394, %v3398
  %v3420 = vsel %vm529, %v3396, %v3400
  %v3421 = vsel %vm529, %v3390, %v3394
  %v3422 = vsel %vm529, %v3392, %v3396
  %v3423 = vsel %vm529, %v3386, %v3390
  %v3424 = vsel %vm529, %v3388, %v3392
  %v3425 = vsel %vm529, %v3382, %v3386
  %v3426 = vsel %vm529, %v3384, %v3388
  %v3427 = vsel %vm529, %v3410, %v3382
  %v3428 = vsel %vm529, %v3412, %v3384
  %3429 = vrot.lane.b32.xlu0 %v3221, 127
  %v3430 = vpop.permute.xlu0 %3429
  %3431 = vrot.lane.b32.xlu0 %v3229, 127
  %v3432 = vpop.permute.xlu0 %3431
  %3433 = vrot.lane.b32.xlu0 %v3222, 127
  %v3434 = vpop.permute.xlu0 %3433
  %3435 = vrot.lane.b32.xlu0 %v3230, 127
  %v3436 = vpop.permute.xlu0 %3435
  %3437 = vrot.lane.b32.xlu0 %v3223, 127
  %v3438 = vpop.permute.xlu0 %3437
  %3439 = vrot.lane.b32.xlu0 %v3231, 127
  %v3440 = vpop.permute.xlu0 %3439
  %3441 = vrot.lane.b32.xlu0 %v3224, 127
  %v3442 = vpop.permute.xlu0 %3441
  %3443 = vrot.lane.b32.xlu0 %v3232, 127
  %v3444 = vpop.permute.xlu0 %3443
  %3445 = vrot.lane.b32.xlu0 %v3225, 127
  %v3446 = vpop.permute.xlu0 %3445
  %3447 = vrot.lane.b32.xlu0 %v3233, 127
  %v3448 = vpop.permute.xlu0 %3447
  %3449 = vrot.lane.b32.xlu0 %v3226, 127
  %v3450 = vpop.permute.xlu0 %3449
  %3451 = vrot.lane.b32.xlu0 %v3234, 127
  %v3452 = vpop.permute.xlu0 %3451
  %3453 = vrot.lane.b32.xlu0 %v3227, 127
  %v3454 = vpop.permute.xlu0 %3453
  %3455 = vrot.lane.b32.xlu0 %v3235, 127
  %v3456 = vpop.permute.xlu0 %3455
  %3457 = vrot.lane.b32.xlu0 %v3228, 127
  %v3458 = vpop.permute.xlu0 %3457
  %3459 = vrot.lane.b32.xlu0 %v3236, 127
  %v3460 = vpop.permute.xlu0 %3459
  %v3461 = vsel %vm600, %v3454, %v3458
  %v3462 = vsel %vm600, %v3456, %v3460
  %v3463 = vsel %vm600, %v3450, %v3454
  %v3464 = vsel %vm600, %v3452, %v3456
  %v3465 = vsel %vm600, %v3446, %v3450
  %v3466 = vsel %vm600, %v3448, %v3452
  %v3467 = vsel %vm600, %v3442, %v3446
  %v3468 = vsel %vm600, %v3444, %v3448
  %v3469 = vsel %vm600, %v3438, %v3442
  %v3470 = vsel %vm600, %v3440, %v3444
  %v3471 = vsel %vm600, %v3434, %v3438
  %v3472 = vsel %vm600, %v3436, %v3440
  %v3473 = vsel %vm600, %v3430, %v3434
  %v3474 = vsel %vm600, %v3432, %v3436
  %v3475 = vsel %vm600, %v3458, %v3430
  %v3476 = vsel %vm600, %v3460, %v3432
  %3477 = vrot.lane.b32.xlu0 %v3221, 107
  %v3478 = vpop.permute.xlu0 %3477
  %3479 = vrot.lane.b32.xlu0 %v3229, 107
  %v3480 = vpop.permute.xlu0 %3479
  %3481 = vrot.lane.b32.xlu0 %v3222, 107
  %v3482 = vpop.permute.xlu0 %3481
  %3483 = vrot.lane.b32.xlu0 %v3230, 107
  %v3484 = vpop.permute.xlu0 %3483
  %3485 = vrot.lane.b32.xlu0 %v3223, 107
  %v3486 = vpop.permute.xlu0 %3485
  %3487 = vrot.lane.b32.xlu0 %v3231, 107
  %v3488 = vpop.permute.xlu0 %3487
  %3489 = vrot.lane.b32.xlu0 %v3224, 107
  %v3490 = vpop.permute.xlu0 %3489
  %3491 = vrot.lane.b32.xlu0 %v3232, 107
  %v3492 = vpop.permute.xlu0 %3491
  %3493 = vrot.lane.b32.xlu0 %v3225, 107
  %v3494 = vpop.permute.xlu0 %3493
  %3495 = vrot.lane.b32.xlu0 %v3233, 107
  %v3496 = vpop.permute.xlu0 %3495
  %3497 = vrot.lane.b32.xlu0 %v3226, 107
  %v3498 = vpop.permute.xlu0 %3497
  %3499 = vrot.lane.b32.xlu0 %v3234, 107
  %v3500 = vpop.permute.xlu0 %3499
  %3501 = vrot.lane.b32.xlu0 %v3227, 107
  %v3502 = vpop.permute.xlu0 %3501
  %3503 = vrot.lane.b32.xlu0 %v3235, 107
  %v3504 = vpop.permute.xlu0 %3503
  %3505 = vrot.lane.b32.xlu0 %v3228, 107
  %v3506 = vpop.permute.xlu0 %3505
  %3507 = vrot.lane.b32.xlu0 %v3236, 107
  %v3508 = vpop.permute.xlu0 %3507
  %v3509 = vsel %vm648, %v3502, %v3506
  %v3510 = vsel %vm648, %v3504, %v3508
  %v3511 = vsel %vm648, %v3498, %v3502
  %v3512 = vsel %vm648, %v3500, %v3504
  %v3513 = vsel %vm648, %v3494, %v3498
  %v3514 = vsel %vm648, %v3496, %v3500
  %v3515 = vsel %vm648, %v3490, %v3494
  %v3516 = vsel %vm648, %v3492, %v3496
  %v3517 = vsel %vm648, %v3486, %v3490
  %v3518 = vsel %vm648, %v3488, %v3492
  %v3519 = vsel %vm648, %v3482, %v3486
  %v3520 = vsel %vm648, %v3484, %v3488
  %v3521 = vsel %vm648, %v3478, %v3482
  %v3522 = vsel %vm648, %v3480, %v3484
  %v3523 = vsel %vm648, %v3506, %v3478
  %v3524 = vsel %vm648, %v3508, %v3480
  %3525 = vrot.lane.b32.xlu0 %v3221, 106
  %v3526 = vpop.permute.xlu0 %3525
  %3527 = vrot.lane.b32.xlu0 %v3229, 106
  %v3528 = vpop.permute.xlu0 %3527
  %3529 = vrot.lane.b32.xlu0 %v3222, 106
  %v3530 = vpop.permute.xlu0 %3529
  %3531 = vrot.lane.b32.xlu0 %v3230, 106
  %v3532 = vpop.permute.xlu0 %3531
  %3533 = vrot.lane.b32.xlu0 %v3223, 106
  %v3534 = vpop.permute.xlu0 %3533
  %3535 = vrot.lane.b32.xlu0 %v3231, 106
  %v3536 = vpop.permute.xlu0 %3535
  %3537 = vrot.lane.b32.xlu0 %v3224, 106
  %v3538 = vpop.permute.xlu0 %3537
  %3539 = vrot.lane.b32.xlu0 %v3232, 106
  %v3540 = vpop.permute.xlu0 %3539
  %3541 = vrot.lane.b32.xlu0 %v3225, 106
  %v3542 = vpop.permute.xlu0 %3541
  %3543 = vrot.lane.b32.xlu0 %v3233, 106
  %v3544 = vpop.permute.xlu0 %3543
  %3545 = vrot.lane.b32.xlu0 %v3226, 106
  %v3546 = vpop.permute.xlu0 %3545
  %3547 = vrot.lane.b32.xlu0 %v3234, 106
  %v3548 = vpop.permute.xlu0 %3547
  %3549 = vrot.lane.b32.xlu0 %v3227, 106
  %v3550 = vpop.permute.xlu0 %3549
  %3551 = vrot.lane.b32.xlu0 %v3235, 106
  %v3552 = vpop.permute.xlu0 %3551
  %3553 = vrot.lane.b32.xlu0 %v3228, 106
  %v3554 = vpop.permute.xlu0 %3553
  %3555 = vrot.lane.b32.xlu0 %v3236, 106
  %v3556 = vpop.permute.xlu0 %3555
  %v3557 = vsel %vm696, %v3550, %v3554
  %v3558 = vsel %vm696, %v3552, %v3556
  %v3559 = vsel %vm696, %v3546, %v3550
  %v3560 = vsel %vm696, %v3548, %v3552
  %v3561 = vsel %vm696, %v3542, %v3546
  %v3562 = vsel %vm696, %v3544, %v3548
  %v3563 = vsel %vm696, %v3538, %v3542
  %v3564 = vsel %vm696, %v3540, %v3544
  %v3565 = vsel %vm696, %v3534, %v3538
  %v3566 = vsel %vm696, %v3536, %v3540
  %v3567 = vsel %vm696, %v3530, %v3534
  %v3568 = vsel %vm696, %v3532, %v3536
  %v3569 = vsel %vm696, %v3526, %v3530
  %v3570 = vsel %vm696, %v3528, %v3532
  %v3571 = vsel %vm696, %v3554, %v3526
  %v3572 = vsel %vm696, %v3556, %v3528
  %3573 = vrot.lane.b32.xlu0 %v3221, 105
  %v3574 = vpop.permute.xlu0 %3573
  %3575 = vrot.lane.b32.xlu0 %v3229, 105
  %v3576 = vpop.permute.xlu0 %3575
  %3577 = vrot.lane.b32.xlu0 %v3222, 105
  %v3578 = vpop.permute.xlu0 %3577
  %3579 = vrot.lane.b32.xlu0 %v3230, 105
  %v3580 = vpop.permute.xlu0 %3579
  %3581 = vrot.lane.b32.xlu0 %v3223, 105
  %v3582 = vpop.permute.xlu0 %3581
  %3583 = vrot.lane.b32.xlu0 %v3231, 105
  %v3584 = vpop.permute.xlu0 %3583
  %3585 = vrot.lane.b32.xlu0 %v3224, 105
  %v3586 = vpop.permute.xlu0 %3585
  %3587 = vrot.lane.b32.xlu0 %v3232, 105
  %v3588 = vpop.permute.xlu0 %3587
  %3589 = vrot.lane.b32.xlu0 %v3225, 105
  %v3590 = vpop.permute.xlu0 %3589
  %3591 = vrot.lane.b32.xlu0 %v3233, 105
  %v3592 = vpop.permute.xlu0 %3591
  %3593 = vrot.lane.b32.xlu0 %v3226, 105
  %v3594 = vpop.permute.xlu0 %3593
  %3595 = vrot.lane.b32.xlu0 %v3234, 105
  %v3596 = vpop.permute.xlu0 %3595
  %3597 = vrot.lane.b32.xlu0 %v3227, 105
  %v3598 = vpop.permute.xlu0 %3597
  %3599 = vrot.lane.b32.xlu0 %v3235, 105
  %v3600 = vpop.permute.xlu0 %3599
  %3601 = vrot.lane.b32.xlu0 %v3228, 105
  %v3602 = vpop.permute.xlu0 %3601
  %3603 = vrot.lane.b32.xlu0 %v3236, 105
  %v3604 = vpop.permute.xlu0 %3603
  %v3605 = vsel %vm744, %v3598, %v3602
  %v3606 = vsel %vm744, %v3600, %v3604
  %v3607 = vsel %vm744, %v3594, %v3598
  %v3608 = vsel %vm744, %v3596, %v3600
  %v3609 = vsel %vm744, %v3590, %v3594
  %v3610 = vsel %vm744, %v3592, %v3596
  %v3611 = vsel %vm744, %v3586, %v3590
  %v3612 = vsel %vm744, %v3588, %v3592
  %v3613 = vsel %vm744, %v3582, %v3586
  %v3614 = vsel %vm744, %v3584, %v3588
  %v3615 = vsel %vm744, %v3578, %v3582
  %v3616 = vsel %vm744, %v3580, %v3584
  %v3617 = vsel %vm744, %v3574, %v3578
  %v3618 = vsel %vm744, %v3576, %v3580
  %v3619 = vsel %vm744, %v3602, %v3574
  %v3620 = vsel %vm744, %v3604, %v3576
  %v3621 = vld [vmem:[%s23] sm:$0xff]
  %v3622 = vld [vmem:[%s23 + $0x8] sm:$0xff]
  %v3623 = vld [vmem:[%s23 + $0x10] sm:$0xff]
  %v3624 = vld [vmem:[%s23 + $0x18] sm:$0xff]
  %v3625 = vld [vmem:[%s24] sm:$0xff]
  %v3626 = vld [vmem:[%s24 + $0x8] sm:$0xff]
  %3628 = vset.pattern.permute.xlu0 0
  %3629 = vperm.xlu0 %3628, %v3625
  %v3630 = vpop.permute.xlu0 %3629
  %3633 = vset.pattern.permute.xlu0 0
  %3634 = vperm.xlu0 %3633, %v3626
  %v3635 = vpop.permute.xlu0 %3634
  %vm3637 = vcmask 130048
  %v3639 = vsel %vm3637, %v3622, 0
  %v3642 = vsel %vm3637, %v3624, 0
  %3644 = vmatpush.msra.mxu0 %v3570
  %3645 = vmatpush.msra.mxu0 %v3569
  %3646 = vmatpush.msra.mxu0 %v3522
  %3647 = vmatpush.msra.mxu0 %v3521
  %3648 = vmatpush.msra.mxu0 %v3474
  %3649 = vmatpush.msra.mxu0 %v3473
  %3650 = vmatpush.msra.mxu0 %v3229
  %3651 = vmatpush.msra.mxu0 %v3221
  %3652 = vmatpush.msra.mxu0 %v3428
  %3653 = vmatpush.msra.mxu0 %v3427
  %3654 = vmatpush.msra.mxu0 %v3380
  %3655 = vmatpush.msra.mxu0 %v3379
  %3656 = vmatpush.msra.mxu0 %v3332
  %3657 = vmatpush.msra.mxu0 %v3331
  %3658 = vmatpush.msra.mxu0 %v3284
  %3659 = vmatpush.msra.mxu0 %v3283
  %3660 = vmatmul.f32.gmra.mxu0 %v3621
  %v3661 = vpop.f32.mrf.mxu0
  %v3662 = vadd.f32 %v3630, %v3661
  %3663 = vmatmul.f32.gmra.mxu0 %v3623
  %v3664 = vpop.f32.mrf.mxu0
  %v3665 = vadd.f32 %v3635, %v3664
  %3666 = vdwg.mxu0
  %3667 = vmatpush.msra.mxu0 0.0
  %3668 = vmatpush.msra.mxu0 0.0
  %3669 = vmatpush.msra.mxu0 0.0
  %3670 = vmatpush.msra.mxu0 0.0
  %3671 = vmatpush.msra.mxu0 0.0
  %3672 = vmatpush.msra.mxu0 0.0
  %3673 = vmatpush.msra.mxu0 0.0
  %3674 = vmatpush.msra.mxu0 0.0
  %3675 = vmatpush.msra.mxu0 0.0
  %3676 = vmatpush.msra.mxu0 0.0
  %3677 = vmatpush.msra.mxu0 0.0
  %3678 = vmatpush.msra.mxu0 0.0
  %3679 = vmatpush.msra.mxu0 0.0
  %3680 = vmatpush.msra.mxu0 0.0
  %3681 = vmatpush.msra.mxu0 %v3618
  %3682 = vmatpush.msra.mxu0 %v3617
  %3683 = vmatmul.f32.gmra.mxu0 %v3639
  %v3684 = vpop.f32.mrf.mxu0
  %v3685 = vadd.f32 %v3662, %v3684
  %3686 = vmatmul.f32.gmra.mxu0 %v3642
  %v3687 = vpop.f32.mrf.mxu0
  %v3688 = vadd.f32 %v3665, %v3687
  %3689 = vdwg.mxu0
  %3690 = vmatpush.msra.mxu0 %v3568
  %3691 = vmatpush.msra.mxu0 %v3567
  %3692 = vmatpush.msra.mxu0 %v3520
  %3693 = vmatpush.msra.mxu0 %v3519
  %3694 = vmatpush.msra.mxu0 %v3472
  %3695 = vmatpush.msra.mxu0 %v3471
  %3696 = vmatpush.msra.mxu0 %v3230
  %3697 = vmatpush.msra.mxu0 %v3222
  %3698 = vmatpush.msra.mxu0 %v3426
  %3699 = vmatpush.msra.mxu0 %v3425
  %3700 = vmatpush.msra.mxu0 %v3378
  %3701 = vmatpush.msra.mxu0 %v3377
  %3702 = vmatpush.msra.mxu0 %v3330
  %3703 = vmatpush.msra.mxu0 %v3329
  %3704 = vmatpush.msra.mxu0 %v3282
  %3705 = vmatpush.msra.mxu0 %v3281
  %3706 = vmatmul.f32.gmra.mxu0 %v3621
  %v3707 = vpop.f32.mrf.mxu0
  %v3708 = vadd.f32 %v3630, %v3707
  %3709 = vmatmul.f32.gmra.mxu0 %v3623
  %v3710 = vpop.f32.mrf.mxu0
  %v3711 = vadd.f32 %v3635, %v3710
  %3712 = vdwg.mxu0
  %3713 = vmatpush.msra.mxu0 0.0
  %3714 = vmatpush.msra.mxu0 0.0
  %3715 = vmatpush.msra.mxu0 0.0
  %3716 = vmatpush.msra.mxu0 0.0
  %3717 = vmatpush.msra.mxu0 0.0
  %3718 = vmatpush.msra.mxu0 0.0
  %3719 = vmatpush.msra.mxu0 0.0
  %3720 = vmatpush.msra.mxu0 0.0
  %3721 = vmatpush.msra.mxu0 0.0
  %3722 = vmatpush.msra.mxu0 0.0
  %3723 = vmatpush.msra.mxu0 0.0
  %3724 = vmatpush.msra.mxu0 0.0
  %3725 = vmatpush.msra.mxu0 0.0
  %3726 = vmatpush.msra.mxu0 0.0
  %3727 = vmatpush.msra.mxu0 %v3616
  %3728 = vmatpush.msra.mxu0 %v3615
  %3729 = vmatmul.f32.gmra.mxu0 %v3639
  %v3730 = vpop.f32.mrf.mxu0
  %v3731 = vadd.f32 %v3708, %v3730
  %3732 = vmatmul.f32.gmra.mxu0 %v3642
  %v3733 = vpop.f32.mrf.mxu0
  %v3734 = vadd.f32 %v3711, %v3733
  %3735 = vdwg.mxu0
  %3736 = vmatpush.msra.mxu0 %v3566
  %3737 = vmatpush.msra.mxu0 %v3565
  %3738 = vmatpush.msra.mxu0 %v3518
  %3739 = vmatpush.msra.mxu0 %v3517
  %3740 = vmatpush.msra.mxu0 %v3470
  %3741 = vmatpush.msra.mxu0 %v3469
  %3742 = vmatpush.msra.mxu0 %v3231
  %3743 = vmatpush.msra.mxu0 %v3223
  %3744 = vmatpush.msra.mxu0 %v3424
  %3745 = vmatpush.msra.mxu0 %v3423
  %3746 = vmatpush.msra.mxu0 %v3376
  %3747 = vmatpush.msra.mxu0 %v3375
  %3748 = vmatpush.msra.mxu0 %v3328
  %3749 = vmatpush.msra.mxu0 %v3327
  %3750 = vmatpush.msra.mxu0 %v3280
  %3751 = vmatpush.msra.mxu0 %v3279
  %3752 = vmatmul.f32.gmra.mxu0 %v3621
  %v3753 = vpop.f32.mrf.mxu0
  %v3754 = vadd.f32 %v3630, %v3753
  %3755 = vmatmul.f32.gmra.mxu0 %v3623
  %v3756 = vpop.f32.mrf.mxu0
  %v3757 = vadd.f32 %v3635, %v3756
  %3758 = vdwg.mxu0
  %3759 = vmatpush.msra.mxu0 0.0
  %3760 = vmatpush.msra.mxu0 0.0
  %3761 = vmatpush.msra.mxu0 0.0
  %3762 = vmatpush.msra.mxu0 0.0
  %3763 = vmatpush.msra.mxu0 0.0
  %3764 = vmatpush.msra.mxu0 0.0
  %3765 = vmatpush.msra.mxu0 0.0
  %3766 = vmatpush.msra.mxu0 0.0
  %3767 = vmatpush.msra.mxu0 0.0
  %3768 = vmatpush.msra.mxu0 0.0
  %3769 = vmatpush.msra.mxu0 0.0
  %3770 = vmatpush.msra.mxu0 0.0
  %3771 = vmatpush.msra.mxu0 0.0
  %3772 = vmatpush.msra.mxu0 0.0
  %3773 = vmatpush.msra.mxu0 %v3614
  %3774 = vmatpush.msra.mxu0 %v3613
  %3775 = vmatmul.f32.gmra.mxu0 %v3639
  %v3776 = vpop.f32.mrf.mxu0
  %v3777 = vadd.f32 %v3754, %v3776
  %3778 = vmatmul.f32.gmra.mxu0 %v3642
  %v3779 = vpop.f32.mrf.mxu0
  %v3780 = vadd.f32 %v3757, %v3779
  %3781 = vdwg.mxu0
  %3782 = vmatpush.msra.mxu0 %v3564
  %3783 = vmatpush.msra.mxu0 %v3563
  %3784 = vmatpush.msra.mxu0 %v3516
  %3785 = vmatpush.msra.mxu0 %v3515
  %3786 = vmatpush.msra.mxu0 %v3468
  %3787 = vmatpush.msra.mxu0 %v3467
  %3788 = vmatpush.msra.mxu0 %v3232
  %3789 = vmatpush.msra.mxu0 %v3224
  %3790 = vmatpush.msra.mxu0 %v3422
  %3791 = vmatpush.msra.mxu0 %v3421
  %3792 = vmatpush.msra.mxu0 %v3374
  %3793 = vmatpush.msra.mxu0 %v3373
  %3794 = vmatpush.msra.mxu0 %v3326
  %3795 = vmatpush.msra.mxu0 %v3325
  %3796 = vmatpush.msra.mxu0 %v3278
  %3797 = vmatpush.msra.mxu0 %v3277
  %3798 = vmatmul.f32.gmra.mxu0 %v3621
  %v3799 = vpop.f32.mrf.mxu0
  %v3800 = vadd.f32 %v3630, %v3799
  %3801 = vmatmul.f32.gmra.mxu0 %v3623
  %v3802 = vpop.f32.mrf.mxu0
  %v3803 = vadd.f32 %v3635, %v3802
  %3804 = vdwg.mxu0
  %3805 = vmatpush.msra.mxu0 0.0
  %3806 = vmatpush.msra.mxu0 0.0
  %3807 = vmatpush.msra.mxu0 0.0
  %3808 = vmatpush.msra.mxu0 0.0
  %3809 = vmatpush.msra.mxu0 0.0
  %3810 = vmatpush.msra.mxu0 0.0
  %3811 = vmatpush.msra.mxu0 0.0
  %3812 = vmatpush.msra.mxu0 0.0
  %3813 = vmatpush.msra.mxu0 0.0
  %3814 = vmatpush.msra.mxu0 0.0
  %3815 = vmatpush.msra.mxu0 0.0
  %3816 = vmatpush.msra.mxu0 0.0
  %3817 = vmatpush.msra.mxu0 0.0
  %3818 = vmatpush.msra.mxu0 0.0
  %3819 = vmatpush.msra.mxu0 %v3612
  %3820 = vmatpush.msra.mxu0 %v3611
  %3821 = vmatmul.f32.gmra.mxu0 %v3639
  %v3822 = vpop.f32.mrf.mxu0
  %v3823 = vadd.f32 %v3800, %v3822
  %3824 = vmatmul.f32.gmra.mxu0 %v3642
  %v3825 = vpop.f32.mrf.mxu0
  %v3826 = vadd.f32 %v3803, %v3825
  %3827 = vdwg.mxu0
  %3828 = vmatpush.msra.mxu0 %v3562
  %3829 = vmatpush.msra.mxu0 %v3561
  %3830 = vmatpush.msra.mxu0 %v3514
  %3831 = vmatpush.msra.mxu0 %v3513
  %3832 = vmatpush.msra.mxu0 %v3466
  %3833 = vmatpush.msra.mxu0 %v3465
  %3834 = vmatpush.msra.mxu0 %v3233
  %3835 = vmatpush.msra.mxu0 %v3225
  %3836 = vmatpush.msra.mxu0 %v3420
  %3837 = vmatpush.msra.mxu0 %v3419
  %3838 = vmatpush.msra.mxu0 %v3372
  %3839 = vmatpush.msra.mxu0 %v3371
  %3840 = vmatpush.msra.mxu0 %v3324
  %3841 = vmatpush.msra.mxu0 %v3323
  %3842 = vmatpush.msra.mxu0 %v3276
  %3843 = vmatpush.msra.mxu0 %v3275
  %3844 = vmatmul.f32.gmra.mxu0 %v3621
  %v3845 = vpop.f32.mrf.mxu0
  %v3846 = vadd.f32 %v3630, %v3845
  %3847 = vmatmul.f32.gmra.mxu0 %v3623
  %v3848 = vpop.f32.mrf.mxu0
  %v3849 = vadd.f32 %v3635, %v3848
  %3850 = vdwg.mxu0
  %3851 = vmatpush.msra.mxu0 0.0
  %3852 = vmatpush.msra.mxu0 0.0
  %3853 = vmatpush.msra.mxu0 0.0
  %3854 = vmatpush.msra.mxu0 0.0
  %3855 = vmatpush.msra.mxu0 0.0
  %3856 = vmatpush.msra.mxu0 0.0
  %3857 = vmatpush.msra.mxu0 0.0
  %3858 = vmatpush.msra.mxu0 0.0
  %3859 = vmatpush.msra.mxu0 0.0
  %3860 = vmatpush.msra.mxu0 0.0
  %3861 = vmatpush.msra.mxu0 0.0
  %3862 = vmatpush.msra.mxu0 0.0
  %3863 = vmatpush.msra.mxu0 0.0
  %3864 = vmatpush.msra.mxu0 0.0
  %3865 = vmatpush.msra.mxu0 %v3610
  %3866 = vmatpush.msra.mxu0 %v3609
  %3867 = vmatmul.f32.gmra.mxu0 %v3639
  %v3868 = vpop.f32.mrf.mxu0
  %v3869 = vadd.f32 %v3846, %v3868
  %3870 = vmatmul.f32.gmra.mxu0 %v3642
  %v3871 = vpop.f32.mrf.mxu0
  %v3872 = vadd.f32 %v3849, %v3871
  %3873 = vdwg.mxu0
  %3874 = vmatpush.msra.mxu0 %v3560
  %3875 = vmatpush.msra.mxu0 %v3559
  %3876 = vmatpush.msra.mxu0 %v3512
  %3877 = vmatpush.msra.mxu0 %v3511
  %3878 = vmatpush.msra.mxu0 %v3464
  %3879 = vmatpush.msra.mxu0 %v3463
  %3880 = vmatpush.msra.mxu0 %v3234
  %3881 = vmatpush.msra.mxu0 %v3226
  %3882 = vmatpush.msra.mxu0 %v3418
  %3883 = vmatpush.msra.mxu0 %v3417
  %3884 = vmatpush.msra.mxu0 %v3370
  %3885 = vmatpush.msra.mxu0 %v3369
  %3886 = vmatpush.msra.mxu0 %v3322
  %3887 = vmatpush.msra.mxu0 %v3321
  %3888 = vmatpush.msra.mxu0 %v3274
  %3889 = vmatpush.msra.mxu0 %v3273
  %3890 = vmatmul.f32.gmra.mxu0 %v3621
  %v3891 = vpop.f32.mrf.mxu0
  %v3892 = vadd.f32 %v3630, %v3891
  %3893 = vmatmul.f32.gmra.mxu0 %v3623
  %v3894 = vpop.f32.mrf.mxu0
  %v3895 = vadd.f32 %v3635, %v3894
  %3896 = vdwg.mxu0
  %3897 = vmatpush.msra.mxu0 0.0
  %3898 = vmatpush.msra.mxu0 0.0
  %3899 = vmatpush.msra.mxu0 0.0
  %3900 = vmatpush.msra.mxu0 0.0
  %3901 = vmatpush.msra.mxu0 0.0
  %3902 = vmatpush.msra.mxu0 0.0
  %3903 = vmatpush.msra.mxu0 0.0
  %3904 = vmatpush.msra.mxu0 0.0
  %3905 = vmatpush.msra.mxu0 0.0
  %3906 = vmatpush.msra.mxu0 0.0
  %3907 = vmatpush.msra.mxu0 0.0
  %3908 = vmatpush.msra.mxu0 0.0
  %3909 = vmatpush.msra.mxu0 0.0
  %3910 = vmatpush.msra.mxu0 0.0
  %3911 = vmatpush.msra.mxu0 %v3608
  %3912 = vmatpush.msra.mxu0 %v3607
  %3913 = vmatmul.f32.gmra.mxu0 %v3639
  %v3914 = vpop.f32.mrf.mxu0
  %v3915 = vadd.f32 %v3892, %v3914
  %3916 = vmatmul.f32.gmra.mxu0 %v3642
  %v3917 = vpop.f32.mrf.mxu0
  %v3918 = vadd.f32 %v3895, %v3917
  %3919 = vdwg.mxu0
  %3920 = vmatpush.msra.mxu0 %v3558
  %3921 = vmatpush.msra.mxu0 %v3557
  %3922 = vmatpush.msra.mxu0 %v3510
  %3923 = vmatpush.msra.mxu0 %v3509
  %3924 = vmatpush.msra.mxu0 %v3462
  %3925 = vmatpush.msra.mxu0 %v3461
  %3926 = vmatpush.msra.mxu0 %v3235
  %3927 = vmatpush.msra.mxu0 %v3227
  %3928 = vmatpush.msra.mxu0 %v3416
  %3929 = vmatpush.msra.mxu0 %v3415
  %3930 = vmatpush.msra.mxu0 %v3368
  %3931 = vmatpush.msra.mxu0 %v3367
  %3932 = vmatpush.msra.mxu0 %v3320
  %3933 = vmatpush.msra.mxu0 %v3319
  %3934 = vmatpush.msra.mxu0 %v3272
  %3935 = vmatpush.msra.mxu0 %v3271
  %3936 = vmatmul.f32.gmra.mxu0 %v3621
  %v3937 = vpop.f32.mrf.mxu0
  %v3938 = vadd.f32 %v3630, %v3937
  %3939 = vmatmul.f32.gmra.mxu0 %v3623
  %v3940 = vpop.f32.mrf.mxu0
  %v3941 = vadd.f32 %v3635, %v3940
  %3942 = vdwg.mxu0
  %3943 = vmatpush.msra.mxu0 0.0
  %3944 = vmatpush.msra.mxu0 0.0
  %3945 = vmatpush.msra.mxu0 0.0
  %3946 = vmatpush.msra.mxu0 0.0
  %3947 = vmatpush.msra.mxu0 0.0
  %3948 = vmatpush.msra.mxu0 0.0
  %3949 = vmatpush.msra.mxu0 0.0
  %3950 = vmatpush.msra.mxu0 0.0
  %3951 = vmatpush.msra.mxu0 0.0
  %3952 = vmatpush.msra.mxu0 0.0
  %3953 = vmatpush.msra.mxu0 0.0
  %3954 = vmatpush.msra.mxu0 0.0
  %3955 = vmatpush.msra.mxu0 0.0
  %3956 = vmatpush.msra.mxu0 0.0
  %3957 = vmatpush.msra.mxu0 %v3606
  %3958 = vmatpush.msra.mxu0 %v3605
  %3959 = vmatmul.f32.gmra.mxu0 %v3639
  %v3960 = vpop.f32.mrf.mxu0
  %v3961 = vadd.f32 %v3938, %v3960
  %3962 = vmatmul.f32.gmra.mxu0 %v3642
  %v3963 = vpop.f32.mrf.mxu0
  %v3964 = vadd.f32 %v3941, %v3963
  %3965 = vdwg.mxu0
  %3966 = vmatpush.msra.mxu0 %v3572
  %3967 = vmatpush.msra.mxu0 %v3571
  %3968 = vmatpush.msra.mxu0 %v3524
  %3969 = vmatpush.msra.mxu0 %v3523
  %3970 = vmatpush.msra.mxu0 %v3476
  %3971 = vmatpush.msra.mxu0 %v3475
  %3972 = vmatpush.msra.mxu0 %v3236
  %3973 = vmatpush.msra.mxu0 %v3228
  %3974 = vmatpush.msra.mxu0 %v3414
  %3975 = vmatpush.msra.mxu0 %v3413
  %3976 = vmatpush.msra.mxu0 %v3366
  %3977 = vmatpush.msra.mxu0 %v3365
  %3978 = vmatpush.msra.mxu0 %v3318
  %3979 = vmatpush.msra.mxu0 %v3317
  %3980 = vmatpush.msra.mxu0 %v3270
  %3981 = vmatpush.msra.mxu0 %v3269
  %3982 = vmatmul.f32.gmra.mxu0 %v3621
  %v3983 = vpop.f32.mrf.mxu0
  %v3984 = vadd.f32 %v3630, %v3983
  %3985 = vmatmul.f32.gmra.mxu0 %v3623
  %v3986 = vpop.f32.mrf.mxu0
  %v3987 = vadd.f32 %v3635, %v3986
  %3988 = vdwg.mxu0
  %3989 = vmatpush.msra.mxu0 0.0
  %3990 = vmatpush.msra.mxu0 0.0
  %3991 = vmatpush.msra.mxu0 0.0
  %3992 = vmatpush.msra.mxu0 0.0
  %3993 = vmatpush.msra.mxu0 0.0
  %3994 = vmatpush.msra.mxu0 0.0
  %3995 = vmatpush.msra.mxu0 0.0
  %3996 = vmatpush.msra.mxu0 0.0
  %3997 = vmatpush.msra.mxu0 0.0
  %3998 = vmatpush.msra.mxu0 0.0
  %3999 = vmatpush.msra.mxu0 0.0
  %4000 = vmatpush.msra.mxu0 0.0
  %4001 = vmatpush.msra.mxu0 0.0
  %4002 = vmatpush.msra.mxu0 0.0
  %4003 = vmatpush.msra.mxu0 %v3620
  %4004 = vmatpush.msra.mxu0 %v3619
  %4005 = vmatmul.f32.gmra.mxu0 %v3639
  %v4006 = vpop.f32.mrf.mxu0
  %v4007 = vadd.f32 %v3984, %v4006
  %4008 = vmatmul.f32.gmra.mxu0 %v3642
  %v4009 = vpop.f32.mrf.mxu0
  %v4010 = vadd.f32 %v3987, %v4009
  %4011 = vdwg.mxu0
  %v4012 = vld [vmem:[%s25] sm:$0xff]
  %v4013 = vld [vmem:[%s25 + $0x8] sm:$0xff]
  %v4014 = vld [vmem:[%s26] sm:$0xff]
  %v4015 = vld [vmem:[%s26 + $0x8] sm:$0xff]
  %4017 = vset.pattern.permute.xlu0 0
  %4018 = vperm.xlu0 %4017, %v4012
  %v4019 = vpop.permute.xlu0 %4018
  %4022 = vset.pattern.permute.xlu0 0
  %4023 = vperm.xlu0 %4022, %v4013
  %v4024 = vpop.permute.xlu0 %4023
  %v4026 = vmul.f32 %v4019, %v3685
  %v4027 = vmul.f32 %v4019, %v3731
  %v4028 = vmul.f32 %v4019, %v3777
  %v4029 = vmul.f32 %v4019, %v3823
  %v4030 = vmul.f32 %v4019, %v3869
  %v4031 = vmul.f32 %v4019, %v3915
  %v4032 = vmul.f32 %v4019, %v3961
  %v4033 = vmul.f32 %v4019, %v4007
  %v4034 = vmul.f32 %v4024, %v3688
  %v4035 = vmul.f32 %v4024, %v3734
  %v4036 = vmul.f32 %v4024, %v3780
  %v4037 = vmul.f32 %v4024, %v3826
  %v4038 = vmul.f32 %v4024, %v3872
  %v4039 = vmul.f32 %v4024, %v3918
  %v4040 = vmul.f32 %v4024, %v3964
  %v4041 = vmul.f32 %v4024, %v4010
  %v4042 = vmul.f32 %v3685, 0.70710677
  %v4043 = vmul.f32 %v3731, 0.70710677
  %v4044 = vmul.f32 %v3777, 0.70710677
  %v4045 = vmul.f32 %v3823, 0.70710677
  %v4046 = vmul.f32 %v3869, 0.70710677
  %v4047 = vmul.f32 %v3915, 0.70710677
  %v4048 = vmul.f32 %v3961, 0.70710677
  %v4049 = vmul.f32 %v4007, 0.70710677
  %v4050 = vmul.f32 %v3688, 0.70710677
  %v4051 = vmul.f32 %v3734, 0.70710677
  %v4052 = vmul.f32 %v3780, 0.70710677
  %v4053 = vmul.f32 %v3826, 0.70710677
  %v4054 = vmul.f32 %v3872, 0.70710677
  %v4055 = vmul.f32 %v3918, 0.70710677
  %v4056 = vmul.f32 %v3964, 0.70710677
  %v4057 = vmul.f32 %v4010, 0.70710677
  %vm4058 = vcmp.ge.f32.partialorder %v4042, 0.0
  %vm4059 = vcmp.ge.f32.partialorder %v4043, 0.0
  %vm4060 = vcmp.ge.f32.partialorder %v4044, 0.0
  %vm4061 = vcmp.ge.f32.partialorder %v4045, 0.0
  %vm4062 = vcmp.ge.f32.partialorder %v4046, 0.0
  %vm4063 = vcmp.ge.f32.partialorder %v4047, 0.0
  %vm4064 = vcmp.ge.f32.partialorder %v4048, 0.0
  %vm4065 = vcmp.ge.f32.partialorder %v4049, 0.0
  %vm4066 = vcmp.ge.f32.partialorder %v4050, 0.0
  %vm4067 = vcmp.ge.f32.partialorder %v4051, 0.0
  %vm4068 = vcmp.ge.f32.partialorder %v4052, 0.0
  %vm4069 = vcmp.ge.f32.partialorder %v4053, 0.0
  %vm4070 = vcmp.ge.f32.partialorder %v4054, 0.0
  %vm4071 = vcmp.ge.f32.partialorder %v4055, 0.0
  %vm4072 = vcmp.ge.f32.partialorder %v4056, 0.0
  %vm4073 = vcmp.ge.f32.partialorder %v4057, 0.0
  %v4074 = vsel %vm4058, 1.0, -1.0
  %v4075 = vsel %vm4059, 1.0, -1.0
  %v4076 = vsel %vm4060, 1.0, -1.0
  %v4077 = vsel %vm4061, 1.0, -1.0
  %v4078 = vsel %vm4062, 1.0, -1.0
  %v4079 = vsel %vm4063, 1.0, -1.0
  %v4080 = vsel %vm4064, 1.0, -1.0
  %v4081 = vsel %vm4065, 1.0, -1.0
  %v4082 = vsel %vm4066, 1.0, -1.0
  %v4083 = vsel %vm4067, 1.0, -1.0
  %v4084 = vsel %vm4068, 1.0, -1.0
  %v4085 = vsel %vm4069, 1.0, -1.0
  %v4086 = vsel %vm4070, 1.0, -1.0
  %v4087 = vsel %vm4071, 1.0, -1.0
  %v4088 = vsel %vm4072, 1.0, -1.0
  %v4089 = vsel %vm4073, 1.0, -1.0
  %v4090 = vand.u32 2147483647, %v4042
  %v4091 = vand.u32 2147483647, %v4043
  %v4092 = vand.u32 2147483647, %v4044
  %v4093 = vand.u32 2147483647, %v4045
  %v4094 = vand.u32 2147483647, %v4046
  %v4095 = vand.u32 2147483647, %v4047
  %v4096 = vand.u32 2147483647, %v4048
  %v4097 = vand.u32 2147483647, %v4049
  %v4098 = vand.u32 2147483647, %v4050
  %v4099 = vand.u32 2147483647, %v4051
  %v4100 = vand.u32 2147483647, %v4052
  %v4101 = vand.u32 2147483647, %v4053
  %v4102 = vand.u32 2147483647, %v4054
  %v4103 = vand.u32 2147483647, %v4055
  %v4104 = vand.u32 2147483647, %v4056
  %v4105 = vand.u32 2147483647, %v4057
  %v4106 = vmul.f32 %v4090, 0.3275911
  %v4107 = vmul.f32 %v4091, 0.3275911
  %v4108 = vmul.f32 %v4092, 0.3275911
  %v4109 = vmul.f32 %v4093, 0.3275911
  %v4110 = vmul.f32 %v4094, 0.3275911
  %v4111 = vmul.f32 %v4095, 0.3275911
  %v4112 = vmul.f32 %v4096, 0.3275911
  %v4113 = vmul.f32 %v4097, 0.3275911
  %v4114 = vmul.f32 %v4098, 0.3275911
  %v4115 = vmul.f32 %v4099, 0.3275911
  %v4116 = vmul.f32 %v4100, 0.3275911
  %v4117 = vmul.f32 %v4101, 0.3275911
  %v4118 = vmul.f32 %v4102, 0.3275911
  %v4119 = vmul.f32 %v4103, 0.3275911
  %v4120 = vmul.f32 %v4104, 0.3275911
  %v4121 = vmul.f32 %v4105, 0.3275911
  %v4122 = vadd.f32 %v4106, 1.0
  %v4123 = vadd.f32 %v4107, 1.0
  %v4124 = vadd.f32 %v4108, 1.0
  %v4125 = vadd.f32 %v4109, 1.0
  %v4126 = vadd.f32 %v4110, 1.0
  %v4127 = vadd.f32 %v4111, 1.0
  %v4128 = vadd.f32 %v4112, 1.0
  %v4129 = vadd.f32 %v4113, 1.0
  %v4130 = vadd.f32 %v4114, 1.0
  %v4131 = vadd.f32 %v4115, 1.0
  %v4132 = vadd.f32 %v4116, 1.0
  %v4133 = vadd.f32 %v4117, 1.0
  %v4134 = vadd.f32 %v4118, 1.0
  %v4135 = vadd.f32 %v4119, 1.0
  %v4136 = vadd.f32 %v4120, 1.0
  %v4137 = vadd.f32 %v4121, 1.0
  %v4138 = vrcp.pop %v4122
  %v4139 = vmul.f32 %v4122, %v4138
  %v4140 = vsub.f32 1.0, %v4139
  %v4141 = vmul.f32 %v4138, %v4140
  %v4142 = vadd.f32 %v4138, %v4141
  %vm4143 = vweird.f32 %v4122
  %vm4144 = vweird.f32 %v4138
  %vm4145 = vmor %vm4143, %vm4144
  %v4146 = vsel %vm4145, %v4138, %v4142
  %v4147 = vand.u32 2147483647, %v4122
  %vm4148 = vcmp.eq.f32.partialorder %v4147, 8.507059e+37
  %v4149 = vand.u32 %v4122, 2147483648
  %v4150 = vor.u32 1.1754944e-38, %v4149
  %v4151 = vsel %vm4148, %v4150, %v4146
  %v4152 = vmul.f32 1.0, %v4151
  %v4153 = vrcp.pop %v4123
  %v4154 = vmul.f32 %v4123, %v4153
  %v4155 = vsub.f32 1.0, %v4154
  %v4156 = vmul.f32 %v4153, %v4155
  %v4157 = vadd.f32 %v4153, %v4156
  %vm4158 = vweird.f32 %v4123
  %vm4159 = vweird.f32 %v4153
  %vm4160 = vmor %vm4158, %vm4159
  %v4161 = vsel %vm4160, %v4153, %v4157
  %v4162 = vand.u32 2147483647, %v4123
  %vm4163 = vcmp.eq.f32.partialorder %v4162, 8.507059e+37
  %v4164 = vand.u32 %v4123, 2147483648
  %v4165 = vor.u32 1.1754944e-38, %v4164
  %v4166 = vsel %vm4163, %v4165, %v4161
  %v4167 = vmul.f32 1.0, %v4166
  %v4168 = vrcp.pop %v4124
  %v4169 = vmul.f32 %v4124, %v4168
  %v4170 = vsub.f32 1.0, %v4169
  %v4171 = vmul.f32 %v4168, %v4170
  %v4172 = vadd.f32 %v4168, %v4171
  %vm4173 = vweird.f32 %v4124
  %vm4174 = vweird.f32 %v4168
  %vm4175 = vmor %vm4173, %vm4174
  %v4176 = vsel %vm4175, %v4168, %v4172
  %v4177 = vand.u32 2147483647, %v4124
  %vm4178 = vcmp.eq.f32.partialorder %v4177, 8.507059e+37
  %v4179 = vand.u32 %v4124, 2147483648
  %v4180 = vor.u32 1.1754944e-38, %v4179
  %v4181 = vsel %vm4178, %v4180, %v4176
  %v4182 = vmul.f32 1.0, %v4181
  %v4183 = vrcp.pop %v4125
  %v4184 = vmul.f32 %v4125, %v4183
  %v4185 = vsub.f32 1.0, %v4184
  %v4186 = vmul.f32 %v4183, %v4185
  %v4187 = vadd.f32 %v4183, %v4186
  %vm4188 = vweird.f32 %v4125
  %vm4189 = vweird.f32 %v4183
  %vm4190 = vmor %vm4188, %vm4189
  %v4191 = vsel %vm4190, %v4183, %v4187
  %v4192 = vand.u32 2147483647, %v4125
  %vm4193 = vcmp.eq.f32.partialorder %v4192, 8.507059e+37
  %v4194 = vand.u32 %v4125, 2147483648
  %v4195 = vor.u32 1.1754944e-38, %v4194
  %v4196 = vsel %vm4193, %v4195, %v4191
  %v4197 = vmul.f32 1.0, %v4196
  %v4198 = vrcp.pop %v4126
  %v4199 = vmul.f32 %v4126, %v4198
  %v4200 = vsub.f32 1.0, %v4199
  %v4201 = vmul.f32 %v4198, %v4200
  %v4202 = vadd.f32 %v4198, %v4201
  %vm4203 = vweird.f32 %v4126
  %vm4204 = vweird.f32 %v4198
  %vm4205 = vmor %vm4203, %vm4204
  %v4206 = vsel %vm4205, %v4198, %v4202
  %v4207 = vand.u32 2147483647, %v4126
  %vm4208 = vcmp.eq.f32.partialorder %v4207, 8.507059e+37
  %v4209 = vand.u32 %v4126, 2147483648
  %v4210 = vor.u32 1.1754944e-38, %v4209
  %v4211 = vsel %vm4208, %v4210, %v4206
  %v4212 = vmul.f32 1.0, %v4211
  %v4213 = vrcp.pop %v4127
  %v4214 = vmul.f32 %v4127, %v4213
  %v4215 = vsub.f32 1.0, %v4214
  %v4216 = vmul.f32 %v4213, %v4215
  %v4217 = vadd.f32 %v4213, %v4216
  %vm4218 = vweird.f32 %v4127
  %vm4219 = vweird.f32 %v4213
  %vm4220 = vmor %vm4218, %vm4219
  %v4221 = vsel %vm4220, %v4213, %v4217
  %v4222 = vand.u32 2147483647, %v4127
  %vm4223 = vcmp.eq.f32.partialorder %v4222, 8.507059e+37
  %v4224 = vand.u32 %v4127, 2147483648
  %v4225 = vor.u32 1.1754944e-38, %v4224
  %v4226 = vsel %vm4223, %v4225, %v4221
  %v4227 = vmul.f32 1.0, %v4226
  %v4228 = vrcp.pop %v4128
  %v4229 = vmul.f32 %v4128, %v4228
  %v4230 = vsub.f32 1.0, %v4229
  %v4231 = vmul.f32 %v4228, %v4230
  %v4232 = vadd.f32 %v4228, %v4231
  %vm4233 = vweird.f32 %v4128
  %vm4234 = vweird.f32 %v4228
  %vm4235 = vmor %vm4233, %vm4234
  %v4236 = vsel %vm4235, %v4228, %v4232
  %v4237 = vand.u32 2147483647, %v4128
  %vm4238 = vcmp.eq.f32.partialorder %v4237, 8.507059e+37
  %v4239 = vand.u32 %v4128, 2147483648
  %v4240 = vor.u32 1.1754944e-38, %v4239
  %v4241 = vsel %vm4238, %v4240, %v4236
  %v4242 = vmul.f32 1.0, %v4241
  %v4243 = vrcp.pop %v4129
  %v4244 = vmul.f32 %v4129, %v4243
  %v4245 = vsub.f32 1.0, %v4244
  %v4246 = vmul.f32 %v4243, %v4245
  %v4247 = vadd.f32 %v4243, %v4246
  %vm4248 = vweird.f32 %v4129
  %vm4249 = vweird.f32 %v4243
  %vm4250 = vmor %vm4248, %vm4249
  %v4251 = vsel %vm4250, %v4243, %v4247
  %v4252 = vand.u32 2147483647, %v4129
  %vm4253 = vcmp.eq.f32.partialorder %v4252, 8.507059e+37
  %v4254 = vand.u32 %v4129, 2147483648
  %v4255 = vor.u32 1.1754944e-38, %v4254
  %v4256 = vsel %vm4253, %v4255, %v4251
  %v4257 = vmul.f32 1.0, %v4256
  %v4258 = vrcp.pop %v4130
  %v4259 = vmul.f32 %v4130, %v4258
  %v4260 = vsub.f32 1.0, %v4259
  %v4261 = vmul.f32 %v4258, %v4260
  %v4262 = vadd.f32 %v4258, %v4261
  %vm4263 = vweird.f32 %v4130
  %vm4264 = vweird.f32 %v4258
  %vm4265 = vmor %vm4263, %vm4264
  %v4266 = vsel %vm4265, %v4258, %v4262
  %v4267 = vand.u32 2147483647, %v4130
  %vm4268 = vcmp.eq.f32.partialorder %v4267, 8.507059e+37
  %v4269 = vand.u32 %v4130, 2147483648
  %v4270 = vor.u32 1.1754944e-38, %v4269
  %v4271 = vsel %vm4268, %v4270, %v4266
  %v4272 = vmul.f32 1.0, %v4271
  %v4273 = vrcp.pop %v4131
  %v4274 = vmul.f32 %v4131, %v4273
  %v4275 = vsub.f32 1.0, %v4274
  %v4276 = vmul.f32 %v4273, %v4275
  %v4277 = vadd.f32 %v4273, %v4276
  %vm4278 = vweird.f32 %v4131
  %vm4279 = vweird.f32 %v4273
  %vm4280 = vmor %vm4278, %vm4279
  %v4281 = vsel %vm4280, %v4273, %v4277
  %v4282 = vand.u32 2147483647, %v4131
  %vm4283 = vcmp.eq.f32.partialorder %v4282, 8.507059e+37
  %v4284 = vand.u32 %v4131, 2147483648
  %v4285 = vor.u32 1.1754944e-38, %v4284
  %v4286 = vsel %vm4283, %v4285, %v4281
  %v4287 = vmul.f32 1.0, %v4286
  %v4288 = vrcp.pop %v4132
  %v4289 = vmul.f32 %v4132, %v4288
  %v4290 = vsub.f32 1.0, %v4289
  %v4291 = vmul.f32 %v4288, %v4290
  %v4292 = vadd.f32 %v4288, %v4291
  %vm4293 = vweird.f32 %v4132
  %vm4294 = vweird.f32 %v4288
  %vm4295 = vmor %vm4293, %vm4294
  %v4296 = vsel %vm4295, %v4288, %v4292
  %v4297 = vand.u32 2147483647, %v4132
  %vm4298 = vcmp.eq.f32.partialorder %v4297, 8.507059e+37
  %v4299 = vand.u32 %v4132, 2147483648
  %v4300 = vor.u32 1.1754944e-38, %v4299
  %v4301 = vsel %vm4298, %v4300, %v4296
  %v4302 = vmul.f32 1.0, %v4301
  %v4303 = vrcp.pop %v4133
  %v4304 = vmul.f32 %v4133, %v4303
  %v4305 = vsub.f32 1.0, %v4304
  %v4306 = vmul.f32 %v4303, %v4305
  %v4307 = vadd.f32 %v4303, %v4306
  %vm4308 = vweird.f32 %v4133
  %vm4309 = vweird.f32 %v4303
  %vm4310 = vmor %vm4308, %vm4309
  %v4311 = vsel %vm4310, %v4303, %v4307
  %v4312 = vand.u32 2147483647, %v4133
  %vm4313 = vcmp.eq.f32.partialorder %v4312, 8.507059e+37
  %v4314 = vand.u32 %v4133, 2147483648
  %v4315 = vor.u32 1.1754944e-38, %v4314
  %v4316 = vsel %vm4313, %v4315, %v4311
  %v4317 = vmul.f32 1.0, %v4316
  %v4318 = vrcp.pop %v4134
  %v4319 = vmul.f32 %v4134, %v4318
  %v4320 = vsub.f32 1.0, %v4319
  %v4321 = vmul.f32 %v4318, %v4320
  %v4322 = vadd.f32 %v4318, %v4321
  %vm4323 = vweird.f32 %v4134
  %vm4324 = vweird.f32 %v4318
  %vm4325 = vmor %vm4323, %vm4324
  %v4326 = vsel %vm4325, %v4318, %v4322
  %v4327 = vand.u32 2147483647, %v4134
  %vm4328 = vcmp.eq.f32.partialorder %v4327, 8.507059e+37
  %v4329 = vand.u32 %v4134, 2147483648
  %v4330 = vor.u32 1.1754944e-38, %v4329
  %v4331 = vsel %vm4328, %v4330, %v4326
  %v4332 = vmul.f32 1.0, %v4331
  %v4333 = vrcp.pop %v4135
  %v4334 = vmul.f32 %v4135, %v4333
  %v4335 = vsub.f32 1.0, %v4334
  %v4336 = vmul.f32 %v4333, %v4335
  %v4337 = vadd.f32 %v4333, %v4336
  %vm4338 = vweird.f32 %v4135
  %vm4339 = vweird.f32 %v4333
  %vm4340 = vmor %vm4338, %vm4339
  %v4341 = vsel %vm4340, %v4333, %v4337
  %v4342 = vand.u32 2147483647, %v4135
  %vm4343 = vcmp.eq.f32.partialorder %v4342, 8.507059e+37
  %v4344 = vand.u32 %v4135, 2147483648
  %v4345 = vor.u32 1.1754944e-38, %v4344
  %v4346 = vsel %vm4343, %v4345, %v4341
  %v4347 = vmul.f32 1.0, %v4346
  %v4348 = vrcp.pop %v4136
  %v4349 = vmul.f32 %v4136, %v4348
  %v4350 = vsub.f32 1.0, %v4349
  %v4351 = vmul.f32 %v4348, %v4350
  %v4352 = vadd.f32 %v4348, %v4351
  %vm4353 = vweird.f32 %v4136
  %vm4354 = vweird.f32 %v4348
  %vm4355 = vmor %vm4353, %vm4354
  %v4356 = vsel %vm4355, %v4348, %v4352
  %v4357 = vand.u32 2147483647, %v4136
  %vm4358 = vcmp.eq.f32.partialorder %v4357, 8.507059e+37
  %v4359 = vand.u32 %v4136, 2147483648
  %v4360 = vor.u32 1.1754944e-38, %v4359
  %v4361 = vsel %vm4358, %v4360, %v4356
  %v4362 = vmul.f32 1.0, %v4361
  %v4363 = vrcp.pop %v4137
  %v4364 = vmul.f32 %v4137, %v4363
  %v4365 = vsub.f32 1.0, %v4364
  %v4366 = vmul.f32 %v4363, %v4365
  %v4367 = vadd.f32 %v4363, %v4366
  %vm4368 = vweird.f32 %v4137
  %vm4369 = vweird.f32 %v4363
  %vm4370 = vmor %vm4368, %vm4369
  %v4371 = vsel %vm4370, %v4363, %v4367
  %v4372 = vand.u32 2147483647, %v4137
  %vm4373 = vcmp.eq.f32.partialorder %v4372, 8.507059e+37
  %v4374 = vand.u32 %v4137, 2147483648
  %v4375 = vor.u32 1.1754944e-38, %v4374
  %v4376 = vsel %vm4373, %v4375, %v4371
  %v4377 = vmul.f32 1.0, %v4376
  %v4378 = vmul.f32 %v4152, 1.0614054
  %v4379 = vmul.f32 %v4167, 1.0614054
  %v4380 = vmul.f32 %v4182, 1.0614054
  %v4381 = vmul.f32 %v4197, 1.0614054
  %v4382 = vmul.f32 %v4212, 1.0614054
  %v4383 = vmul.f32 %v4227, 1.0614054
  %v4384 = vmul.f32 %v4242, 1.0614054
  %v4385 = vmul.f32 %v4257, 1.0614054
  %v4386 = vmul.f32 %v4272, 1.0614054
  %v4387 = vmul.f32 %v4287, 1.0614054
  %v4388 = vmul.f32 %v4302, 1.0614054
  %v4389 = vmul.f32 %v4317, 1.0614054
  %v4390 = vmul.f32 %v4332, 1.0614054
  %v4391 = vmul.f32 %v4347, 1.0614054
  %v4392 = vmul.f32 %v4362, 1.0614054
  %v4393 = vmul.f32 %v4377, 1.0614054
  %v4394 = vadd.f32 %v4378, -1.4531521
  %v4395 = vadd.f32 %v4379, -1.4531521
  %v4396 = vadd.f32 %v4380, -1.4531521
  %v4397 = vadd.f32 %v4381, -1.4531521
  %v4398 = vadd.f32 %v4382, -1.4531521
  %v4399 = vadd.f32 %v4383, -1.4531521
  %v4400 = vadd.f32 %v4384, -1.4531521
  %v4401 = vadd.f32 %v4385, -1.4531521
  %v4402 = vadd.f32 %v4386, -1.4531521
  %v4403 = vadd.f32 %v4387, -1.4531521
  %v4404 = vadd.f32 %v4388, -1.4531521
  %v4405 = vadd.f32 %v4389, -1.4531521
  %v4406 = vadd.f32 %v4390, -1.4531521
  %v4407 = vadd.f32 %v4391, -1.4531521
  %v4408 = vadd.f32 %v4392, -1.4531521
  %v4409 = vadd.f32 %v4393, -1.4531521
  %v4410 = vmul.f32 %v4394, %v4152
  %v4411 = vmul.f32 %v4395, %v4167
  %v4412 = vmul.f32 %v4396, %v4182
  %v4413 = vmul.f32 %v4397, %v4197
  %v4414 = vmul.f32 %v4398, %v4212
  %v4415 = vmul.f32 %v4399, %v4227
  %v4416 = vmul.f32 %v4400, %v4242
  %v4417 = vmul.f32 %v4401, %v4257
  %v4418 = vmul.f32 %v4402, %v4272
  %v4419 = vmul.f32 %v4403, %v4287
  %v4420 = vmul.f32 %v4404, %v4302
  %v4421 = vmul.f32 %v4405, %v4317
  %v4422 = vmul.f32 %v4406, %v4332
  %v4423 = vmul.f32 %v4407, %v4347
  %v4424 = vmul.f32 %v4408, %v4362
  %v4425 = vmul.f32 %v4409, %v4377
  %v4426 = vadd.f32 %v4410, 1.4214138
  %v4427 = vadd.f32 %v4411, 1.4214138
  %v4428 = vadd.f32 %v4412, 1.4214138
  %v4429 = vadd.f32 %v4413, 1.4214138
  %v4430 = vadd.f32 %v4414, 1.4214138
  %v4431 = vadd.f32 %v4415, 1.4214138
  %v4432 = vadd.f32 %v4416, 1.4214138
  %v4433 = vadd.f32 %v4417, 1.4214138
  %v4434 = vadd.f32 %v4418, 1.4214138
  %v4435 = vadd.f32 %v4419, 1.4214138
  %v4436 = vadd.f32 %v4420, 1.4214138
  %v4437 = vadd.f32 %v4421, 1.4214138
  %v4438 = vadd.f32 %v4422, 1.4214138
  %v4439 = vadd.f32 %v4423, 1.4214138
  %v4440 = vadd.f32 %v4424, 1.4214138
  %v4441 = vadd.f32 %v4425, 1.4214138
  %v4442 = vmul.f32 %v4426, %v4152
  %v4443 = vmul.f32 %v4427, %v4167
  %v4444 = vmul.f32 %v4428, %v4182
  %v4445 = vmul.f32 %v4429, %v4197
  %v4446 = vmul.f32 %v4430, %v4212
  %v4447 = vmul.f32 %v4431, %v4227
  %v4448 = vmul.f32 %v4432, %v4242
  %v4449 = vmul.f32 %v4433, %v4257
  %v4450 = vmul.f32 %v4434, %v4272
  %v4451 = vmul.f32 %v4435, %v4287
  %v4452 = vmul.f32 %v4436, %v4302
  %v4453 = vmul.f32 %v4437, %v4317
  %v4454 = vmul.f32 %v4438, %v4332
  %v4455 = vmul.f32 %v4439, %v4347
  %v4456 = vmul.f32 %v4440, %v4362
  %v4457 = vmul.f32 %v4441, %v4377
  %v4458 = vadd.f32 %v4442, -0.28449672
  %v4459 = vadd.f32 %v4443, -0.28449672
  %v4460 = vadd.f32 %v4444, -0.28449672
  %v4461 = vadd.f32 %v4445, -0.28449672
  %v4462 = vadd.f32 %v4446, -0.28449672
  %v4463 = vadd.f32 %v4447, -0.28449672
  %v4464 = vadd.f32 %v4448, -0.28449672
  %v4465 = vadd.f32 %v4449, -0.28449672
  %v4466 = vadd.f32 %v4450, -0.28449672
  %v4467 = vadd.f32 %v4451, -0.28449672
  %v4468 = vadd.f32 %v4452, -0.28449672
  %v4469 = vadd.f32 %v4453, -0.28449672
  %v4470 = vadd.f32 %v4454, -0.28449672
  %v4471 = vadd.f32 %v4455, -0.28449672
  %v4472 = vadd.f32 %v4456, -0.28449672
  %v4473 = vadd.f32 %v4457, -0.28449672
  %v4474 = vmul.f32 %v4458, %v4152
  %v4475 = vmul.f32 %v4459, %v4167
  %v4476 = vmul.f32 %v4460, %v4182
  %v4477 = vmul.f32 %v4461, %v4197
  %v4478 = vmul.f32 %v4462, %v4212
  %v4479 = vmul.f32 %v4463, %v4227
  %v4480 = vmul.f32 %v4464, %v4242
  %v4481 = vmul.f32 %v4465, %v4257
  %v4482 = vmul.f32 %v4466, %v4272
  %v4483 = vmul.f32 %v4467, %v4287
  %v4484 = vmul.f32 %v4468, %v4302
  %v4485 = vmul.f32 %v4469, %v4317
  %v4486 = vmul.f32 %v4470, %v4332
  %v4487 = vmul.f32 %v4471, %v4347
  %v4488 = vmul.f32 %v4472, %v4362
  %v4489 = vmul.f32 %v4473, %v4377
  %v4490 = vadd.f32 %v4474, 0.2548296
  %v4491 = vadd.f32 %v4475, 0.2548296
  %v4492 = vadd.f32 %v4476, 0.2548296
  %v4493 = vadd.f32 %v4477, 0.2548296
  %v4494 = vadd.f32 %v4478, 0.2548296
  %v4495 = vadd.f32 %v4479, 0.2548296
  %v4496 = vadd.f32 %v4480, 0.2548296
  %v4497 = vadd.f32 %v4481, 0.2548296
  %v4498 = vadd.f32 %v4482, 0.2548296
  %v4499 = vadd.f32 %v4483, 0.2548296
  %v4500 = vadd.f32 %v4484, 0.2548296
  %v4501 = vadd.f32 %v4485, 0.2548296
  %v4502 = vadd.f32 %v4486, 0.2548296
  %v4503 = vadd.f32 %v4487, 0.2548296
  %v4504 = vadd.f32 %v4488, 0.2548296
  %v4505 = vadd.f32 %v4489, 0.2548296
  %v4506 = vmul.f32 %v4490, %v4152
  %v4507 = vmul.f32 %v4491, %v4167
  %v4508 = vmul.f32 %v4492, %v4182
  %v4509 = vmul.f32 %v4493, %v4197
  %v4510 = vmul.f32 %v4494, %v4212
  %v4511 = vmul.f32 %v4495, %v4227
  %v4512 = vmul.f32 %v4496, %v4242
  %v4513 = vmul.f32 %v4497, %v4257
  %v4514 = vmul.f32 %v4498, %v4272
  %v4515 = vmul.f32 %v4499, %v4287
  %v4516 = vmul.f32 %v4500, %v4302
  %v4517 = vmul.f32 %v4501, %v4317
  %v4518 = vmul.f32 %v4502, %v4332
  %v4519 = vmul.f32 %v4503, %v4347
  %v4520 = vmul.f32 %v4504, %v4362
  %v4521 = vmul.f32 %v4505, %v4377
  %v4522 = vsub.f32 0.0, %v4090
  %v4523 = vsub.f32 0.0, %v4091
  %v4524 = vsub.f32 0.0, %v4092
  %v4525 = vsub.f32 0.0, %v4093
  %v4526 = vsub.f32 0.0, %v4094
  %v4527 = vsub.f32 0.0, %v4095
  %v4528 = vsub.f32 0.0, %v4096
  %v4529 = vsub.f32 0.0, %v4097
  %v4530 = vsub.f32 0.0, %v4098
  %v4531 = vsub.f32 0.0, %v4099
  %v4532 = vsub.f32 0.0, %v4100
  %v4533 = vsub.f32 0.0, %v4101
  %v4534 = vsub.f32 0.0, %v4102
  %v4535 = vsub.f32 0.0, %v4103
  %v4536 = vsub.f32 0.0, %v4104
  %v4537 = vsub.f32 0.0, %v4105
  %v4538 = vmul.f32 %v4522, %v4090
  %v4539 = vmul.f32 %v4523, %v4091
  %v4540 = vmul.f32 %v4524, %v4092
  %v4541 = vmul.f32 %v4525, %v4093
  %v4542 = vmul.f32 %v4526, %v4094
  %v4543 = vmul.f32 %v4527, %v4095
  %v4544 = vmul.f32 %v4528, %v4096
  %v4545 = vmul.f32 %v4529, %v4097
  %v4546 = vmul.f32 %v4530, %v4098
  %v4547 = vmul.f32 %v4531, %v4099
  %v4548 = vmul.f32 %v4532, %v4100
  %v4549 = vmul.f32 %v4533, %v4101
  %v4550 = vmul.f32 %v4534, %v4102
  %v4551 = vmul.f32 %v4535, %v4103
  %v4552 = vmul.f32 %v4536, %v4104
  %v4553 = vmul.f32 %v4537, %v4105
  %v4554 = vmul.f32 %v4538, 1.442695
  %v4555 = vpow.pop %v4554
  %v4556 = vmul.f32 %v4539, 1.442695
  %v4557 = vpow.pop %v4556
  %v4558 = vmul.f32 %v4540, 1.442695
  %v4559 = vpow.pop %v4558
  %v4560 = vmul.f32 %v4541, 1.442695
  %v4561 = vpow.pop %v4560
  %v4562 = vmul.f32 %v4542, 1.442695
  %v4563 = vpow.pop %v4562
  %v4564 = vmul.f32 %v4543, 1.442695
  %v4565 = vpow.pop %v4564
  %v4566 = vmul.f32 %v4544, 1.442695
  %v4567 = vpow.pop %v4566
  %v4568 = vmul.f32 %v4545, 1.442695
  %v4569 = vpow.pop %v4568
  %v4570 = vmul.f32 %v4546, 1.442695
  %v4571 = vpow.pop %v4570
  %v4572 = vmul.f32 %v4547, 1.442695
  %v4573 = vpow.pop %v4572
  %v4574 = vmul.f32 %v4548, 1.442695
  %v4575 = vpow.pop %v4574
  %v4576 = vmul.f32 %v4549, 1.442695
  %v4577 = vpow.pop %v4576
  %v4578 = vmul.f32 %v4550, 1.442695
  %v4579 = vpow.pop %v4578
  %v4580 = vmul.f32 %v4551, 1.442695
  %v4581 = vpow.pop %v4580
  %v4582 = vmul.f32 %v4552, 1.442695
  %v4583 = vpow.pop %v4582
  %v4584 = vmul.f32 %v4553, 1.442695
  %v4585 = vpow.pop %v4584
  %v4586 = vmul.f32 %v4506, %v4555
  %v4587 = vmul.f32 %v4507, %v4557
  %v4588 = vmul.f32 %v4508, %v4559
  %v4589 = vmul.f32 %v4509, %v4561
  %v4590 = vmul.f32 %v4510, %v4563
  %v4591 = vmul.f32 %v4511, %v4565
  %v4592 = vmul.f32 %v4512, %v4567
  %v4593 = vmul.f32 %v4513, %v4569
  %v4594 = vmul.f32 %v4514, %v4571
  %v4595 = vmul.f32 %v4515, %v4573
  %v4596 = vmul.f32 %v4516, %v4575
  %v4597 = vmul.f32 %v4517, %v4577
  %v4598 = vmul.f32 %v4518, %v4579
  %v4599 = vmul.f32 %v4519, %v4581
  %v4600 = vmul.f32 %v4520, %v4583
  %v4601 = vmul.f32 %v4521, %v4585
  %v4602 = vsub.f32 1.0, %v4586
  %v4603 = vsub.f32 1.0, %v4587
  %v4604 = vsub.f32 1.0, %v4588
  %v4605 = vsub.f32 1.0, %v4589
  %v4606 = vsub.f32 1.0, %v4590
  %v4607 = vsub.f32 1.0, %v4591
  %v4608 = vsub.f32 1.0, %v4592
  %v4609 = vsub.f32 1.0, %v4593
  %v4610 = vsub.f32 1.0, %v4594
  %v4611 = vsub.f32 1.0, %v4595
  %v4612 = vsub.f32 1.0, %v4596
  %v4613 = vsub.f32 1.0, %v4597
  %v4614 = vsub.f32 1.0, %v4598
  %v4615 = vsub.f32 1.0, %v4599
  %v4616 = vsub.f32 1.0, %v4600
  %v4617 = vsub.f32 1.0, %v4601
  %v4618 = vmul.f32 %v4074, %v4602
  %v4619 = vmul.f32 %v4075, %v4603
  %v4620 = vmul.f32 %v4076, %v4604
  %v4621 = vmul.f32 %v4077, %v4605
  %v4622 = vmul.f32 %v4078, %v4606
  %v4623 = vmul.f32 %v4079, %v4607
  %v4624 = vmul.f32 %v4080, %v4608
  %v4625 = vmul.f32 %v4081, %v4609
  %v4626 = vmul.f32 %v4082, %v4610
  %v4627 = vmul.f32 %v4083, %v4611
  %v4628 = vmul.f32 %v4084, %v4612
  %v4629 = vmul.f32 %v4085, %v4613
  %v4630 = vmul.f32 %v4086, %v4614
  %v4631 = vmul.f32 %v4087, %v4615
  %v4632 = vmul.f32 %v4088, %v4616
  %v4633 = vmul.f32 %v4089, %v4617
  %v4634 = vadd.f32 %v4618, 1.0
  %v4635 = vadd.f32 %v4619, 1.0
  %v4636 = vadd.f32 %v4620, 1.0
  %v4637 = vadd.f32 %v4621, 1.0
  %v4638 = vadd.f32 %v4622, 1.0
  %v4639 = vadd.f32 %v4623, 1.0
  %v4640 = vadd.f32 %v4624, 1.0
  %v4641 = vadd.f32 %v4625, 1.0
  %v4642 = vadd.f32 %v4626, 1.0
  %v4643 = vadd.f32 %v4627, 1.0
  %v4644 = vadd.f32 %v4628, 1.0
  %v4645 = vadd.f32 %v4629, 1.0
  %v4646 = vadd.f32 %v4630, 1.0
  %v4647 = vadd.f32 %v4631, 1.0
  %v4648 = vadd.f32 %v4632, 1.0
  %v4649 = vadd.f32 %v4633, 1.0
  %v4650 = vmul.f32 %v4026, %v4634
  %v4651 = vmul.f32 %v4027, %v4635
  %v4652 = vmul.f32 %v4028, %v4636
  %v4653 = vmul.f32 %v4029, %v4637
  %v4654 = vmul.f32 %v4030, %v4638
  %v4655 = vmul.f32 %v4031, %v4639
  %v4656 = vmul.f32 %v4032, %v4640
  %v4657 = vmul.f32 %v4033, %v4641
  %v4658 = vmul.f32 %v4034, %v4642
  %v4659 = vmul.f32 %v4035, %v4643
  %v4660 = vmul.f32 %v4036, %v4644
  %v4661 = vmul.f32 %v4037, %v4645
  %v4662 = vmul.f32 %v4038, %v4646
  %v4663 = vmul.f32 %v4039, %v4647
  %v4664 = vmul.f32 %v4040, %v4648
  %v4665 = vmul.f32 %v4041, %v4649
  %4667 = vset.pattern.permute.xlu0 0
  %4668 = vperm.xlu0 %4667, %v4014
  %v4669 = vpop.permute.xlu0 %4668
  %4672 = vset.pattern.permute.xlu0 0
  %4673 = vperm.xlu0 %4672, %v4015
  %v4674 = vpop.permute.xlu0 %4673
  %v4676 = vadd.f32 %v4650, %v4669
  %v4677 = vadd.f32 %v4651, %v4669
  %v4678 = vadd.f32 %v4652, %v4669
  %v4679 = vadd.f32 %v4653, %v4669
  %v4680 = vadd.f32 %v4654, %v4669
  %v4681 = vadd.f32 %v4655, %v4669
  %v4682 = vadd.f32 %v4656, %v4669
  %v4683 = vadd.f32 %v4657, %v4669
  %v4684 = vadd.f32 %v4658, %v4674
  %v4685 = vadd.f32 %v4659, %v4674
  %v4686 = vadd.f32 %v4660, %v4674
  %v4687 = vadd.f32 %v4661, %v4674
  %v4688 = vadd.f32 %v4662, %v4674
  %v4689 = vadd.f32 %v4663, %v4674
  %v4690 = vadd.f32 %v4664, %v4674
  %v4691 = vadd.f32 %v4665, %v4674
  %4692 = vst [vmem:[%s27] sm:$0xff] %v4676
  %4693 = vst [vmem:[%s27 + $0x8] sm:$0xff] %v4677
  %4694 = vst [vmem:[%s27 + $0x10] sm:$0xff] %v4678
  %4695 = vst [vmem:[%s27 + $0x18] sm:$0xff] %v4679
  %4696 = vst [vmem:[%s27 + $0x20] sm:$0xff] %v4680
  %4697 = vst [vmem:[%s27 + $0x28] sm:$0xff] %v4681
  %4698 = vst [vmem:[%s27 + $0x30] sm:$0xff] %v4682
  %4699 = vst [vmem:[%s27 + $0x38] sm:$0xff] %v4683
  %4700 = vst [vmem:[%s27 + $0x40] sm:$0xff] %v4684
  %4701 = vst [vmem:[%s27 + $0x48] sm:$0xff] %v4685
  %4702 = vst [vmem:[%s27 + $0x50] sm:$0xff] %v4686
  %4703 = vst [vmem:[%s27 + $0x58] sm:$0xff] %v4687
  %4704 = vst [vmem:[%s27 + $0x60] sm:$0xff] %v4688
  %4705 = vst [vmem:[%s27 + $0x68] sm:$0xff] %v4689
  %4706 = vst [vmem:[%s27 + $0x70] sm:$0xff] %v4690
  %4707 = vst [vmem:[%s27 + $0x78] sm:$0xff] %v4691
  // Predicated region
  $region110: #{downsample_layers_forward.1} parent=0 // pred_check
    _
  $region111: #{downsample_layers_forward.1} parent=0 // pred_check_branch
    %4709 = sbr.rel (0) target = $region113
  $region112: #{downsample_layers_forward.1} parent=0 // pred_region
    _
  $region113: #{downsample_layers_forward.1} parent=0 // pred_fallthru
    _
  // Predicated region
  $region114: #{downsample_layers_forward.1} parent=0 // pred_check
    _
  $region115: #{downsample_layers_forward.1} parent=0 // pred_check_branch
    %4711 = sbr.rel (0) target = $region117
  $region116: #{downsample_layers_forward.1} parent=0 // pred_region
    _
  $region117: #{downsample_layers_forward.1} parent=0 // pred_fallthru
    _

</llo_original>
